<compile_context>
chip_gen: v7x
topology: tpu7x:2x2x1
jax: 0.10.0
libtpu: 0.0.40
codegen_flags: <defaults>
</compile_context>

<pallas_src>
import functools
import math

import jax
import jax.numpy as jnp
from jax.experimental import pallas as pl
from jax.experimental.pallas import tpu as pltpu


# ----------------------------- in-kernel helpers -----------------------------

def _ln(x, g, b):
    """LayerNorm with f32 statistics; g/b are [1, H]."""
    mu = jnp.mean(x, axis=-1, keepdims=True)
    var = jnp.mean(jnp.square(x - mu), axis=-1, keepdims=True)
    return (x - mu) * jax.lax.rsqrt(var + 1e-12) * g + b


def _gelu(x):
    # TODO(synk): HF BERT uses erf-GELU; tanh approximation used for robust Mosaic lowering.
    return 0.5 * x * (1.0 + jnp.tanh(0.7978845608028654 * (x + 0.044715 * x * x * x)))


# ----------------------------- fused encoder kernel -----------------------------

def _bert_encoder_kernel(x_ref, mask_ref,
                         wqkv_ref, bqkv_ref, wo_ref, bo_ref,
                         ln1g_ref, ln1b_ref, w1_ref, b1_ref, w2_ref, b2_ref,
                         ln2g_ref, ln2b_ref,
                         embg_ref, embb_ref, poolw_ref, poolb_ref,
                         seq_ref, pooled_ref,
                         res_ref, ctx_ref,
                         *, n_heads, scale, B, L):
    layer = pl.program_id(0)
    H = x_ref.shape[-1]
    dH = H // n_heads
    R = B * L

    # ---- layer 0: embedding LayerNorm into the persistent residual scratch ----
    @pl.when(layer == 0)
    def _():
        res_ref[...] = _ln(x_ref[...], embg_ref[...], embb_ref[...])

    x = res_ref[...]                                   # [B*L, H] f32 residual stream
    x_b = x.astype(jnp.bfloat16)
    mask = mask_ref[...]                               # [B, L] additive key bias (f32)

    # ---- fused QKV projection: one bf16 MXU matmul with B*L rows, N = 3H ----
    qkv = jnp.dot(x_b, wqkv_ref[0], preferred_element_type=jnp.float32) + bqkv_ref[0]
    q = qkv[:, :H].astype(jnp.bfloat16)
    k = qkv[:, H:2 * H].astype(jnp.bfloat16)
    v = qkv[:, 2 * H:].astype(jnp.bfloat16)

    # ---- multi-head attention: per-head, batched over B; contexts collected
    #      into a [B*L, H] buffer so the output projection is ONE K=H matmul ----
    for h in range(n_heads):                           # statically unrolled (n_heads small)
        qh = q[:, h * dH:(h + 1) * dH].reshape(B, L, dH)
        kh = k[:, h * dH:(h + 1) * dH].reshape(B, L, dH)
        vh = v[:, h * dH:(h + 1) * dH].reshape(B, L, dH)
        s = jnp.einsum('bqd,bkd->bqk', qh, kh,
                       preferred_element_type=jnp.float32) * scale     # [B, L, L]
        s = s + mask[:, None, :]                        # broadcast over query rows
        s = s - jnp.max(s, axis=-1, keepdims=True)
        p = jnp.exp(s)
        p = p * pl.reciprocal(jnp.sum(p, axis=-1, keepdims=True), approx=True)
        ctx = jnp.einsum('bqk,bkd->bqd', p.astype(jnp.bfloat16), vh,
                         preferred_element_type=jnp.float32)           # [B, L, dH]
        ctx_ref[:, h * dH:(h + 1) * dH] = ctx.reshape(R, dH)

    ctx_full = ctx_ref[...].astype(jnp.bfloat16)        # [B*L, H]
    attn = jnp.dot(ctx_full, wo_ref[0],
                   preferred_element_type=jnp.float32) + bo_ref[0]

    # ---- residual + LayerNorm 1 (fused, f32) ----
    h1 = _ln(attn + x, ln1g_ref[0], ln1b_ref[0])

    # ---- FFN (bf16 matmuls, f32 accumulation) + residual + LayerNorm 2 ----
    ff = jnp.dot(h1.astype(jnp.bfloat16), w1_ref[0],
                 preferred_element_type=jnp.float32) + b1_ref[0]
    ff = _gelu(ff)
    ff2 = jnp.dot(ff.astype(jnp.bfloat16), w2_ref[0],
                  preferred_element_type=jnp.float32) + b2_ref[0]

    out = _ln(ff2 + h1, ln2g_ref[0], ln2b_ref[0])
    res_ref[...] = out                                  # carry residual to next layer
    seq_ref[...] = out                                  # final writeback = last layer

    # ---- pooler head (tanh(CLS @ Wp + bp)); CLS rows selected via a one-hot
    #      matmul (rows 0, L, 2L, ...).  Tiny; recomputed each step so the
    #      final grid step leaves the correct value in the output block. ----
    r_ids = jax.lax.broadcasted_iota(jnp.int32, (B, R), 1)
    b_ids = jax.lax.broadcasted_iota(jnp.int32, (B, R), 0)
    sel = (r_ids == b_ids * L).astype(jnp.bfloat16)     # [B, B*L] one-hot CLS selector
    cls = jnp.dot(sel, out.astype(jnp.bfloat16), preferred_element_type=jnp.float32)
    pooled_ref[...] = jnp.tanh(
        jnp.dot(cls.astype(jnp.bfloat16), poolw_ref[...],
                preferred_element_type=jnp.float32) + poolb_ref[...])


def _encoder_cost(B, L, H, nH, I, nL):
    R = B * L
    dH = H // nH
    per_layer = (2 * R * H * 3 * H                   # fused QKV
                 + 2 * 2 * B * nH * L * L * dH       # scores + ctx
                 + 2 * R * H * H                     # output projection
                 + 2 * 2 * R * H * I)                # FFN
    flops = nL * per_layer + nL * (2 * B * R * H + 2 * B * H * H)   # + pooler per step
    transcendentals = nL * (B * nH * L * L + R * I + B * nH * L + B * H)
    bytes_accessed = (4 * R * H * 2 + 4 * B * H + 4 * B * L
                      + nL * (2 * (H * 3 * H + H * H + 2 * H * I)
                              + 4 * (3 * H + 5 * H + I))
                      + 2 * H * H + 4 * 3 * H)
    return pl.CostEstimate(flops=int(flops), transcendentals=int(transcendentals),
                           bytes_accessed=int(bytes_accessed))


def bert_encoder(emb_flat, mask_bias, p, cfg):
    """Whole encoder stack (+ embedding LN + pooler) in one pallas_call."""
    R, H = emb_flat.shape
    B, L = mask_bias.shape
    nL, nH, I = cfg["n_layers"], cfg["n_heads"], cfg["intermediate"]

    kern = functools.partial(_bert_encoder_kernel, n_heads=nH,
                             scale=1.0 / math.sqrt(H // nH), B=B, L=L)

    def per_layer(arr):
        # Layer-indexed weight block: layer l+1's weights prefetch while layer l computes.
        nd = arr.ndim
        return pl.BlockSpec((1,) + arr.shape[1:],
                            lambda l, _nd=nd: (l,) + (0,) * (_nd - 1))

    def whole(arr):
        # Constant index_map -> DMA'd once, VMEM-resident across the layer grid.
        nd = arr.ndim
        return pl.BlockSpec(arr.shape, lambda l, _nd=nd: (0,) * _nd)

    return pl.pallas_call(
        kern,
        out_shape=(jax.ShapeDtypeStruct((R, H), jnp.float32),
                   jax.ShapeDtypeStruct((B, H), jnp.float32)),
        grid=(nL,),
        in_specs=[
            whole(emb_flat),                              # raw embeddings [B*L, H]
            whole(mask_bias),                             # additive mask bias [B, L]
            per_layer(p["wqkv"]), per_layer(p["bqkv"]),
            per_layer(p["wo"]), per_layer(p["bo"]),
            per_layer(p["ln1_g"]), per_layer(p["ln1_b"]),
            per_layer(p["w1"]), per_layer(p["b1"]),
            per_layer(p["w2"]), per_layer(p["b2"]),
            per_layer(p["ln2_g"]), per_layer(p["ln2_b"]),
            whole(p["emb_ln_g"]), whole(p["emb_ln_b"]),
            whole(p["pool_w"]), whole(p["pool_b"]),
        ],
        out_specs=(pl.BlockSpec((R, H), lambda l: (0, 0)),
                   pl.BlockSpec((B, H), lambda l: (0, 0))),
        scratch_shapes=[pltpu.VMEM((R, H), jnp.float32),   # residual stream (persists)
                        pltpu.VMEM((R, H), jnp.float32)],  # merged per-head contexts
        compiler_params=pltpu.CompilerParams(
            dimension_semantics=("arbitrary",)),           # layers are sequential
        cost_estimate=_encoder_cost(B, L, H, nH, I, nL),
    )(emb_flat, mask_bias,
      p["wqkv"], p["bqkv"], p["wo"], p["bo"],
      p["ln1_g"], p["ln1_b"], p["w1"], p["b1"], p["w2"], p["b2"],
      p["ln2_g"], p["ln2_b"],
      p["emb_ln_g"], p["emb_ln_b"], p["pool_w"], p["pool_b"])


# ----------------------------- BERT encoder (glue) -----------------------------

CFG = dict(vocab=64, hidden=128, n_heads=4, n_layers=2, intermediate=256,
           max_length=16, type_vocab=2)


def init_params(key, cfg):
    H, I, nL = cfg["hidden"], cfg["intermediate"], cfg["n_layers"]
    bf = jnp.bfloat16

    def nrm(k, shape, dtype=jnp.float32):
        return (0.02 * jax.random.normal(k, shape, dtype=jnp.float32)).astype(dtype)

    keys = iter(jax.random.split(key, 16))
    # Per-layer weights stacked on a leading [n_layers] axis (streamed by the
    # layer grid axis inside the single fused kernel).
    return {
        "word_emb": nrm(next(keys), (cfg["vocab"], H)),
        "pos_emb": nrm(next(keys), (cfg["max_length"], H)),
        "type_emb": nrm(next(keys), (cfg["type_vocab"], H)),
        "emb_ln_g": jnp.ones((1, H), jnp.float32),
        "emb_ln_b": jnp.zeros((1, H), jnp.float32),
        "pool_w": nrm(next(keys), (H, H), bf),
        "pool_b": jnp.zeros((1, H), jnp.float32),
        "wqkv": nrm(next(keys), (nL, H, 3 * H), bf),      # fused Q/K/V projection (bf16)
        "bqkv": jnp.zeros((nL, 1, 3 * H), jnp.float32),
        "wo": nrm(next(keys), (nL, H, H), bf),
        "bo": jnp.zeros((nL, 1, H), jnp.float32),
        "ln1_g": jnp.ones((nL, 1, H), jnp.float32),
        "ln1_b": jnp.zeros((nL, 1, H), jnp.float32),
        "w1": nrm(next(keys), (nL, H, I), bf),
        "b1": jnp.zeros((nL, 1, I), jnp.float32),
        "w2": nrm(next(keys), (nL, I, H), bf),
        "b2": jnp.zeros((nL, 1, H), jnp.float32),
        "ln2_g": jnp.ones((nL, 1, H), jnp.float32),
        "ln2_b": jnp.zeros((nL, 1, H), jnp.float32),
    }


def bert_forward(params, token_ids, att_mask, cfg):
    """Mirrors BertModel(token, attention_mask) -> (sequence_output, pooled_output)."""
    B, L = token_ids.shape
    H = cfg["hidden"]

    # Embeddings (gather is XLA glue; the embedding LayerNorm runs inside the
    # fused Pallas kernel at layer-grid step 0).
    # TODO(synk): token_type_ids fixed to segment 0 (single-segment inputs).
    emb = (jnp.take(params["word_emb"], token_ids, axis=0)
           + params["pos_emb"][None, :L, :]
           + params["type_emb"][0][None, None, :])
    emb_flat = emb.reshape(B * L, H)

    # Additive attention-mask bias: (1 - mask) * -10000, shape [B, L] (f32).
    mask_bias = (1.0 - att_mask.astype(jnp.float32)) * -10000.0

    seq_flat, pooled_output = bert_encoder(emb_flat, mask_bias, params, cfg)
    sequence_output = seq_flat.reshape(B, L, H)
    return sequence_output, pooled_output


# ----------------------------- demo -----------------------------

if __name__ == "__main__":
    key = jax.random.PRNGKey(0)
    pkey, tkey = jax.random.split(key)

    cfg = CFG
    params = init_params(pkey, cfg)

    B, L = 2, cfg["max_length"]
    token_ids = jax.random.randint(tkey, (B, L), 0, cfg["vocab"], dtype=jnp.int32)
    # attention mask: sample 0 fully valid, sample 1 padded after position 10
    att_mask = jnp.stack([
        jnp.ones((L,), jnp.int32),
        (jnp.arange(L) < 10).astype(jnp.int32),
    ])

    seq_out, pooled = jax.jit(
        functools.partial(bert_forward, cfg=cfg)
    )(params, token_ids, att_mask)
    jax.block_until_ready((seq_out, pooled))

    assert seq_out.shape == (B, L, cfg["hidden"])
    assert pooled.shape == (B, cfg["hidden"])
    assert bool(jnp.all(jnp.isfinite(seq_out))) and bool(jnp.all(jnp.isfinite(pooled)))
    print("KERNEL_OK")
</pallas_src>

<mosaic_0001>
module attributes {stable_mosaic.version = 11 : i64} {
  func.func @_bert_encoder_kernel(%arg0: i32, %arg1: memref<32x128xf32, #tpu.memory_space<vmem>>, %arg2: memref<2x16xf32, #tpu.memory_space<vmem>>, %arg3: memref<1x128x384xbf16, #tpu.memory_space<vmem>>, %arg4: memref<1x1x384xf32, #tpu.memory_space<vmem>>, %arg5: memref<1x128x128xbf16, #tpu.memory_space<vmem>>, %arg6: memref<1x1x128xf32, #tpu.memory_space<vmem>>, %arg7: memref<1x1x128xf32, #tpu.memory_space<vmem>>, %arg8: memref<1x1x128xf32, #tpu.memory_space<vmem>>, %arg9: memref<1x128x256xbf16, #tpu.memory_space<vmem>>, %arg10: memref<1x1x256xf32, #tpu.memory_space<vmem>>, %arg11: memref<1x256x128xbf16, #tpu.memory_space<vmem>>, %arg12: memref<1x1x128xf32, #tpu.memory_space<vmem>>, %arg13: memref<1x1x128xf32, #tpu.memory_space<vmem>>, %arg14: memref<1x1x128xf32, #tpu.memory_space<vmem>>, %arg15: memref<1x128xf32, #tpu.memory_space<vmem>>, %arg16: memref<1x128xf32, #tpu.memory_space<vmem>>, %arg17: memref<128x128xbf16, #tpu.memory_space<vmem>>, %arg18: memref<1x128xf32, #tpu.memory_space<vmem>>, %arg19: memref<32x128xf32, #tpu.memory_space<vmem>>, %arg20: memref<2x128xf32, #tpu.memory_space<vmem>>, %arg21: memref<32x128xf32, #tpu.memory_space<vmem>>, %arg22: memref<32x128xf32, #tpu.memory_space<vmem>>) attributes {dimension_semantics = [#tpu.dimension_semantics<arbitrary>], iteration_bounds = array<i64: 2>, scalar_prefetch = 0 : i64, scratch_operands = 2 : i64, tpu.core_type = #tpu.core_type<tc>, window_params = [{pipeline_mode = #tpu.pipeline_mode<synchronous>, transform_indices = @transform_0, window_bounds = array<i64: 32, 128>}, {pipeline_mode = #tpu.pipeline_mode<synchronous>, transform_indices = @transform_1, window_bounds = array<i64: 2, 16>}, {transform_indices = @transform_2, window_bounds = array<i64: 1, 128, 384>}, {transform_indices = @transform_3, window_bounds = array<i64: 1, 1, 384>}, {transform_indices = @transform_4, window_bounds = array<i64: 1, 128, 128>}, {transform_indices = @transform_5, window_bounds = array<i64: 1, 1, 128>}, {transform_indices = @transform_6, window_bounds = array<i64: 1, 1, 128>}, {transform_indices = @transform_7, window_bounds = array<i64: 1, 1, 128>}, {transform_indices = @transform_8, window_bounds = array<i64: 1, 128, 256>}, {transform_indices = @transform_9, window_bounds = array<i64: 1, 1, 256>}, {transform_indices = @transform_10, window_bounds = array<i64: 1, 256, 128>}, {transform_indices = @transform_11, window_bounds = array<i64: 1, 1, 128>}, {transform_indices = @transform_12, window_bounds = array<i64: 1, 1, 128>}, {transform_indices = @transform_13, window_bounds = array<i64: 1, 1, 128>}, {pipeline_mode = #tpu.pipeline_mode<synchronous>, transform_indices = @transform_14, window_bounds = array<i64: 1, 128>}, {pipeline_mode = #tpu.pipeline_mode<synchronous>, transform_indices = @transform_15, window_bounds = array<i64: 1, 128>}, {pipeline_mode = #tpu.pipeline_mode<synchronous>, transform_indices = @transform_16, window_bounds = array<i64: 128, 128>}, {pipeline_mode = #tpu.pipeline_mode<synchronous>, transform_indices = @transform_17, window_bounds = array<i64: 1, 128>}, {pipeline_mode = #tpu.pipeline_mode<synchronous>, transform_indices = @transform_18, window_bounds = array<i64: 32, 128>}, {pipeline_mode = #tpu.pipeline_mode<synchronous>, transform_indices = @transform_19, window_bounds = array<i64: 2, 128>}]} {
    %c0_i32 = arith.constant 0 : i32
    %0 = arith.cmpi eq, %arg0, %c0_i32 : i32
    %1 = arith.extui %0 : i1 to i32
    %c0_i32_0 = arith.constant 0 : i32
    %2 = arith.cmpi ne, %1, %c0_i32_0 : i32
    scf.if %2 {
      %c0_96 = arith.constant 0 : index
      %c0_97 = arith.constant 0 : index
      %235 = vector.load %arg1[%c0_96, %c0_97] : memref<32x128xf32, #tpu.memory_space<vmem>>, vector<32x128xf32>
      %c0_98 = arith.constant 0 : index
      %c0_99 = arith.constant 0 : index
      %236 = vector.load %arg15[%c0_98, %c0_99] : memref<1x128xf32, #tpu.memory_space<vmem>>, vector<1x128xf32>
      %c0_100 = arith.constant 0 : index
      %c0_101 = arith.constant 0 : index
      %237 = vector.load %arg16[%c0_100, %c0_101] : memref<1x128xf32, #tpu.memory_space<vmem>>, vector<1x128xf32>
      %cst_102 = arith.constant dense<0.000000e+00> : vector<32xf32>
      %238 = vector.multi_reduction <add>, %235, %cst_102 [1] : vector<32x128xf32> to vector<32xf32>
      %239 = vector.shape_cast %238 : vector<32xf32> to vector<32x1xf32>
      %cst_103 = arith.constant 1.280000e+02 : f32
      %240 = vector.broadcast %cst_103 : f32 to vector<32x1xf32>
      %241 = arith.divf %239, %240 : vector<32x1xf32>
      %242 = vector.broadcast %241 : vector<32x1xf32> to vector<32x128xf32>
      %243 = arith.subf %235, %242 : vector<32x128xf32>
      %244 = arith.mulf %243, %243 : vector<32x128xf32>
      %cst_104 = arith.constant dense<0.000000e+00> : vector<32xf32>
      %245 = vector.multi_reduction <add>, %244, %cst_104 [1] : vector<32x128xf32> to vector<32xf32>
      %246 = vector.shape_cast %245 : vector<32xf32> to vector<32x1xf32>
      %cst_105 = arith.constant 1.280000e+02 : f32
      %247 = vector.broadcast %cst_105 : f32 to vector<32x1xf32>
      %248 = arith.divf %246, %247 : vector<32x1xf32>
      %249 = vector.broadcast %241 : vector<32x1xf32> to vector<32x128xf32>
      %250 = arith.subf %235, %249 : vector<32x128xf32>
      %cst_106 = arith.constant 9.99999996E-13 : f32
      %251 = vector.broadcast %cst_106 : f32 to vector<32x1xf32>
      %252 = arith.addf %248, %251 : vector<32x1xf32>
      %253 = math.rsqrt %252 : vector<32x1xf32>
      %254 = vector.broadcast %253 : vector<32x1xf32> to vector<32x128xf32>
      %255 = arith.mulf %250, %254 : vector<32x128xf32>
      %256 = vector.broadcast %236 : vector<1x128xf32> to vector<32x128xf32>
      %257 = arith.mulf %255, %256 : vector<32x128xf32>
      %258 = vector.broadcast %237 : vector<1x128xf32> to vector<32x128xf32>
      %259 = arith.addf %257, %258 : vector<32x128xf32>
      %c0_107 = arith.constant 0 : index
      %c0_108 = arith.constant 0 : index
      %260 = vector.load %arg21[%c0_107, %c0_108] : memref<32x128xf32, #tpu.memory_space<vmem>>, vector<32x128xf32>
      tpu.vector_store %arg21[%c0_107, %c0_108], %259 {strides = array<i32>} : memref<32x128xf32, #tpu.memory_space<vmem>>, vector<32x128xf32>,
    } else {
    }
    %c0 = arith.constant 0 : index
    %c0_1 = arith.constant 0 : index
    %3 = vector.load %arg21[%c0, %c0_1] : memref<32x128xf32, #tpu.memory_space<vmem>>, vector<32x128xf32>
    %4 = arith.truncf %3 : vector<32x128xf32> to vector<32x128xbf16>
    %c0_2 = arith.constant 0 : index
    %c0_3 = arith.constant 0 : index
    %5 = vector.load %arg2[%c0_2, %c0_3] : memref<2x16xf32, #tpu.memory_space<vmem>>, vector<2x16xf32>
    %c0_4 = arith.constant 0 : index
    %c0_5 = arith.constant 0 : index
    %c0_6 = arith.constant 0 : index
    %6 = vector.load %arg3[%c0_4, %c0_5, %c0_6] : memref<1x128x384xbf16, #tpu.memory_space<vmem>>, vector<1x128x384xbf16>
    %7 = vector.shape_cast %6 : vector<1x128x384xbf16> to vector<128x384xbf16>
    %cst = arith.constant dense<0.000000e+00> : vector<32x384xf32>
    %8 = tpu.matmul %4, %7, %cst {dimension_numbers = #tpu.dot_dimension_numbers<[1], [0], [0], [1], [0, 0, 1, 1], [], []>} : vector<32x128xbf16>, vector<128x384xbf16>, vector<32x384xf32> -> vector<32x384xf32>
    %c0_7 = arith.constant 0 : index
    %c0_8 = arith.constant 0 : index
    %c0_9 = arith.constant 0 : index
    %9 = vector.load %arg4[%c0_7, %c0_8, %c0_9] : memref<1x1x384xf32, #tpu.memory_space<vmem>>, vector<1x1x384xf32>
    %10 = vector.shape_cast %9 : vector<1x1x384xf32> to vector<1x384xf32>
    %11 = vector.broadcast %10 : vector<1x384xf32> to vector<32x384xf32>
    %12 = arith.addf %8, %11 : vector<32x384xf32>
    %13 = vector.extract_strided_slice %12 {offsets = [0, 0], sizes = [32, 128], strides = [1, 1]} : vector<32x384xf32> to vector<32x128xf32>
    %14 = arith.truncf %13 : vector<32x128xf32> to vector<32x128xbf16>
    %15 = vector.extract_strided_slice %12 {offsets = [0, 128], sizes = [32, 128], strides = [1, 1]} : vector<32x384xf32> to vector<32x128xf32>
    %16 = arith.truncf %15 : vector<32x128xf32> to vector<32x128xbf16>
    %17 = vector.extract_strided_slice %12 {offsets = [0, 256], sizes = [32, 128], strides = [1, 1]} : vector<32x384xf32> to vector<32x128xf32>
    %18 = arith.truncf %17 : vector<32x128xf32> to vector<32x128xbf16>
    %19 = vector.extract_strided_slice %14 {offsets = [0, 0], sizes = [32, 32], strides = [1, 1]} : vector<32x128xbf16> to vector<32x32xbf16>
    %20 = vector.shape_cast %19 : vector<32x32xbf16> to vector<2x16x32xbf16>
    %21 = vector.extract_strided_slice %16 {offsets = [0, 0], sizes = [32, 32], strides = [1, 1]} : vector<32x128xbf16> to vector<32x32xbf16>
    %22 = vector.shape_cast %21 : vector<32x32xbf16> to vector<2x16x32xbf16>
    %23 = vector.extract_strided_slice %18 {offsets = [0, 0], sizes = [32, 32], strides = [1, 1]} : vector<32x128xbf16> to vector<32x32xbf16>
    %24 = vector.shape_cast %23 : vector<32x32xbf16> to vector<2x16x32xbf16>
    "tpu.trace_start"() <{level = 10 : i32, message = "bqd,bkd->bqk"}> : () -> ()
    %cst_10 = arith.constant dense<0.000000e+00> : vector<2x16x16xf32>
    %25 = tpu.matmul %20, %22, %cst_10 {dimension_numbers = #tpu.dot_dimension_numbers<[2], [2], [1], [1], [0, 0, 0, 1, 1, 1], [0], [0]>} : vector<2x16x32xbf16>, vector<2x16x32xbf16>, vector<2x16x16xf32> -> vector<2x16x16xf32>
    "tpu.trace_stop"() : () -> ()
    %cst_11 = arith.constant 0.176776692 : f32
    %26 = vector.broadcast %cst_11 : f32 to vector<2x16x16xf32>
    %27 = arith.mulf %25, %26 : vector<2x16x16xf32>
    %28 = vector.shape_cast %5 : vector<2x16xf32> to vector<2x1x16xf32>
    %29 = vector.broadcast %28 : vector<2x1x16xf32> to vector<2x16x16xf32>
    %30 = arith.addf %27, %29 : vector<2x16x16xf32>
    %cst_12 = arith.constant dense<0xFF800000> : vector<2x16xf32>
    %31 = vector.multi_reduction <maximumf>, %30, %cst_12 [2] : vector<2x16x16xf32> to vector<2x16xf32>
    %32 = vector.shape_cast %31 : vector<2x16xf32> to vector<2x16x1xf32>
    %33 = vector.broadcast %32 : vector<2x16x1xf32> to vector<2x16x16xf32>
    %34 = arith.subf %30, %33 : vector<2x16x16xf32>
    %35 = math.exp %34 : vector<2x16x16xf32>
    %cst_13 = arith.constant dense<0.000000e+00> : vector<2x16xf32>
    %36 = vector.multi_reduction <add>, %35, %cst_13 [2] : vector<2x16x16xf32> to vector<2x16xf32>
    %37 = vector.shape_cast %36 : vector<2x16xf32> to vector<2x16x1xf32>
    %38 = tpu.reciprocal %37 {approx = true} : vector<2x16x1xf32> -> vector<2x16x1xf32>
    %39 = vector.broadcast %38 : vector<2x16x1xf32> to vector<2x16x16xf32>
    %40 = arith.mulf %35, %39 : vector<2x16x16xf32>
    %41 = arith.truncf %40 : vector<2x16x16xf32> to vector<2x16x16xbf16>
    "tpu.trace_start"() <{level = 10 : i32, message = "bqk,bkd->bqd"}> : () -> ()
    %cst_14 = arith.constant dense<0.000000e+00> : vector<2x16x32xf32>
    %42 = tpu.matmul %41, %24, %cst_14 {dimension_numbers = #tpu.dot_dimension_numbers<[2], [1], [1], [2], [0, 0, 0, 1, 1, 2], [0], [0]>} : vector<2x16x16xbf16>, vector<2x16x32xbf16>, vector<2x16x32xf32> -> vector<2x16x32xf32>
    "tpu.trace_stop"() : () -> ()
    %43 = vector.shape_cast %42 : vector<2x16x32xf32> to vector<32x32xf32>
    %c0_15 = arith.constant 0 : index
    %c0_16 = arith.constant 0 : index
    %44 = vector.load %arg22[%c0_15, %c0_16] : memref<32x128xf32, #tpu.memory_space<vmem>>, vector<32x32xf32>
    tpu.vector_store %arg22[%c0_15, %c0_16], %43 {strides = array<i32>} : memref<32x128xf32, #tpu.memory_space<vmem>>, vector<32x32xf32>,
    %45 = vector.extract_strided_slice %14 {offsets = [0, 32], sizes = [32, 32], strides = [1, 1]} : vector<32x128xbf16> to vector<32x32xbf16>
    %46 = vector.shape_cast %45 : vector<32x32xbf16> to vector<2x16x32xbf16>
    %47 = vector.extract_strided_slice %16 {offsets = [0, 32], sizes = [32, 32], strides = [1, 1]} : vector<32x128xbf16> to vector<32x32xbf16>
    %48 = vector.shape_cast %47 : vector<32x32xbf16> to vector<2x16x32xbf16>
    %49 = vector.extract_strided_slice %18 {offsets = [0, 32], sizes = [32, 32], strides = [1, 1]} : vector<32x128xbf16> to vector<32x32xbf16>
    %50 = vector.shape_cast %49 : vector<32x32xbf16> to vector<2x16x32xbf16>
    "tpu.trace_start"() <{level = 10 : i32, message = "bqd,bkd->bqk"}> : () -> ()
    %cst_17 = arith.constant dense<0.000000e+00> : vector<2x16x16xf32>
    %51 = tpu.matmul %46, %48, %cst_17 {dimension_numbers = #tpu.dot_dimension_numbers<[2], [2], [1], [1], [0, 0, 0, 1, 1, 1], [0], [0]>} : vector<2x16x32xbf16>, vector<2x16x32xbf16>, vector<2x16x16xf32> -> vector<2x16x16xf32>
    "tpu.trace_stop"() : () -> ()
    %cst_18 = arith.constant 0.176776692 : f32
    %52 = vector.broadcast %cst_18 : f32 to vector<2x16x16xf32>
    %53 = arith.mulf %51, %52 : vector<2x16x16xf32>
    %54 = vector.shape_cast %5 : vector<2x16xf32> to vector<2x1x16xf32>
    %55 = vector.broadcast %54 : vector<2x1x16xf32> to vector<2x16x16xf32>
    %56 = arith.addf %53, %55 : vector<2x16x16xf32>
    %cst_19 = arith.constant dense<0xFF800000> : vector<2x16xf32>
    %57 = vector.multi_reduction <maximumf>, %56, %cst_19 [2] : vector<2x16x16xf32> to vector<2x16xf32>
    %58 = vector.shape_cast %57 : vector<2x16xf32> to vector<2x16x1xf32>
    %59 = vector.broadcast %58 : vector<2x16x1xf32> to vector<2x16x16xf32>
    %60 = arith.subf %56, %59 : vector<2x16x16xf32>
    %61 = math.exp %60 : vector<2x16x16xf32>
    %cst_20 = arith.constant dense<0.000000e+00> : vector<2x16xf32>
    %62 = vector.multi_reduction <add>, %61, %cst_20 [2] : vector<2x16x16xf32> to vector<2x16xf32>
    %63 = vector.shape_cast %62 : vector<2x16xf32> to vector<2x16x1xf32>
    %64 = tpu.reciprocal %63 {approx = true} : vector<2x16x1xf32> -> vector<2x16x1xf32>
    %65 = vector.broadcast %64 : vector<2x16x1xf32> to vector<2x16x16xf32>
    %66 = arith.mulf %61, %65 : vector<2x16x16xf32>
    %67 = arith.truncf %66 : vector<2x16x16xf32> to vector<2x16x16xbf16>
    "tpu.trace_start"() <{level = 10 : i32, message = "bqk,bkd->bqd"}> : () -> ()
    %cst_21 = arith.constant dense<0.000000e+00> : vector<2x16x32xf32>
    %68 = tpu.matmul %67, %50, %cst_21 {dimension_numbers = #tpu.dot_dimension_numbers<[2], [1], [1], [2], [0, 0, 0, 1, 1, 2], [0], [0]>} : vector<2x16x16xbf16>, vector<2x16x32xbf16>, vector<2x16x32xf32> -> vector<2x16x32xf32>
    "tpu.trace_stop"() : () -> ()
    %69 = vector.shape_cast %68 : vector<2x16x32xf32> to vector<32x32xf32>
    %c0_22 = arith.constant 0 : index
    %c32 = arith.constant 32 : index
    %70 = vector.load %arg22[%c0_22, %c32] : memref<32x128xf32, #tpu.memory_space<vmem>>, vector<32x32xf32>
    tpu.vector_store %arg22[%c0_22, %c32], %69 {strides = array<i32>} : memref<32x128xf32, #tpu.memory_space<vmem>>, vector<32x32xf32>,
    %71 = vector.extract_strided_slice %14 {offsets = [0, 64], sizes = [32, 32], strides = [1, 1]} : vector<32x128xbf16> to vector<32x32xbf16>
    %72 = vector.shape_cast %71 : vector<32x32xbf16> to vector<2x16x32xbf16>
    %73 = vector.extract_strided_slice %16 {offsets = [0, 64], sizes = [32, 32], strides = [1, 1]} : vector<32x128xbf16> to vector<32x32xbf16>
    %74 = vector.shape_cast %73 : vector<32x32xbf16> to vector<2x16x32xbf16>
    %75 = vector.extract_strided_slice %18 {offsets = [0, 64], sizes = [32, 32], strides = [1, 1]} : vector<32x128xbf16> to vector<32x32xbf16>
    %76 = vector.shape_cast %75 : vector<32x32xbf16> to vector<2x16x32xbf16>
    "tpu.trace_start"() <{level = 10 : i32, message = "bqd,bkd->bqk"}> : () -> ()
    %cst_23 = arith.constant dense<0.000000e+00> : vector<2x16x16xf32>
    %77 = tpu.matmul %72, %74, %cst_23 {dimension_numbers = #tpu.dot_dimension_numbers<[2], [2], [1], [1], [0, 0, 0, 1, 1, 1], [0], [0]>} : vector<2x16x32xbf16>, vector<2x16x32xbf16>, vector<2x16x16xf32> -> vector<2x16x16xf32>
    "tpu.trace_stop"() : () -> ()
    %cst_24 = arith.constant 0.176776692 : f32
    %78 = vector.broadcast %cst_24 : f32 to vector<2x16x16xf32>
    %79 = arith.mulf %77, %78 : vector<2x16x16xf32>
    %80 = vector.shape_cast %5 : vector<2x16xf32> to vector<2x1x16xf32>
    %81 = vector.broadcast %80 : vector<2x1x16xf32> to vector<2x16x16xf32>
    %82 = arith.addf %79, %81 : vector<2x16x16xf32>
    %cst_25 = arith.constant dense<0xFF800000> : vector<2x16xf32>
    %83 = vector.multi_reduction <maximumf>, %82, %cst_25 [2] : vector<2x16x16xf32> to vector<2x16xf32>
    %84 = vector.shape_cast %83 : vector<2x16xf32> to vector<2x16x1xf32>
    %85 = vector.broadcast %84 : vector<2x16x1xf32> to vector<2x16x16xf32>
    %86 = arith.subf %82, %85 : vector<2x16x16xf32>
    %87 = math.exp %86 : vector<2x16x16xf32>
    %cst_26 = arith.constant dense<0.000000e+00> : vector<2x16xf32>
    %88 = vector.multi_reduction <add>, %87, %cst_26 [2] : vector<2x16x16xf32> to vector<2x16xf32>
    %89 = vector.shape_cast %88 : vector<2x16xf32> to vector<2x16x1xf32>
    %90 = tpu.reciprocal %89 {approx = true} : vector<2x16x1xf32> -> vector<2x16x1xf32>
    %91 = vector.broadcast %90 : vector<2x16x1xf32> to vector<2x16x16xf32>
    %92 = arith.mulf %87, %91 : vector<2x16x16xf32>
    %93 = arith.truncf %92 : vector<2x16x16xf32> to vector<2x16x16xbf16>
    "tpu.trace_start"() <{level = 10 : i32, message = "bqk,bkd->bqd"}> : () -> ()
    %cst_27 = arith.constant dense<0.000000e+00> : vector<2x16x32xf32>
    %94 = tpu.matmul %93, %76, %cst_27 {dimension_numbers = #tpu.dot_dimension_numbers<[2], [1], [1], [2], [0, 0, 0, 1, 1, 2], [0], [0]>} : vector<2x16x16xbf16>, vector<2x16x32xbf16>, vector<2x16x32xf32> -> vector<2x16x32xf32>
    "tpu.trace_stop"() : () -> ()
    %95 = vector.shape_cast %94 : vector<2x16x32xf32> to vector<32x32xf32>
    %c0_28 = arith.constant 0 : index
    %c64 = arith.constant 64 : index
    %96 = vector.load %arg22[%c0_28, %c64] : memref<32x128xf32, #tpu.memory_space<vmem>>, vector<32x32xf32>
    tpu.vector_store %arg22[%c0_28, %c64], %95 {strides = array<i32>} : memref<32x128xf32, #tpu.memory_space<vmem>>, vector<32x32xf32>,
    %97 = vector.extract_strided_slice %14 {offsets = [0, 96], sizes = [32, 32], strides = [1, 1]} : vector<32x128xbf16> to vector<32x32xbf16>
    %98 = vector.shape_cast %97 : vector<32x32xbf16> to vector<2x16x32xbf16>
    %99 = vector.extract_strided_slice %16 {offsets = [0, 96], sizes = [32, 32], strides = [1, 1]} : vector<32x128xbf16> to vector<32x32xbf16>
    %100 = vector.shape_cast %99 : vector<32x32xbf16> to vector<2x16x32xbf16>
    %101 = vector.extract_strided_slice %18 {offsets = [0, 96], sizes = [32, 32], strides = [1, 1]} : vector<32x128xbf16> to vector<32x32xbf16>
    %102 = vector.shape_cast %101 : vector<32x32xbf16> to vector<2x16x32xbf16>
    "tpu.trace_start"() <{level = 10 : i32, message = "bqd,bkd->bqk"}> : () -> ()
    %cst_29 = arith.constant dense<0.000000e+00> : vector<2x16x16xf32>
    %103 = tpu.matmul %98, %100, %cst_29 {dimension_numbers = #tpu.dot_dimension_numbers<[2], [2], [1], [1], [0, 0, 0, 1, 1, 1], [0], [0]>} : vector<2x16x32xbf16>, vector<2x16x32xbf16>, vector<2x16x16xf32> -> vector<2x16x16xf32>
    "tpu.trace_stop"() : () -> ()
    %cst_30 = arith.constant 0.176776692 : f32
    %104 = vector.broadcast %cst_30 : f32 to vector<2x16x16xf32>
    %105 = arith.mulf %103, %104 : vector<2x16x16xf32>
    %106 = vector.shape_cast %5 : vector<2x16xf32> to vector<2x1x16xf32>
    %107 = vector.broadcast %106 : vector<2x1x16xf32> to vector<2x16x16xf32>
    %108 = arith.addf %105, %107 : vector<2x16x16xf32>
    %cst_31 = arith.constant dense<0xFF800000> : vector<2x16xf32>
    %109 = vector.multi_reduction <maximumf>, %108, %cst_31 [2] : vector<2x16x16xf32> to vector<2x16xf32>
    %110 = vector.shape_cast %109 : vector<2x16xf32> to vector<2x16x1xf32>
    %111 = vector.broadcast %110 : vector<2x16x1xf32> to vector<2x16x16xf32>
    %112 = arith.subf %108, %111 : vector<2x16x16xf32>
    %113 = math.exp %112 : vector<2x16x16xf32>
    %cst_32 = arith.constant dense<0.000000e+00> : vector<2x16xf32>
    %114 = vector.multi_reduction <add>, %113, %cst_32 [2] : vector<2x16x16xf32> to vector<2x16xf32>
    %115 = vector.shape_cast %114 : vector<2x16xf32> to vector<2x16x1xf32>
    %116 = tpu.reciprocal %115 {approx = true} : vector<2x16x1xf32> -> vector<2x16x1xf32>
    %117 = vector.broadcast %116 : vector<2x16x1xf32> to vector<2x16x16xf32>
    %118 = arith.mulf %113, %117 : vector<2x16x16xf32>
    %119 = arith.truncf %118 : vector<2x16x16xf32> to vector<2x16x16xbf16>
    "tpu.trace_start"() <{level = 10 : i32, message = "bqk,bkd->bqd"}> : () -> ()
    %cst_33 = arith.constant dense<0.000000e+00> : vector<2x16x32xf32>
    %120 = tpu.matmul %119, %102, %cst_33 {dimension_numbers = #tpu.dot_dimension_numbers<[2], [1], [1], [2], [0, 0, 0, 1, 1, 2], [0], [0]>} : vector<2x16x16xbf16>, vector<2x16x32xbf16>, vector<2x16x32xf32> -> vector<2x16x32xf32>
    "tpu.trace_stop"() : () -> ()
    %121 = vector.shape_cast %120 : vector<2x16x32xf32> to vector<32x32xf32>
    %c0_34 = arith.constant 0 : index
    %c96 = arith.constant 96 : index
    %122 = vector.load %arg22[%c0_34, %c96] : memref<32x128xf32, #tpu.memory_space<vmem>>, vector<32x32xf32>
    tpu.vector_store %arg22[%c0_34, %c96], %121 {strides = array<i32>} : memref<32x128xf32, #tpu.memory_space<vmem>>, vector<32x32xf32>,
    %c0_35 = arith.constant 0 : index
    %c0_36 = arith.constant 0 : index
    %123 = vector.load %arg22[%c0_35, %c0_36] : memref<32x128xf32, #tpu.memory_space<vmem>>, vector<32x128xf32>
    %124 = arith.truncf %123 : vector<32x128xf32> to vector<32x128xbf16>
    %c0_37 = arith.constant 0 : index
    %c0_38 = arith.constant 0 : index
    %c0_39 = arith.constant 0 : index
    %125 = vector.load %arg5[%c0_37, %c0_38, %c0_39] : memref<1x128x128xbf16, #tpu.memory_space<vmem>>, vector<1x128x128xbf16>
    %126 = vector.shape_cast %125 : vector<1x128x128xbf16> to vector<128x128xbf16>
    %cst_40 = arith.constant dense<0.000000e+00> : vector<32x128xf32>
    %127 = tpu.matmul %124, %126, %cst_40 {dimension_numbers = #tpu.dot_dimension_numbers<[1], [0], [0], [1], [0, 0, 1, 1], [], []>} : vector<32x128xbf16>, vector<128x128xbf16>, vector<32x128xf32> -> vector<32x128xf32>
    %c0_41 = arith.constant 0 : index
    %c0_42 = arith.constant 0 : index
    %c0_43 = arith.constant 0 : index
    %128 = vector.load %arg6[%c0_41, %c0_42, %c0_43] : memref<1x1x128xf32, #tpu.memory_space<vmem>>, vector<1x1x128xf32>
    %129 = vector.shape_cast %128 : vector<1x1x128xf32> to vector<1x128xf32>
    %130 = vector.broadcast %129 : vector<1x128xf32> to vector<32x128xf32>
    %131 = arith.addf %127, %130 : vector<32x128xf32>
    %132 = arith.addf %131, %3 : vector<32x128xf32>
    %c0_44 = arith.constant 0 : index
    %c0_45 = arith.constant 0 : index
    %c0_46 = arith.constant 0 : index
    %133 = vector.load %arg7[%c0_44, %c0_45, %c0_46] : memref<1x1x128xf32, #tpu.memory_space<vmem>>, vector<1x1x128xf32>
    %134 = vector.shape_cast %133 : vector<1x1x128xf32> to vector<1x128xf32>
    %c0_47 = arith.constant 0 : index
    %c0_48 = arith.constant 0 : index
    %c0_49 = arith.constant 0 : index
    %135 = vector.load %arg8[%c0_47, %c0_48, %c0_49] : memref<1x1x128xf32, #tpu.memory_space<vmem>>, vector<1x1x128xf32>
    %136 = vector.shape_cast %135 : vector<1x1x128xf32> to vector<1x128xf32>
    %cst_50 = arith.constant dense<0.000000e+00> : vector<32xf32>
    %137 = vector.multi_reduction <add>, %132, %cst_50 [1] : vector<32x128xf32> to vector<32xf32>
    %138 = vector.shape_cast %137 : vector<32xf32> to vector<32x1xf32>
    %cst_51 = arith.constant 1.280000e+02 : f32
    %139 = vector.broadcast %cst_51 : f32 to vector<32x1xf32>
    %140 = arith.divf %138, %139 : vector<32x1xf32>
    %141 = vector.broadcast %140 : vector<32x1xf32> to vector<32x128xf32>
    %142 = arith.subf %132, %141 : vector<32x128xf32>
    %143 = arith.mulf %142, %142 : vector<32x128xf32>
    %cst_52 = arith.constant dense<0.000000e+00> : vector<32xf32>
    %144 = vector.multi_reduction <add>, %143, %cst_52 [1] : vector<32x128xf32> to vector<32xf32>
    %145 = vector.shape_cast %144 : vector<32xf32> to vector<32x1xf32>
    %cst_53 = arith.constant 1.280000e+02 : f32
    %146 = vector.broadcast %cst_53 : f32 to vector<32x1xf32>
    %147 = arith.divf %145, %146 : vector<32x1xf32>
    %148 = vector.broadcast %140 : vector<32x1xf32> to vector<32x128xf32>
    %149 = arith.subf %132, %148 : vector<32x128xf32>
    %cst_54 = arith.constant 9.99999996E-13 : f32
    %150 = vector.broadcast %cst_54 : f32 to vector<32x1xf32>
    %151 = arith.addf %147, %150 : vector<32x1xf32>
    %152 = math.rsqrt %151 : vector<32x1xf32>
    %153 = vector.broadcast %152 : vector<32x1xf32> to vector<32x128xf32>
    %154 = arith.mulf %149, %153 : vector<32x128xf32>
    %155 = vector.broadcast %134 : vector<1x128xf32> to vector<32x128xf32>
    %156 = arith.mulf %154, %155 : vector<32x128xf32>
    %157 = vector.broadcast %136 : vector<1x128xf32> to vector<32x128xf32>
    %158 = arith.addf %156, %157 : vector<32x128xf32>
    %159 = arith.truncf %158 : vector<32x128xf32> to vector<32x128xbf16>
    %c0_55 = arith.constant 0 : index
    %c0_56 = arith.constant 0 : index
    %c0_57 = arith.constant 0 : index
    %160 = vector.load %arg9[%c0_55, %c0_56, %c0_57] : memref<1x128x256xbf16, #tpu.memory_space<vmem>>, vector<1x128x256xbf16>
    %161 = vector.shape_cast %160 : vector<1x128x256xbf16> to vector<128x256xbf16>
    %cst_58 = arith.constant dense<0.000000e+00> : vector<32x256xf32>
    %162 = tpu.matmul %159, %161, %cst_58 {dimension_numbers = #tpu.dot_dimension_numbers<[1], [0], [0], [1], [0, 0, 1, 1], [], []>} : vector<32x128xbf16>, vector<128x256xbf16>, vector<32x256xf32> -> vector<32x256xf32>
    %c0_59 = arith.constant 0 : index
    %c0_60 = arith.constant 0 : index
    %c0_61 = arith.constant 0 : index
    %163 = vector.load %arg10[%c0_59, %c0_60, %c0_61] : memref<1x1x256xf32, #tpu.memory_space<vmem>>, vector<1x1x256xf32>
    %164 = vector.shape_cast %163 : vector<1x1x256xf32> to vector<1x256xf32>
    %165 = vector.broadcast %164 : vector<1x256xf32> to vector<32x256xf32>
    %166 = arith.addf %162, %165 : vector<32x256xf32>
    %cst_62 = arith.constant 5.000000e-01 : f32
    %167 = vector.broadcast %cst_62 : f32 to vector<32x256xf32>
    %168 = arith.mulf %167, %166 : vector<32x256xf32>
    %cst_63 = arith.constant 4.471500e-02 : f32
    %169 = vector.broadcast %cst_63 : f32 to vector<32x256xf32>
    %170 = arith.mulf %169, %166 : vector<32x256xf32>
    %171 = arith.mulf %170, %166 : vector<32x256xf32>
    %172 = arith.mulf %171, %166 : vector<32x256xf32>
    %173 = arith.addf %166, %172 : vector<32x256xf32>
    %cst_64 = arith.constant 0.797884583 : f32
    %174 = vector.broadcast %cst_64 : f32 to vector<32x256xf32>
    %175 = arith.mulf %174, %173 : vector<32x256xf32>
    %176 = math.tanh %175 : vector<32x256xf32>
    %cst_65 = arith.constant 1.000000e+00 : f32
    %177 = vector.broadcast %cst_65 : f32 to vector<32x256xf32>
    %178 = arith.addf %177, %176 : vector<32x256xf32>
    %179 = arith.mulf %168, %178 : vector<32x256xf32>
    %180 = arith.truncf %179 : vector<32x256xf32> to vector<32x256xbf16>
    %c0_66 = arith.constant 0 : index
    %c0_67 = arith.constant 0 : index
    %c0_68 = arith.constant 0 : index
    %181 = vector.load %arg11[%c0_66, %c0_67, %c0_68] : memref<1x256x128xbf16, #tpu.memory_space<vmem>>, vector<1x256x128xbf16>
    %182 = vector.shape_cast %181 : vector<1x256x128xbf16> to vector<256x128xbf16>
    %cst_69 = arith.constant dense<0.000000e+00> : vector<32x128xf32>
    %183 = tpu.matmul %180, %182, %cst_69 {dimension_numbers = #tpu.dot_dimension_numbers<[1], [0], [0], [1], [0, 0, 1, 1], [], []>} : vector<32x256xbf16>, vector<256x128xbf16>, vector<32x128xf32> -> vector<32x128xf32>
    %c0_70 = arith.constant 0 : index
    %c0_71 = arith.constant 0 : index
    %c0_72 = arith.constant 0 : index
    %184 = vector.load %arg12[%c0_70, %c0_71, %c0_72] : memref<1x1x128xf32, #tpu.memory_space<vmem>>, vector<1x1x128xf32>
    %185 = vector.shape_cast %184 : vector<1x1x128xf32> to vector<1x128xf32>
    %186 = vector.broadcast %185 : vector<1x128xf32> to vector<32x128xf32>
    %187 = arith.addf %183, %186 : vector<32x128xf32>
    %188 = arith.addf %187, %158 : vector<32x128xf32>
    %c0_73 = arith.constant 0 : index
    %c0_74 = arith.constant 0 : index
    %c0_75 = arith.constant 0 : index
    %189 = vector.load %arg13[%c0_73, %c0_74, %c0_75] : memref<1x1x128xf32, #tpu.memory_space<vmem>>, vector<1x1x128xf32>
    %190 = vector.shape_cast %189 : vector<1x1x128xf32> to vector<1x128xf32>
    %c0_76 = arith.constant 0 : index
    %c0_77 = arith.constant 0 : index
    %c0_78 = arith.constant 0 : index
    %191 = vector.load %arg14[%c0_76, %c0_77, %c0_78] : memref<1x1x128xf32, #tpu.memory_space<vmem>>, vector<1x1x128xf32>
    %192 = vector.shape_cast %191 : vector<1x1x128xf32> to vector<1x128xf32>
    %cst_79 = arith.constant dense<0.000000e+00> : vector<32xf32>
    %193 = vector.multi_reduction <add>, %188, %cst_79 [1] : vector<32x128xf32> to vector<32xf32>
    %194 = vector.shape_cast %193 : vector<32xf32> to vector<32x1xf32>
    %cst_80 = arith.constant 1.280000e+02 : f32
    %195 = vector.broadcast %cst_80 : f32 to vector<32x1xf32>
    %196 = arith.divf %194, %195 : vector<32x1xf32>
    %197 = vector.broadcast %196 : vector<32x1xf32> to vector<32x128xf32>
    %198 = arith.subf %188, %197 : vector<32x128xf32>
    %199 = arith.mulf %198, %198 : vector<32x128xf32>
    %cst_81 = arith.constant dense<0.000000e+00> : vector<32xf32>
    %200 = vector.multi_reduction <add>, %199, %cst_81 [1] : vector<32x128xf32> to vector<32xf32>
    %201 = vector.shape_cast %200 : vector<32xf32> to vector<32x1xf32>
    %cst_82 = arith.constant 1.280000e+02 : f32
    %202 = vector.broadcast %cst_82 : f32 to vector<32x1xf32>
    %203 = arith.divf %201, %202 : vector<32x1xf32>
    %204 = vector.broadcast %196 : vector<32x1xf32> to vector<32x128xf32>
    %205 = arith.subf %188, %204 : vector<32x128xf32>
    %cst_83 = arith.constant 9.99999996E-13 : f32
    %206 = vector.broadcast %cst_83 : f32 to vector<32x1xf32>
    %207 = arith.addf %203, %206 : vector<32x1xf32>
    %208 = math.rsqrt %207 : vector<32x1xf32>
    %209 = vector.broadcast %208 : vector<32x1xf32> to vector<32x128xf32>
    %210 = arith.mulf %205, %209 : vector<32x128xf32>
    %211 = vector.broadcast %190 : vector<1x128xf32> to vector<32x128xf32>
    %212 = arith.mulf %210, %211 : vector<32x128xf32>
    %213 = vector.broadcast %192 : vector<1x128xf32> to vector<32x128xf32>
    %214 = arith.addf %212, %213 : vector<32x128xf32>
    %c0_84 = arith.constant 0 : index
    %c0_85 = arith.constant 0 : index
    %215 = vector.load %arg21[%c0_84, %c0_85] : memref<32x128xf32, #tpu.memory_space<vmem>>, vector<32x128xf32>
    tpu.vector_store %arg21[%c0_84, %c0_85], %214 {strides = array<i32>} : memref<32x128xf32, #tpu.memory_space<vmem>>, vector<32x128xf32>,
    %c0_86 = arith.constant 0 : index
    %c0_87 = arith.constant 0 : index
    %216 = vector.load %arg19[%c0_86, %c0_87] : memref<32x128xf32, #tpu.memory_space<vmem>>, vector<32x128xf32>
    tpu.vector_store %arg19[%c0_86, %c0_87], %214 {strides = array<i32>} : memref<32x128xf32, #tpu.memory_space<vmem>>, vector<32x128xf32>,
    %217 = tpu.iota {dimensions = array<i32: 1>} : vector<2x32xi32>
    %218 = tpu.iota {dimensions = array<i32: 0>} : vector<2x32xi32>
    %c16_i32 = arith.constant 16 : i32
    %219 = vector.broadcast %c16_i32 : i32 to vector<2x32xi32>
    %220 = arith.muli %218, %219 : vector<2x32xi32>
    %221 = arith.cmpi eq, %217, %220 : vector<2x32xi32>
    %222 = arith.extui %221 : vector<2x32xi1> to vector<2x32xi32>
    %223 = arith.sitofp %222 : vector<2x32xi32> to vector<2x32xf32>
    %224 = arith.truncf %223 : vector<2x32xf32> to vector<2x32xbf16>
    %225 = arith.truncf %214 : vector<32x128xf32> to vector<32x128xbf16>
    %cst_88 = arith.constant dense<0.000000e+00> : vector<2x128xf32>
    %226 = tpu.matmul %224, %225, %cst_88 {dimension_numbers = #tpu.dot_dimension_numbers<[1], [0], [0], [1], [0, 0, 1, 1], [], []>} : vector<2x32xbf16>, vector<32x128xbf16>, vector<2x128xf32> -> vector<2x128xf32>
    %227 = arith.truncf %226 : vector<2x128xf32> to vector<2x128xbf16>
    %c0_89 = arith.constant 0 : index
    %c0_90 = arith.constant 0 : index
    %228 = vector.load %arg17[%c0_89, %c0_90] : memref<128x128xbf16, #tpu.memory_space<vmem>>, vector<128x128xbf16>
    %cst_91 = arith.constant dense<0.000000e+00> : vector<2x128xf32>
    %229 = tpu.matmul %227, %228, %cst_91 {dimension_numbers = #tpu.dot_dimension_numbers<[1], [0], [0], [1], [0, 0, 1, 1], [], []>} : vector<2x128xbf16>, vector<128x128xbf16>, vector<2x128xf32> -> vector<2x128xf32>
    %c0_92 = arith.constant 0 : index
    %c0_93 = arith.constant 0 : index
    %230 = vector.load %arg18[%c0_92, %c0_93] : memref<1x128xf32, #tpu.memory_space<vmem>>, vector<1x128xf32>
    %231 = vector.broadcast %230 : vector<1x128xf32> to vector<2x128xf32>
    %232 = arith.addf %229, %231 : vector<2x128xf32>
    %233 = math.tanh %232 : vector<2x128xf32>
    %c0_94 = arith.constant 0 : index
    %c0_95 = arith.constant 0 : index
    %234 = vector.load %arg20[%c0_94, %c0_95] : memref<2x128xf32, #tpu.memory_space<vmem>>, vector<2x128xf32>
    tpu.vector_store %arg20[%c0_94, %c0_95], %233 {strides = array<i32>} : memref<2x128xf32, #tpu.memory_space<vmem>>, vector<2x128xf32>,
    return
  }
  func.func @transform_0(%arg0: i32) -> (i32, i32) {
    %c0_i32 = arith.constant 0 : i32
    %c0_i32_0 = arith.constant 0 : i32
    %c0_i32_1 = arith.constant 0 : i32
    return %c0_i32, %c0_i32_0 : i32, i32
  }
  func.func @transform_1(%arg0: i32) -> (i32, i32) {
    %c0_i32 = arith.constant 0 : i32
    %c0_i32_0 = arith.constant 0 : i32
    %c0_i32_1 = arith.constant 0 : i32
    return %c0_i32, %c0_i32_0 : i32, i32
  }
  func.func @transform_2(%arg0: i32) -> (i32, i32, i32) {
    %c0_i32 = arith.constant 0 : i32
    %c0_i32_0 = arith.constant 0 : i32
    %c0_i32_1 = arith.constant 0 : i32
    return %arg0, %c0_i32, %c0_i32_0 : i32, i32, i32
  }
  func.func @transform_3(%arg0: i32) -> (i32, i32, i32) {
    %c0_i32 = arith.constant 0 : i32
    %c0_i32_0 = arith.constant 0 : i32
    %c0_i32_1 = arith.constant 0 : i32
    return %arg0, %c0_i32, %c0_i32_0 : i32, i32, i32
  }
  func.func @transform_4(%arg0: i32) -> (i32, i32, i32) {
    %c0_i32 = arith.constant 0 : i32
    %c0_i32_0 = arith.constant 0 : i32
    %c0_i32_1 = arith.constant 0 : i32
    return %arg0, %c0_i32, %c0_i32_0 : i32, i32, i32
  }
  func.func @transform_5(%arg0: i32) -> (i32, i32, i32) {
    %c0_i32 = arith.constant 0 : i32
    %c0_i32_0 = arith.constant 0 : i32
    %c0_i32_1 = arith.constant 0 : i32
    return %arg0, %c0_i32, %c0_i32_0 : i32, i32, i32
  }
  func.func @transform_6(%arg0: i32) -> (i32, i32, i32) {
    %c0_i32 = arith.constant 0 : i32
    %c0_i32_0 = arith.constant 0 : i32
    %c0_i32_1 = arith.constant 0 : i32
    return %arg0, %c0_i32, %c0_i32_0 : i32, i32, i32
  }
  func.func @transform_7(%arg0: i32) -> (i32, i32, i32) {
    %c0_i32 = arith.constant 0 : i32
    %c0_i32_0 = arith.constant 0 : i32
    %c0_i32_1 = arith.constant 0 : i32
    return %arg0, %c0_i32, %c0_i32_0 : i32, i32, i32
  }
  func.func @transform_8(%arg0: i32) -> (i32, i32, i32) {
    %c0_i32 = arith.constant 0 : i32
    %c0_i32_0 = arith.constant 0 : i32
    %c0_i32_1 = arith.constant 0 : i32
    return %arg0, %c0_i32, %c0_i32_0 : i32, i32, i32
  }
  func.func @transform_9(%arg0: i32) -> (i32, i32, i32) {
    %c0_i32 = arith.constant 0 : i32
    %c0_i32_0 = arith.constant 0 : i32
    %c0_i32_1 = arith.constant 0 : i32
    return %arg0, %c0_i32, %c0_i32_0 : i32, i32, i32
  }
  func.func @transform_10(%arg0: i32) -> (i32, i32, i32) {
    %c0_i32 = arith.constant 0 : i32
    %c0_i32_0 = arith.constant 0 : i32
    %c0_i32_1 = arith.constant 0 : i32
    return %arg0, %c0_i32, %c0_i32_0 : i32, i32, i32
  }
  func.func @transform_11(%arg0: i32) -> (i32, i32, i32) {
    %c0_i32 = arith.constant 0 : i32
    %c0_i32_0 = arith.constant 0 : i32
    %c0_i32_1 = arith.constant 0 : i32
    return %arg0, %c0_i32, %c0_i32_0 : i32, i32, i32
  }
  func.func @transform_12(%arg0: i32) -> (i32, i32, i32) {
    %c0_i32 = arith.constant 0 : i32
    %c0_i32_0 = arith.constant 0 : i32
    %c0_i32_1 = arith.constant 0 : i32
    return %arg0, %c0_i32, %c0_i32_0 : i32, i32, i32
  }
  func.func @transform_13(%arg0: i32) -> (i32, i32, i32) {
    %c0_i32 = arith.constant 0 : i32
    %c0_i32_0 = arith.constant 0 : i32
    %c0_i32_1 = arith.constant 0 : i32
    return %arg0, %c0_i32, %c0_i32_0 : i32, i32, i32
  }
  func.func @transform_14(%arg0: i32) -> (i32, i32) {
    %c0_i32 = arith.constant 0 : i32
    %c0_i32_0 = arith.constant 0 : i32
    %c0_i32_1 = arith.constant 0 : i32
    return %c0_i32, %c0_i32_0 : i32, i32
  }
  func.func @transform_15(%arg0: i32) -> (i32, i32) {
    %c0_i32 = arith.constant 0 : i32
    %c0_i32_0 = arith.constant 0 : i32
    %c0_i32_1 = arith.constant 0 : i32
    return %c0_i32, %c0_i32_0 : i32, i32
  }
  func.func @transform_16(%arg0: i32) -> (i32, i32) {
    %c0_i32 = arith.constant 0 : i32
    %c0_i32_0 = arith.constant 0 : i32
    %c0_i32_1 = arith.constant 0 : i32
    return %c0_i32, %c0_i32_0 : i32, i32
  }
  func.func @transform_17(%arg0: i32) -> (i32, i32) {
    %c0_i32 = arith.constant 0 : i32
    %c0_i32_0 = arith.constant 0 : i32
    %c0_i32_1 = arith.constant 0 : i32
    return %c0_i32, %c0_i32_0 : i32, i32
  }
  func.func @transform_18(%arg0: i32) -> (i32, i32) {
    %c0_i32 = arith.constant 0 : i32
    %c0_i32_0 = arith.constant 0 : i32
    %c0_i32_1 = arith.constant 0 : i32
    return %c0_i32, %c0_i32_0 : i32, i32
  }
  func.func @transform_19(%arg0: i32) -> (i32, i32) {
    %c0_i32 = arith.constant 0 : i32
    %c0_i32_0 = arith.constant 0 : i32
    %c0_i32_1 = arith.constant 0 : i32
    return %c0_i32, %c0_i32_0 : i32, i32
  }
}

</mosaic_0001>

<llo_original>
// kernel: bert_forward.1
$region0: #{bert_forward.1}
  #allocation0 [shape = 'u32[]', space=smem, size = 0x4, offset = 0x4, fixed_abs, tag = 'smem constant byte address 0x4 - core index']
  #allocation1 [shape = 'u32[144,128]{1,0:T(1,128)}', space=vmem, size = 0x12000, scoped, tag = 'internal scratch']
  #allocation2 [shape = 'f32[32,128]{1,0:T(8,128)}', space=vmem, size = 0x4000, scoped, tag = 'scratch operand']
  #allocation3 [shape = 'f32[32,128]{1,0:T(8,128)}', space=vmem, size = 0x4000, scoped, tag = 'scratch operand']
  %s0 = inlined_call_operand.vmem [shape: f32[32,128], index: 0, kind: input, shape index: {}]
  %s1 = inlined_call_operand.vmem [shape: f32[2,16], index: 1, kind: input, shape index: {}]
  %s2 = inlined_call_operand.vmem [shape: bf16[2,128,384], index: 2, kind: input, shape index: {}]
  %s3 = inlined_call_operand.vmem [shape: f32[2,1,384], index: 3, kind: input, shape index: {}]
  %s4 = inlined_call_operand.vmem [shape: bf16[2,128,128], index: 4, kind: input, shape index: {}]
  %s5 = inlined_call_operand.vmem [shape: f32[2,1,128], index: 5, kind: input, shape index: {}]
  %s6 = inlined_call_operand.vmem [shape: f32[2,1,128], index: 6, kind: input, shape index: {}]
  %s7 = inlined_call_operand.vmem [shape: f32[2,1,128], index: 7, kind: input, shape index: {}]
  %s8 = inlined_call_operand.hbm [shape: bf16[2,128,256], index: 8, kind: input, shape index: {}]
  %s9 = inlined_call_operand.vmem [shape: f32[2,1,256], index: 9, kind: input, shape index: {}]
  %s10 = inlined_call_operand.hbm [shape: bf16[2,256,128], index: 10, kind: input, shape index: {}]
  %s11 = inlined_call_operand.vmem [shape: f32[2,1,128], index: 11, kind: input, shape index: {}]
  %s12 = inlined_call_operand.vmem [shape: f32[2,1,128], index: 12, kind: input, shape index: {}]
  %s13 = inlined_call_operand.vmem [shape: f32[2,1,128], index: 13, kind: input, shape index: {}]
  %s14 = inlined_call_operand.vmem [shape: f32[1,128], index: 14, kind: input, shape index: {}]
  %s15 = inlined_call_operand.vmem [shape: f32[1,128], index: 15, kind: input, shape index: {}]
  %s16 = inlined_call_operand.hbm [shape: bf16[128,128], index: 16, kind: input, shape index: {}]
  %s17 = inlined_call_operand.vmem [shape: f32[1,128], index: 17, kind: input, shape index: {}]
  %s18 = inlined_call_operand.hbm [shape: f32[32,128], index: 18, kind: output, shape index: {0}]
  %s19 = inlined_call_operand.hbm [shape: f32[2,128], index: 19, kind: output, shape index: {1}]
  %20 = xla_tuple %s18, %s19
  %s21 = sld [smem:[#allocation0]]
  $region129: #{bert_forward.1} parent=0
    _
  %s23 = ssub.s32 1, %s21
  %s24 = scalar_select 0, %s23, %s21
  $region1: #{bert_forward.1} parent=0
    #allocation4 [shape = 'u8[131072]{0}', space=vmem, size = 0x20000, scoped, tag = 'input window, operand 8']
    #allocation5 [shape = 's32[2]{0}', space=sflag, size = 0x8, scoped, tag = 'scoped memory for bert_forward.1']
    #allocation6 [shape = 's32[2]{0}', space=sflag, size = 0x8, scoped, tag = 'scoped memory for bert_forward.1']
    #allocation7 [shape = 'u8[131072]{0}', space=vmem, size = 0x20000, scoped, tag = 'input window, operand 10']
    #allocation8 [shape = 's32[2]{0}', space=sflag, size = 0x8, scoped, tag = 'scoped memory for bert_forward.1']
    #allocation9 [shape = 'u8[32768]{0}', space=vmem, size = 0x8000, scoped, tag = 'input window, operand 16, single buffered']
    #allocation10 [shape = 'u8[16384]{0}', space=vmem, size = 0x4000, scoped, tag = 'output window, operand 0, single buffered']
    #allocation11 [shape = 'u8[1024]{0}', space=vmem, size = 0x400, scoped, tag = 'output window, operand 1, single buffered']
    #allocation12 [shape = 's32[1]{0}', space=sflag, size = 0x4, scoped, tag = 'scoped memory for bert_forward.1']
    %25 = vsyncpa [#allocation5], 0
    %s26 = scalar_lea.sflag [#allocation5], 1
    %27 = vsyncpa %s26, 0
    %28 = vsyncpa [#allocation8], 0
    %s29 = scalar_lea.sflag [#allocation8], 1
    %30 = vsyncpa %s29, 0
    %31 = vsyncpa [#allocation6], 0
    %32 = vsyncpa [#allocation12], 0
    loop: start=0, step=1, limit=4
    $region2: #{bert_forward.1} parent=1 // loop_pre_header
      _
    $region3: #{bert_forward.1} parent=1 // loop_header
      %s34 = sphi 0, %s38
      %p35 = scmp.ge.s32.totalorder %s34, 4
      %s42 = sphi 0, %s42
      %s44 = sphi 0, %s42
      %s45 = sphi 0, %s44
      %s59 = sphi 0, %s45
      %s63 = sphi 0, %s63
      %s65 = sphi 0, %s63
      %s66 = sphi 0, %s65
      %s80 = sphi 0, %s66
      %s86 = sphi 0, %s88
      %s89 = sphi 0, %s86
      %s90 = sphi 0, %s89
      %s106 = sphi 0, %s90
      %s112 = sphi 0, %s114
      %s115 = sphi 0, %s112
      %s116 = sphi 0, %s115
      %s132 = sphi 0, %s116
      %s138 = sphi 0, %s140
      %s141 = sphi 0, %s138
      %s142 = sphi 0, %s141
      %s158 = sphi 0, %s142
      %s164 = sphi 0, %s166
      %s167 = sphi 0, %s164
      %s168 = sphi 0, %s167
      %s184 = sphi 0, %s168
      %s190 = sphi 0, %s192
      %s193 = sphi 0, %s190
      %s194 = sphi 0, %s193
      %s210 = sphi 0, %s194
      %s216 = sphi 0, %s218
      %s219 = sphi 0, %s216
      %s220 = sphi 0, %s219
      %s236 = sphi 0, %s220
      %s242 = sphi 0, %s244
      %s245 = sphi 0, %s242
      %s246 = sphi 0, %s245
      %s262 = sphi 0, %s246
      %s268 = sphi 0, %s270
      %s271 = sphi 0, %s268
      %s272 = sphi 0, %s271
      %s288 = sphi 0, %s272
      %s294 = sphi 0, %s296
      %s297 = sphi 0, %s294
      %s298 = sphi 0, %s297
      %s314 = sphi 0, %s298
      %s320 = sphi 0, %s322
      %s323 = sphi 0, %s320
      %s324 = sphi 0, %s323
      %s340 = sphi 0, %s324
      %s346 = sphi 0, %s348
      %s349 = sphi 0, %s346
      %s350 = sphi 0, %s349
      %s366 = sphi 0, %s350
      %s372 = sphi 0, %s374
      %s375 = sphi 0, %s372
      %s376 = sphi 0, %s375
      %s392 = sphi 0, %s376
      %s396 = sphi 0, %s396
      %s398 = sphi 0, %s396
      %s399 = sphi 0, %s398
      %s413 = sphi 0, %s399
      %s417 = sphi 0, %s417
      %s419 = sphi 0, %s417
      %s420 = sphi 0, %s419
      %s434 = sphi 0, %s420
      %s438 = sphi 0, %s438
      %s440 = sphi 0, %s438
      %s441 = sphi 0, %s440
      %s455 = sphi 0, %s441
      %s459 = sphi 0, %s459
      %s461 = sphi 0, %s459
      %s462 = sphi 0, %s461
      %s476 = sphi 0, %s462
      %s480 = sphi 0, %s480
      %s482 = sphi 0, %s480
      %s483 = sphi 0, %s482
      %s497 = sphi 0, %s483
      %s501 = sphi 0, %s501
      %s503 = sphi 0, %s501
      %s504 = sphi 0, %s503
      %s518 = sphi 0, %s504
    $region4: #{bert_forward.1} parent=1 // loop_header_branch
      %37 = sbr.rel (%p35) target = $region8
    $region5: #{bert_forward.1} parent=1 // loop_body
      %s39 = ssub.s32 %s34, 1
      %s40 = ssub.s32 %s34, 2
      %s41 = sadd.s32 %s34, 1
      %s43 = sadd.s32 %s42, 1
      %p46 = scmp.eq.s32.totalorder %s34, 1
      %p47 = scmp.ne.s32.totalorder %s42, %s44
      %p48 = scmp.eq.s32.totalorder %s34, 0
      %p49 = por %p47, %p48
      %p50 = scmp.ne.s32.totalorder %s42, %s44
      %p51 = scmp.eq.s32.totalorder %s39, 1
      %p52 = por %p50, %p51
      %p53 = scmp.ne.s32.totalorder %s44, %s45
      %p54 = scmp.eq.s32.totalorder %s39, 0
      %p55 = por %p53, %p54
      %p56 = scmp.ne.s32.totalorder %s44, %s45
      %p57 = scmp.eq.s32.totalorder %s40, 1
      %p58 = por %p56, %p57
      %p60 = scmp.ne.s32.totalorder %s45, %s59
      %p61 = scmp.eq.s32.totalorder %s40, 0
      %p62 = por %p60, %p61
      %s64 = sadd.s32 %s63, 1
      %p67 = scmp.eq.s32.totalorder %s34, 1
      %p68 = scmp.ne.s32.totalorder %s63, %s65
      %p69 = scmp.eq.s32.totalorder %s34, 0
      %p70 = por %p68, %p69
      %p71 = scmp.ne.s32.totalorder %s63, %s65
      %p72 = scmp.eq.s32.totalorder %s39, 1
      %p73 = por %p71, %p72
      %p74 = scmp.ne.s32.totalorder %s65, %s66
      %p75 = scmp.eq.s32.totalorder %s39, 0
      %p76 = por %p74, %p75
      %p77 = scmp.ne.s32.totalorder %s65, %s66
      %p78 = scmp.eq.s32.totalorder %s40, 1
      %p79 = por %p77, %p78
      %p81 = scmp.ne.s32.totalorder %s66, %s80
      %p82 = scmp.eq.s32.totalorder %s40, 0
      %p83 = por %p81, %p82
      %s84 = ssub.s32 %s34, %s41
      %p85 = scmp.eq.s32.totalorder %s84, 0
      %s87 = sadd.s32 %s86, 1
      %s88 = scalar_select %p85, %s86, %s87
      %p91 = pneg %p85
      %p92 = scmp.eq.s32.totalorder %s34, 1
      %p93 = por %p91, %p92
      %p94 = scmp.ne.s32.totalorder %s86, %s89
      %p95 = scmp.eq.s32.totalorder %s34, 0
      %p96 = por %p94, %p95
      %p97 = scmp.ne.s32.totalorder %s86, %s89
      %p98 = scmp.eq.s32.totalorder %s39, 1
      %p99 = por %p97, %p98
      %p100 = scmp.ne.s32.totalorder %s89, %s90
      %p101 = scmp.eq.s32.totalorder %s39, 0
      %p102 = por %p100, %p101
      %p103 = scmp.ne.s32.totalorder %s89, %s90
      %p104 = scmp.eq.s32.totalorder %s40, 1
      %p105 = por %p103, %p104
      %p107 = scmp.ne.s32.totalorder %s90, %s106
      %p108 = scmp.eq.s32.totalorder %s40, 0
      %p109 = por %p107, %p108
      %s110 = ssub.s32 %s34, %s41
      %p111 = scmp.eq.s32.totalorder %s110, 0
      %s113 = sadd.s32 %s112, 1
      %s114 = scalar_select %p111, %s112, %s113
      %p117 = pneg %p111
      %p118 = scmp.eq.s32.totalorder %s34, 1
      %p119 = por %p117, %p118
      %p120 = scmp.ne.s32.totalorder %s112, %s115
      %p121 = scmp.eq.s32.totalorder %s34, 0
      %p122 = por %p120, %p121
      %p123 = scmp.ne.s32.totalorder %s112, %s115
      %p124 = scmp.eq.s32.totalorder %s39, 1
      %p125 = por %p123, %p124
      %p126 = scmp.ne.s32.totalorder %s115, %s116
      %p127 = scmp.eq.s32.totalorder %s39, 0
      %p128 = por %p126, %p127
      %p129 = scmp.ne.s32.totalorder %s115, %s116
      %p130 = scmp.eq.s32.totalorder %s40, 1
      %p131 = por %p129, %p130
      %p133 = scmp.ne.s32.totalorder %s116, %s132
      %p134 = scmp.eq.s32.totalorder %s40, 0
      %p135 = por %p133, %p134
      %s136 = ssub.s32 %s34, %s41
      %p137 = scmp.eq.s32.totalorder %s136, 0
      %s139 = sadd.s32 %s138, 1
      %s140 = scalar_select %p137, %s138, %s139
      %p143 = pneg %p137
      %p144 = scmp.eq.s32.totalorder %s34, 1
      %p145 = por %p143, %p144
      %p146 = scmp.ne.s32.totalorder %s138, %s141
      %p147 = scmp.eq.s32.totalorder %s34, 0
      %p148 = por %p146, %p147
      %p149 = scmp.ne.s32.totalorder %s138, %s141
      %p150 = scmp.eq.s32.totalorder %s39, 1
      %p151 = por %p149, %p150
      %p152 = scmp.ne.s32.totalorder %s141, %s142
      %p153 = scmp.eq.s32.totalorder %s39, 0
      %p154 = por %p152, %p153
      %p155 = scmp.ne.s32.totalorder %s141, %s142
      %p156 = scmp.eq.s32.totalorder %s40, 1
      %p157 = por %p155, %p156
      %p159 = scmp.ne.s32.totalorder %s142, %s158
      %p160 = scmp.eq.s32.totalorder %s40, 0
      %p161 = por %p159, %p160
      %s162 = ssub.s32 %s34, %s41
      %p163 = scmp.eq.s32.totalorder %s162, 0
      %s165 = sadd.s32 %s164, 1
      %s166 = scalar_select %p163, %s164, %s165
      %p169 = pneg %p163
      %p170 = scmp.eq.s32.totalorder %s34, 1
      %p171 = por %p169, %p170
      %p172 = scmp.ne.s32.totalorder %s164, %s167
      %p173 = scmp.eq.s32.totalorder %s34, 0
      %p174 = por %p172, %p173
      %p175 = scmp.ne.s32.totalorder %s164, %s167
      %p176 = scmp.eq.s32.totalorder %s39, 1
      %p177 = por %p175, %p176
      %p178 = scmp.ne.s32.totalorder %s167, %s168
      %p179 = scmp.eq.s32.totalorder %s39, 0
      %p180 = por %p178, %p179
      %p181 = scmp.ne.s32.totalorder %s167, %s168
      %p182 = scmp.eq.s32.totalorder %s40, 1
      %p183 = por %p181, %p182
      %p185 = scmp.ne.s32.totalorder %s168, %s184
      %p186 = scmp.eq.s32.totalorder %s40, 0
      %p187 = por %p185, %p186
      %s188 = ssub.s32 %s34, %s41
      %p189 = scmp.eq.s32.totalorder %s188, 0
      %s191 = sadd.s32 %s190, 1
      %s192 = scalar_select %p189, %s190, %s191
      %p195 = pneg %p189
      %p196 = scmp.eq.s32.totalorder %s34, 1
      %p197 = por %p195, %p196
      %p198 = scmp.ne.s32.totalorder %s190, %s193
      %p199 = scmp.eq.s32.totalorder %s34, 0
      %p200 = por %p198, %p199
      %p201 = scmp.ne.s32.totalorder %s190, %s193
      %p202 = scmp.eq.s32.totalorder %s39, 1
      %p203 = por %p201, %p202
      %p204 = scmp.ne.s32.totalorder %s193, %s194
      %p205 = scmp.eq.s32.totalorder %s39, 0
      %p206 = por %p204, %p205
      %p207 = scmp.ne.s32.totalorder %s193, %s194
      %p208 = scmp.eq.s32.totalorder %s40, 1
      %p209 = por %p207, %p208
      %p211 = scmp.ne.s32.totalorder %s194, %s210
      %p212 = scmp.eq.s32.totalorder %s40, 0
      %p213 = por %p211, %p212
      %s214 = ssub.s32 %s34, %s41
      %p215 = scmp.eq.s32.totalorder %s214, 0
      %s217 = sadd.s32 %s216, 1
      %s218 = scalar_select %p215, %s216, %s217
      %p221 = pneg %p215
      %p222 = scmp.eq.s32.totalorder %s34, 1
      %p223 = por %p221, %p222
      %p224 = scmp.ne.s32.totalorder %s216, %s219
      %p225 = scmp.eq.s32.totalorder %s34, 0
      %p226 = por %p224, %p225
      %p227 = scmp.ne.s32.totalorder %s216, %s219
      %p228 = scmp.eq.s32.totalorder %s39, 1
      %p229 = por %p227, %p228
      %p230 = scmp.ne.s32.totalorder %s219, %s220
      %p231 = scmp.eq.s32.totalorder %s39, 0
      %p232 = por %p230, %p231
      %p233 = scmp.ne.s32.totalorder %s219, %s220
      %p234 = scmp.eq.s32.totalorder %s40, 1
      %p235 = por %p233, %p234
      %p237 = scmp.ne.s32.totalorder %s220, %s236
      %p238 = scmp.eq.s32.totalorder %s40, 0
      %p239 = por %p237, %p238
      %s240 = ssub.s32 %s34, %s41
      %p241 = scmp.eq.s32.totalorder %s240, 0
      %s243 = sadd.s32 %s242, 1
      %s244 = scalar_select %p241, %s242, %s243
      %p247 = pneg %p241
      %p248 = scmp.eq.s32.totalorder %s34, 1
      %p249 = por %p247, %p248
      %p250 = scmp.ne.s32.totalorder %s242, %s245
      %p251 = scmp.eq.s32.totalorder %s34, 0
      %p252 = por %p250, %p251
      %p253 = scmp.ne.s32.totalorder %s242, %s245
      %p254 = scmp.eq.s32.totalorder %s39, 1
      %p255 = por %p253, %p254
      %p256 = scmp.ne.s32.totalorder %s245, %s246
      %p257 = scmp.eq.s32.totalorder %s39, 0
      %p258 = por %p256, %p257
      %p259 = scmp.ne.s32.totalorder %s245, %s246
      %p260 = scmp.eq.s32.totalorder %s40, 1
      %p261 = por %p259, %p260
      %p263 = scmp.ne.s32.totalorder %s246, %s262
      %p264 = scmp.eq.s32.totalorder %s40, 0
      %p265 = por %p263, %p264
      %s266 = ssub.s32 %s34, %s41
      %p267 = scmp.eq.s32.totalorder %s266, 0
      %s269 = sadd.s32 %s268, 1
      %s270 = scalar_select %p267, %s268, %s269
      %p273 = pneg %p267
      %p274 = scmp.eq.s32.totalorder %s34, 1
      %p275 = por %p273, %p274
      %p276 = scmp.ne.s32.totalorder %s268, %s271
      %p277 = scmp.eq.s32.totalorder %s34, 0
      %p278 = por %p276, %p277
      %p279 = scmp.ne.s32.totalorder %s268, %s271
      %p280 = scmp.eq.s32.totalorder %s39, 1
      %p281 = por %p279, %p280
      %p282 = scmp.ne.s32.totalorder %s271, %s272
      %p283 = scmp.eq.s32.totalorder %s39, 0
      %p284 = por %p282, %p283
      %p285 = scmp.ne.s32.totalorder %s271, %s272
      %p286 = scmp.eq.s32.totalorder %s40, 1
      %p287 = por %p285, %p286
      %p289 = scmp.ne.s32.totalorder %s272, %s288
      %p290 = scmp.eq.s32.totalorder %s40, 0
      %p291 = por %p289, %p290
      %s292 = ssub.s32 %s34, %s41
      %p293 = scmp.eq.s32.totalorder %s292, 0
      %s295 = sadd.s32 %s294, 1
      %s296 = scalar_select %p293, %s294, %s295
      %p299 = pneg %p293
      %p300 = scmp.eq.s32.totalorder %s34, 1
      %p301 = por %p299, %p300
      %p302 = scmp.ne.s32.totalorder %s294, %s297
      %p303 = scmp.eq.s32.totalorder %s34, 0
      %p304 = por %p302, %p303
      %p305 = scmp.ne.s32.totalorder %s294, %s297
      %p306 = scmp.eq.s32.totalorder %s39, 1
      %p307 = por %p305, %p306
      %p308 = scmp.ne.s32.totalorder %s297, %s298
      %p309 = scmp.eq.s32.totalorder %s39, 0
      %p310 = por %p308, %p309
      %p311 = scmp.ne.s32.totalorder %s297, %s298
      %p312 = scmp.eq.s32.totalorder %s40, 1
      %p313 = por %p311, %p312
      %p315 = scmp.ne.s32.totalorder %s298, %s314
      %p316 = scmp.eq.s32.totalorder %s40, 0
      %p317 = por %p315, %p316
      %s318 = ssub.s32 %s34, %s41
      %p319 = scmp.eq.s32.totalorder %s318, 0
      %s321 = sadd.s32 %s320, 1
      %s322 = scalar_select %p319, %s320, %s321
      %p325 = pneg %p319
      %p326 = scmp.eq.s32.totalorder %s34, 1
      %p327 = por %p325, %p326
      %p328 = scmp.ne.s32.totalorder %s320, %s323
      %p329 = scmp.eq.s32.totalorder %s34, 0
      %p330 = por %p328, %p329
      %p331 = scmp.ne.s32.totalorder %s320, %s323
      %p332 = scmp.eq.s32.totalorder %s39, 1
      %p333 = por %p331, %p332
      %p334 = scmp.ne.s32.totalorder %s323, %s324
      %p335 = scmp.eq.s32.totalorder %s39, 0
      %p336 = por %p334, %p335
      %p337 = scmp.ne.s32.totalorder %s323, %s324
      %p338 = scmp.eq.s32.totalorder %s40, 1
      %p339 = por %p337, %p338
      %p341 = scmp.ne.s32.totalorder %s324, %s340
      %p342 = scmp.eq.s32.totalorder %s40, 0
      %p343 = por %p341, %p342
      %s344 = ssub.s32 %s34, %s41
      %p345 = scmp.eq.s32.totalorder %s344, 0
      %s347 = sadd.s32 %s346, 1
      %s348 = scalar_select %p345, %s346, %s347
      %p351 = pneg %p345
      %p352 = scmp.eq.s32.totalorder %s34, 1
      %p353 = por %p351, %p352
      %p354 = scmp.ne.s32.totalorder %s346, %s349
      %p355 = scmp.eq.s32.totalorder %s34, 0
      %p356 = por %p354, %p355
      %p357 = scmp.ne.s32.totalorder %s346, %s349
      %p358 = scmp.eq.s32.totalorder %s39, 1
      %p359 = por %p357, %p358
      %p360 = scmp.ne.s32.totalorder %s349, %s350
      %p361 = scmp.eq.s32.totalorder %s39, 0
      %p362 = por %p360, %p361
      %p363 = scmp.ne.s32.totalorder %s349, %s350
      %p364 = scmp.eq.s32.totalorder %s40, 1
      %p365 = por %p363, %p364
      %p367 = scmp.ne.s32.totalorder %s350, %s366
      %p368 = scmp.eq.s32.totalorder %s40, 0
      %p369 = por %p367, %p368
      %s370 = ssub.s32 %s34, %s41
      %p371 = scmp.eq.s32.totalorder %s370, 0
      %s373 = sadd.s32 %s372, 1
      %s374 = scalar_select %p371, %s372, %s373
      %p377 = pneg %p371
      %p378 = scmp.eq.s32.totalorder %s34, 1
      %p379 = por %p377, %p378
      %p380 = scmp.ne.s32.totalorder %s372, %s375
      %p381 = scmp.eq.s32.totalorder %s34, 0
      %p382 = por %p380, %p381
      %p383 = scmp.ne.s32.totalorder %s372, %s375
      %p384 = scmp.eq.s32.totalorder %s39, 1
      %p385 = por %p383, %p384
      %p386 = scmp.ne.s32.totalorder %s375, %s376
      %p387 = scmp.eq.s32.totalorder %s39, 0
      %p388 = por %p386, %p387
      %p389 = scmp.ne.s32.totalorder %s375, %s376
      %p390 = scmp.eq.s32.totalorder %s40, 1
      %p391 = por %p389, %p390
      %p393 = scmp.ne.s32.totalorder %s376, %s392
      %p394 = scmp.eq.s32.totalorder %s40, 0
      %p395 = por %p393, %p394
      %s397 = sadd.s32 %s396, 1
      %p400 = scmp.eq.s32.totalorder %s34, 1
      %p401 = scmp.ne.s32.totalorder %s396, %s398
      %p402 = scmp.eq.s32.totalorder %s34, 0
      %p403 = por %p401, %p402
      %p404 = scmp.ne.s32.totalorder %s396, %s398
      %p405 = scmp.eq.s32.totalorder %s39, 1
      %p406 = por %p404, %p405
      %p407 = scmp.ne.s32.totalorder %s398, %s399
      %p408 = scmp.eq.s32.totalorder %s39, 0
      %p409 = por %p407, %p408
      %p410 = scmp.ne.s32.totalorder %s398, %s399
      %p411 = scmp.eq.s32.totalorder %s40, 1
      %p412 = por %p410, %p411
      %p414 = scmp.ne.s32.totalorder %s399, %s413
      %p415 = scmp.eq.s32.totalorder %s40, 0
      %p416 = por %p414, %p415
      %s418 = sadd.s32 %s417, 1
      %p421 = scmp.eq.s32.totalorder %s34, 1
      %p422 = scmp.ne.s32.totalorder %s417, %s419
      %p423 = scmp.eq.s32.totalorder %s34, 0
      %p424 = por %p422, %p423
      %p425 = scmp.ne.s32.totalorder %s417, %s419
      %p426 = scmp.eq.s32.totalorder %s39, 1
      %p427 = por %p425, %p426
      %p428 = scmp.ne.s32.totalorder %s419, %s420
      %p429 = scmp.eq.s32.totalorder %s39, 0
      %p430 = por %p428, %p429
      %p431 = scmp.ne.s32.totalorder %s419, %s420
      %p432 = scmp.eq.s32.totalorder %s40, 1
      %p433 = por %p431, %p432
      %p435 = scmp.ne.s32.totalorder %s420, %s434
      %p436 = scmp.eq.s32.totalorder %s40, 0
      %p437 = por %p435, %p436
      %s439 = sadd.s32 %s438, 1
      %p442 = scmp.eq.s32.totalorder %s34, 1
      %p443 = scmp.ne.s32.totalorder %s438, %s440
      %p444 = scmp.eq.s32.totalorder %s34, 0
      %p445 = por %p443, %p444
      %p446 = scmp.ne.s32.totalorder %s438, %s440
      %p447 = scmp.eq.s32.totalorder %s39, 1
      %p448 = por %p446, %p447
      %p449 = scmp.ne.s32.totalorder %s440, %s441
      %p450 = scmp.eq.s32.totalorder %s39, 0
      %p451 = por %p449, %p450
      %p452 = scmp.ne.s32.totalorder %s440, %s441
      %p453 = scmp.eq.s32.totalorder %s40, 1
      %p454 = por %p452, %p453
      %p456 = scmp.ne.s32.totalorder %s441, %s455
      %p457 = scmp.eq.s32.totalorder %s40, 0
      %p458 = por %p456, %p457
      %s460 = sadd.s32 %s459, 1
      %p463 = scmp.eq.s32.totalorder %s34, 1
      %p464 = scmp.ne.s32.totalorder %s459, %s461
      %p465 = scmp.eq.s32.totalorder %s34, 0
      %p466 = por %p464, %p465
      %p467 = scmp.ne.s32.totalorder %s459, %s461
      %p468 = scmp.eq.s32.totalorder %s39, 1
      %p469 = por %p467, %p468
      %p470 = scmp.ne.s32.totalorder %s461, %s462
      %p471 = scmp.eq.s32.totalorder %s39, 0
      %p472 = por %p470, %p471
      %p473 = scmp.ne.s32.totalorder %s461, %s462
      %p474 = scmp.eq.s32.totalorder %s40, 1
      %p475 = por %p473, %p474
      %p477 = scmp.ne.s32.totalorder %s462, %s476
      %p478 = scmp.eq.s32.totalorder %s40, 0
      %p479 = por %p477, %p478
      %s481 = sadd.s32 %s480, 1
      %p484 = scmp.eq.s32.totalorder %s34, 1
      %p485 = scmp.ne.s32.totalorder %s480, %s482
      %p486 = scmp.eq.s32.totalorder %s34, 0
      %p487 = por %p485, %p486
      %p488 = scmp.ne.s32.totalorder %s480, %s482
      %p489 = scmp.eq.s32.totalorder %s39, 1
      %p490 = por %p488, %p489
      %p491 = scmp.ne.s32.totalorder %s482, %s483
      %p492 = scmp.eq.s32.totalorder %s39, 0
      %p493 = por %p491, %p492
      %p494 = scmp.ne.s32.totalorder %s482, %s483
      %p495 = scmp.eq.s32.totalorder %s40, 1
      %p496 = por %p494, %p495
      %p498 = scmp.ne.s32.totalorder %s483, %s497
      %p499 = scmp.eq.s32.totalorder %s40, 0
      %p500 = por %p498, %p499
      %s502 = sadd.s32 %s501, 1
      %p505 = scmp.eq.s32.totalorder %s34, 1
      %p506 = scmp.ne.s32.totalorder %s501, %s503
      %p507 = scmp.eq.s32.totalorder %s34, 0
      %p508 = por %p506, %p507
      %p509 = scmp.ne.s32.totalorder %s501, %s503
      %p510 = scmp.eq.s32.totalorder %s39, 1
      %p511 = por %p509, %p510
      %p512 = scmp.ne.s32.totalorder %s503, %s504
      %p513 = scmp.eq.s32.totalorder %s39, 0
      %p514 = por %p512, %p513
      %p515 = scmp.ne.s32.totalorder %s503, %s504
      %p516 = scmp.eq.s32.totalorder %s40, 1
      %p517 = por %p515, %p516
      %p519 = scmp.ne.s32.totalorder %s504, %s518
      %p520 = scmp.eq.s32.totalorder %s40, 0
      %p521 = por %p519, %p520
      %p522 = scmp.le.s32.totalorder 1, %s34
      %p523 = scmp.lt.s32.totalorder %s34, 3
      %p524 = pnand %p522, %p523
      %p525 = pneg %p524
      // Predicated region
      $region9: #{bert_forward.1} parent=5 // pred_check
        _
      $region10: #{bert_forward.1} parent=5 // pred_check_branch
        %527 = sbr.rel (%p524) target = $region12
      $region11: #{bert_forward.1} parent=5 // pred_region
        %s528 = ssub.s32 %s34, 1
        // Predicated region
        $region13: #{bert_forward.1} parent=11 // pred_check
          %p529 = pneg %p55
        $region14: #{bert_forward.1} parent=11 // pred_check_branch
          %531 = sbr.rel (%p529) target = $region16
        $region15: #{bert_forward.1} parent=11 // pred_region
          _
        $region16: #{bert_forward.1} parent=11 // pred_fallthru
          _
        // Predicated region
        $region17: #{bert_forward.1} parent=11 // pred_check
          %p532 = pneg %p76
        $region18: #{bert_forward.1} parent=11 // pred_check_branch
          %534 = sbr.rel (%p532) target = $region20
        $region19: #{bert_forward.1} parent=11 // pred_region
          _
        $region20: #{bert_forward.1} parent=11 // pred_fallthru
          _
        // Predicated region
        $region21: #{bert_forward.1} parent=11 // pred_check
          %p535 = pneg %p409
        $region22: #{bert_forward.1} parent=11 // pred_check_branch
          %537 = sbr.rel (%p535) target = $region24
        $region23: #{bert_forward.1} parent=11 // pred_region
          _
        $region24: #{bert_forward.1} parent=11 // pred_fallthru
          _
        // Predicated region
        $region25: #{bert_forward.1} parent=11 // pred_check
          %p538 = pneg %p430
        $region26: #{bert_forward.1} parent=11 // pred_check_branch
          %540 = sbr.rel (%p538) target = $region28
        $region27: #{bert_forward.1} parent=11 // pred_region
          _
        $region28: #{bert_forward.1} parent=11 // pred_fallthru
          _
        // Predicated region
        $region29: #{bert_forward.1} parent=11 // pred_check
          %p541 = pneg %p451
        $region30: #{bert_forward.1} parent=11 // pred_check_branch
          %543 = sbr.rel (%p541) target = $region32
        $region31: #{bert_forward.1} parent=11 // pred_region
          %s545 = ssub.s32 1024, 1024
          %546 = vsyncadd [#allocation8], %s545
          %s547 = sshll.u32 [#allocation9], 4
          %s548 = int_to_ptr.vmem [resolvable:$true] %s547
          %553 = dma.hbm_to_vmem [thread:$0]  %s16, 1024, %s548, [#allocation8], 64, 64, 4
        $region32: #{bert_forward.1} parent=11 // pred_fallthru
          _
        // Predicated region
        $region33: #{bert_forward.1} parent=11 // pred_check
          %p554 = pneg %p472
        $region34: #{bert_forward.1} parent=11 // pred_check_branch
          %556 = sbr.rel (%p554) target = $region36
        $region35: #{bert_forward.1} parent=11 // pred_region
          _
        $region36: #{bert_forward.1} parent=11 // pred_fallthru
          _
      $region12: #{bert_forward.1} parent=5 // pred_fallthru
        _
      %p557 = scmp.lt.s32.totalorder %s34, 2
      // Predicated region
      $region37: #{bert_forward.1} parent=5 // pred_check
        %p558 = pneg %p557
      $region38: #{bert_forward.1} parent=5 // pred_check_branch
        %560 = sbr.rel (%p558) target = $region40
      $region39: #{bert_forward.1} parent=5 // pred_region
        // Predicated region
        $region41: #{bert_forward.1} parent=39 // pred_check
          %p561 = pneg %p96
        $region42: #{bert_forward.1} parent=39 // pred_check_branch
          %563 = sbr.rel (%p561) target = $region44
        $region43: #{bert_forward.1} parent=39 // pred_region
          %p564 = scmp.lt.s32.totalorder %s34, 1
          %s565 = scalar_select %p564, %s34, 1
          %s566 = smul.addr %s565, 48
          %s567 = smul.addr %s566, 4
          %s568 = scalar_lea.vmem %s2, %s567
        $region44: #{bert_forward.1} parent=39 // pred_fallthru
          _
        // Predicated region
        $region45: #{bert_forward.1} parent=39 // pred_check
          %p569 = pneg %p122
        $region46: #{bert_forward.1} parent=39 // pred_check_branch
          %571 = sbr.rel (%p569) target = $region48
        $region47: #{bert_forward.1} parent=39 // pred_region
          %p572 = scmp.lt.s32.totalorder %s34, 1
          %s573 = scalar_select %p572, %s34, 1
          %s574 = smul.addr %s573, 3
          %s575 = scalar_lea.vmem %s3, %s574
        $region48: #{bert_forward.1} parent=39 // pred_fallthru
          _
        // Predicated region
        $region49: #{bert_forward.1} parent=39 // pred_check
          %p576 = pneg %p148
        $region50: #{bert_forward.1} parent=39 // pred_check_branch
          %578 = sbr.rel (%p576) target = $region52
        $region51: #{bert_forward.1} parent=39 // pred_region
          %p579 = scmp.lt.s32.totalorder %s34, 1
          %s580 = scalar_select %p579, %s34, 1
          %s581 = smul.addr %s580, 16
          %s582 = smul.addr %s581, 4
          %s583 = scalar_lea.vmem %s4, %s582
        $region52: #{bert_forward.1} parent=39 // pred_fallthru
          _
        // Predicated region
        $region53: #{bert_forward.1} parent=39 // pred_check
          %p584 = pneg %p174
        $region54: #{bert_forward.1} parent=39 // pred_check_branch
          %586 = sbr.rel (%p584) target = $region56
        $region55: #{bert_forward.1} parent=39 // pred_region
          %p587 = scmp.lt.s32.totalorder %s34, 1
          %s588 = scalar_select %p587, %s34, 1
          %s589 = scalar_lea.vmem %s5, %s588
        $region56: #{bert_forward.1} parent=39 // pred_fallthru
          _
        // Predicated region
        $region57: #{bert_forward.1} parent=39 // pred_check
          %p590 = pneg %p200
        $region58: #{bert_forward.1} parent=39 // pred_check_branch
          %592 = sbr.rel (%p590) target = $region60
        $region59: #{bert_forward.1} parent=39 // pred_region
          %p593 = scmp.lt.s32.totalorder %s34, 1
          %s594 = scalar_select %p593, %s34, 1
          %s595 = scalar_lea.vmem %s6, %s594
        $region60: #{bert_forward.1} parent=39 // pred_fallthru
          _
        // Predicated region
        $region61: #{bert_forward.1} parent=39 // pred_check
          %p596 = pneg %p226
        $region62: #{bert_forward.1} parent=39 // pred_check_branch
          %598 = sbr.rel (%p596) target = $region64
        $region63: #{bert_forward.1} parent=39 // pred_region
          %p599 = scmp.lt.s32.totalorder %s34, 1
          %s600 = scalar_select %p599, %s34, 1
          %s601 = scalar_lea.vmem %s7, %s600
        $region64: #{bert_forward.1} parent=39 // pred_fallthru
          _
        // Predicated region
        $region65: #{bert_forward.1} parent=39 // pred_check
          %p602 = pneg %p252
        $region66: #{bert_forward.1} parent=39 // pred_check_branch
          %604 = sbr.rel (%p602) target = $region68
        $region67: #{bert_forward.1} parent=39 // pred_region
          %s605 = sand.u32 %s242, 1
          %s606 = scalar_lea.sflag [#allocation5], %s605
          %s607 = sand.u32 %s242, 1
          %s608 = smul.addr %s607, 128
          %s609 = scalar_lea.vmem [#allocation4], %s608
          %s611 = ssub.s32 2048, 2048
          %612 = vsyncadd %s606, %s611
          %s613 = smul.addr %s34, 32
          %s614 = smul.addr %s613, 64
          %s615 = scalar_lea.hbm %s8, %s614
          %s616 = sshll.u32 %s609, 4
          %s617 = int_to_ptr.vmem [resolvable:$true] %s616
          %622 = dma.hbm_to_vmem [thread:$0]  %s615, 2048, %s617, %s606, 128, 128, 8
        $region68: #{bert_forward.1} parent=39 // pred_fallthru
          _
        // Predicated region
        $region69: #{bert_forward.1} parent=39 // pred_check
          %p623 = pneg %p278
        $region70: #{bert_forward.1} parent=39 // pred_check_branch
          %625 = sbr.rel (%p623) target = $region72
        $region71: #{bert_forward.1} parent=39 // pred_region
          %p626 = scmp.lt.s32.totalorder %s34, 1
          %s627 = scalar_select %p626, %s34, 1
          %s628 = smul.addr %s627, 2
          %s629 = scalar_lea.vmem %s9, %s628
        $region72: #{bert_forward.1} parent=39 // pred_fallthru
          _
        // Predicated region
        $region73: #{bert_forward.1} parent=39 // pred_check
          %p630 = pneg %p304
        $region74: #{bert_forward.1} parent=39 // pred_check_branch
          %632 = sbr.rel (%p630) target = $region76
        $region75: #{bert_forward.1} parent=39 // pred_region
          %s633 = sand.u32 %s34, 1
          %s634 = scalar_lea.sflag [#allocation8], %s633
          %s635 = sand.u32 %s294, 1
          %s636 = smul.addr %s635, 128
          %s637 = scalar_lea.vmem [#allocation7], %s636
          %s639 = ssub.s32 2048, 2048
          %640 = vsyncadd %s634, %s639
          %s641 = smul.addr %s34, 32
          %s642 = smul.addr %s641, 64
          %s643 = scalar_lea.hbm %s10, %s642
          %s644 = sshll.u32 %s637, 4
          %s645 = int_to_ptr.vmem [resolvable:$true] %s644
          %650 = dma.hbm_to_vmem [thread:$0]  %s643, 2048, %s645, %s634, 64, 64, 4
        $region76: #{bert_forward.1} parent=39 // pred_fallthru
          _
        // Predicated region
        $region77: #{bert_forward.1} parent=39 // pred_check
          %p651 = pneg %p330
        $region78: #{bert_forward.1} parent=39 // pred_check_branch
          %653 = sbr.rel (%p651) target = $region80
        $region79: #{bert_forward.1} parent=39 // pred_region
          %p654 = scmp.lt.s32.totalorder %s34, 1
          %s655 = scalar_select %p654, %s34, 1
          %s656 = scalar_lea.vmem %s11, %s655
        $region80: #{bert_forward.1} parent=39 // pred_fallthru
          _
        // Predicated region
        $region81: #{bert_forward.1} parent=39 // pred_check
          %p657 = pneg %p356
        $region82: #{bert_forward.1} parent=39 // pred_check_branch
          %659 = sbr.rel (%p657) target = $region84
        $region83: #{bert_forward.1} parent=39 // pred_region
          %p660 = scmp.lt.s32.totalorder %s34, 1
          %s661 = scalar_select %p660, %s34, 1
          %s662 = scalar_lea.vmem %s12, %s661
        $region84: #{bert_forward.1} parent=39 // pred_fallthru
          _
        // Predicated region
        $region85: #{bert_forward.1} parent=39 // pred_check
          %p663 = pneg %p382
        $region86: #{bert_forward.1} parent=39 // pred_check_branch
          %665 = sbr.rel (%p663) target = $region88
        $region87: #{bert_forward.1} parent=39 // pred_region
          %p666 = scmp.lt.s32.totalorder %s34, 1
          %s667 = scalar_select %p666, %s34, 1
          %s668 = scalar_lea.vmem %s13, %s667
        $region88: #{bert_forward.1} parent=39 // pred_fallthru
          _
      $region40: #{bert_forward.1} parent=5 // pred_fallthru
        _
      %p669 = scmp.le.s32.totalorder 1, %s34
      %p670 = scmp.lt.s32.totalorder %s34, 3
      %p671 = pnand %p669, %p670
      %p672 = pneg %p671
      // Predicated region
      $region89: #{bert_forward.1} parent=5 // pred_check
        _
      $region90: #{bert_forward.1} parent=5 // pred_check_branch
        %674 = sbr.rel (%p671) target = $region92
      $region91: #{bert_forward.1} parent=5 // pred_region
        %s675 = ssub.s32 %s34, 1
        %s676 = sand.u32 %s245, 1
        %s677 = scalar_lea.sflag [#allocation5], %s676
        %s678 = sand.u32 %s245, 1
        %s679 = smul.addr %s678, 128
        %s680 = scalar_lea.vmem [#allocation4], %s679
        // Predicated region
        $region93: #{bert_forward.1} parent=91 // pred_check
          %p681 = pneg %p258
        $region94: #{bert_forward.1} parent=91 // pred_check_branch
          %683 = sbr.rel (%p681) target = $region96
        $region95: #{bert_forward.1} parent=91 // pred_region
          %684 = dma.done %s677, 2048
        $region96: #{bert_forward.1} parent=91 // pred_fallthru
          _
        %s685 = sand.u32 %s39, 1
        %s686 = scalar_lea.sflag [#allocation8], %s685
        %s687 = sand.u32 %s297, 1
        %s688 = smul.addr %s687, 128
        %s689 = scalar_lea.vmem [#allocation7], %s688
        // Predicated region
        $region97: #{bert_forward.1} parent=91 // pred_check
          %p690 = pneg %p310
        $region98: #{bert_forward.1} parent=91 // pred_check_branch
          %692 = sbr.rel (%p690) target = $region100
        $region99: #{bert_forward.1} parent=91 // pred_region
          %693 = dma.done %s686, 2048
        $region100: #{bert_forward.1} parent=91 // pred_fallthru
          _
        // Predicated region
        $region101: #{bert_forward.1} parent=91 // pred_check
          %p694 = pneg %p451
        $region102: #{bert_forward.1} parent=91 // pred_check_branch
          %696 = sbr.rel (%p694) target = $region104
        $region103: #{bert_forward.1} parent=91 // pred_region
          %697 = dma.done [#allocation8], 1024
        $region104: #{bert_forward.1} parent=91 // pred_fallthru
          _
        %p698 = pneg %p55
        %p699 = pneg %p52
        %p700 = pneg %p76
        %p701 = pneg %p73
        %p702 = scmp.lt.s32.totalorder %s39, 1
        %s703 = scalar_select %p702, %s39, 1
        %s704 = smul.addr %s703, 48
        %s705 = smul.addr %s704, 4
        %s706 = scalar_lea.vmem %s2, %s705
        %p707 = pneg %p102
        %p708 = pneg %p99
        %p709 = scmp.lt.s32.totalorder %s39, 1
        %s710 = scalar_select %p709, %s39, 1
        %s711 = smul.addr %s710, 3
        %s712 = scalar_lea.vmem %s3, %s711
        %p713 = pneg %p128
        %p714 = pneg %p125
        %p715 = scmp.lt.s32.totalorder %s39, 1
        %s716 = scalar_select %p715, %s39, 1
        %s717 = smul.addr %s716, 16
        %s718 = smul.addr %s717, 4
        %s719 = scalar_lea.vmem %s4, %s718
        %p720 = pneg %p154
        %p721 = pneg %p151
        %p722 = scmp.lt.s32.totalorder %s39, 1
        %s723 = scalar_select %p722, %s39, 1
        %s724 = scalar_lea.vmem %s5, %s723
        %p725 = pneg %p180
        %p726 = pneg %p177
        %p727 = scmp.lt.s32.totalorder %s39, 1
        %s728 = scalar_select %p727, %s39, 1
        %s729 = scalar_lea.vmem %s6, %s728
        %p730 = pneg %p206
        %p731 = pneg %p203
        %p732 = scmp.lt.s32.totalorder %s39, 1
        %s733 = scalar_select %p732, %s39, 1
        %s734 = scalar_lea.vmem %s7, %s733
        %p735 = pneg %p232
        %p736 = pneg %p229
        %s737 = sand.u32 %s245, 1
        %s738 = scalar_lea.sflag [#allocation5], %s737
        %s739 = sand.u32 %s245, 1
        %s740 = smul.addr %s739, 128
        %s741 = scalar_lea.vmem [#allocation4], %s740
        %p742 = pneg %p258
        %p743 = pneg %p255
        %p744 = scmp.lt.s32.totalorder %s39, 1
        %s745 = scalar_select %p744, %s39, 1
        %s746 = smul.addr %s745, 2
        %s747 = scalar_lea.vmem %s9, %s746
        %p748 = pneg %p284
        %p749 = pneg %p281
        %s750 = sand.u32 %s39, 1
        %s751 = scalar_lea.sflag [#allocation8], %s750
        %s752 = sand.u32 %s297, 1
        %s753 = smul.addr %s752, 128
        %s754 = scalar_lea.vmem [#allocation7], %s753
        %p755 = pneg %p310
        %p756 = pneg %p307
        %p757 = scmp.lt.s32.totalorder %s39, 1
        %s758 = scalar_select %p757, %s39, 1
        %s759 = scalar_lea.vmem %s11, %s758
        %p760 = pneg %p336
        %p761 = pneg %p333
        %p762 = scmp.lt.s32.totalorder %s39, 1
        %s763 = scalar_select %p762, %s39, 1
        %s764 = scalar_lea.vmem %s12, %s763
        %p765 = pneg %p362
        %p766 = pneg %p359
        %p767 = scmp.lt.s32.totalorder %s39, 1
        %s768 = scalar_select %p767, %s39, 1
        %s769 = scalar_lea.vmem %s13, %s768
        %p770 = pneg %p388
        %p771 = pneg %p385
        %p772 = pneg %p409
        %p773 = pneg %p406
        %p774 = pneg %p430
        %p775 = pneg %p427
        %p776 = pneg %p451
        %p777 = pneg %p448
        %p778 = pneg %p472
        %p779 = pneg %p469
        %p780 = pneg %p493
        %p781 = pneg %p490
        %p782 = pneg %p514
        %p783 = pneg %p511
        %p784 = scmp.lt.s32.totalorder %s39, 1
        %s785 = scalar_select %p784, %s39, 1
        %s786 = smul.addr %s785, 48
        %s787 = smul.addr %s786, 4
        %s788 = scalar_lea.vmem %s2, %s787
        %p789 = scmp.lt.s32.totalorder %s39, 1
        %s790 = scalar_select %p789, %s39, 1
        %s791 = smul.addr %s790, 3
        %s792 = scalar_lea.vmem %s3, %s791
        %p793 = scmp.lt.s32.totalorder %s39, 1
        %s794 = scalar_select %p793, %s39, 1
        %s795 = smul.addr %s794, 16
        %s796 = smul.addr %s795, 4
        %s797 = scalar_lea.vmem %s4, %s796
        %p798 = scmp.lt.s32.totalorder %s39, 1
        %s799 = scalar_select %p798, %s39, 1
        %s800 = scalar_lea.vmem %s5, %s799
        %p801 = scmp.lt.s32.totalorder %s39, 1
        %s802 = scalar_select %p801, %s39, 1
        %s803 = scalar_lea.vmem %s6, %s802
        %p804 = scmp.lt.s32.totalorder %s39, 1
        %s805 = scalar_select %p804, %s39, 1
        %s806 = scalar_lea.vmem %s7, %s805
        %p807 = scmp.lt.s32.totalorder %s39, 1
        %s808 = scalar_select %p807, %s39, 1
        %s809 = smul.addr %s808, 2
        %s810 = scalar_lea.vmem %s9, %s809
        %p811 = scmp.lt.s32.totalorder %s39, 1
        %s812 = scalar_select %p811, %s39, 1
        %s813 = scalar_lea.vmem %s11, %s812
        %p814 = scmp.lt.s32.totalorder %s39, 1
        %s815 = scalar_select %p814, %s39, 1
        %s816 = scalar_lea.vmem %s12, %s815
        %p817 = scmp.lt.s32.totalorder %s39, 1
        %s818 = scalar_select %p817, %s39, 1
        %s819 = scalar_lea.vmem %s13, %s818
        %p821 = scmp.eq.s32.totalorder %s39, 0
        // Predicated region
        $region105: #{bert_forward.1} parent=91 // pred_check
          %p822 = pneg %p821
        $region106: #{bert_forward.1} parent=91 // pred_check_branch
          %824 = sbr.rel (%p822) target = $region108
        $region107: #{bert_forward.1} parent=91 // pred_region
          %v825 = vld [vmem:[%s0] sm:$0xff]
          %v826 = vld [vmem:[%s0 + $0x8] sm:$0xff]
          %v827 = vld [vmem:[%s0 + $0x10] sm:$0xff]
          %v828 = vld [vmem:[%s0 + $0x18] sm:$0xff]
          %v829 = vld [vmem:[%s14] sm:$0x1]
          %v830 = vld [vmem:[%s15] sm:$0x1]
          %831 = vadd.xlane.f32.xlu0 %v825
          %v832 = vpop.xlane.xlu0 %831
          %833 = vadd.xlane.f32.xlu0 %v826
          %v834 = vpop.xlane.xlu0 %833
          %835 = vadd.xlane.f32.xlu0 %v827
          %v836 = vpop.xlane.xlu0 %835
          %837 = vadd.xlane.f32.xlu0 %v828
          %v838 = vpop.xlane.xlu0 %837
          %v839 = vrcp.pop 128.0
          %v840 = vmul.f32 %v832, %v839
          %v841 = vmul.f32 %v834, %v839
          %v842 = vmul.f32 %v836, %v839
          %v843 = vmul.f32 %v838, %v839
          %v844 = vsub.f32 %v825, %v840
          %v845 = vsub.f32 %v826, %v841
          %v846 = vsub.f32 %v827, %v842
          %v847 = vsub.f32 %v828, %v843
          %v848 = vmul.f32 %v844, %v844
          %v849 = vmul.f32 %v845, %v845
          %v850 = vmul.f32 %v846, %v846
          %v851 = vmul.f32 %v847, %v847
          %852 = vadd.xlane.f32.xlu0 %v848
          %v853 = vpop.xlane.xlu0 %852
          %854 = vadd.xlane.f32.xlu0 %v849
          %v855 = vpop.xlane.xlu0 %854
          %856 = vadd.xlane.f32.xlu0 %v850
          %v857 = vpop.xlane.xlu0 %856
          %858 = vadd.xlane.f32.xlu0 %v851
          %v859 = vpop.xlane.xlu0 %858
          %v860 = vmul.f32 %v853, %v839
          %v861 = vmul.f32 %v855, %v839
          %v862 = vmul.f32 %v857, %v839
          %v863 = vmul.f32 %v859, %v839
          %v864 = vadd.f32 %v860, 1e-12
          %v865 = vadd.f32 %v861, 1e-12
          %v866 = vadd.f32 %v862, 1e-12
          %v867 = vadd.f32 %v863, 1e-12
          %v868 = vrsqrt.pop %v864
          %v869 = vrsqrt.pop %v865
          %v870 = vrsqrt.pop %v866
          %v871 = vrsqrt.pop %v867
          %v872 = vmul.f32 %v844, %v868
          %v873 = vmul.f32 %v845, %v869
          %v874 = vmul.f32 %v846, %v870
          %v875 = vmul.f32 %v847, %v871
          %v877 = vlaneseq
          %v878 = vshrl.u32 %v877, 7
          %v879 = vsub.s32 0, %v878
          %v880 = vrot.slane %v829, %v879
          %v882 = vmul.f32 %v872, %v880
          %v883 = vmul.f32 %v873, %v880
          %v884 = vmul.f32 %v874, %v880
          %v885 = vmul.f32 %v875, %v880
          %v887 = vlaneseq
          %v888 = vshrl.u32 %v887, 7
          %v889 = vsub.s32 0, %v888
          %v890 = vrot.slane %v830, %v889
          %v892 = vadd.f32 %v882, %v890
          %v893 = vadd.f32 %v883, %v890
          %v894 = vadd.f32 %v884, %v890
          %v895 = vadd.f32 %v885, %v890
          %896 = vst [vmem:[#allocation2] sm:$0xff] %v892
          %897 = vst [vmem:[#allocation2 + $0x8] sm:$0xff] %v893
          %898 = vst [vmem:[#allocation2 + $0x10] sm:$0xff] %v894
          %899 = vst [vmem:[#allocation2 + $0x18] sm:$0xff] %v895
        $region108: #{bert_forward.1} parent=91 // pred_fallthru
          _
        %v900 = vld [vmem:[#allocation2] sm:$0xff]
        %v901 = vld [vmem:[#allocation2 + $0x8] sm:$0xff]
        %v902 = vld [vmem:[#allocation2 + $0x10] sm:$0xff]
        %v903 = vld [vmem:[#allocation2 + $0x18] sm:$0xff]
        %v904 = vpack.c.bf16 %v901, %v900
        %v905 = vpack.c.bf16 %v903, %v902
        %v906 = vld [vmem:[%s1] sm:$0x3]
        %v907 = vld [vmem:[%s788] sm:$0xff]
        %v908 = vld [vmem:[%s788 + $0x8] sm:$0xf]
        %v909 = vld [vmem:[%s788 + $0xc] sm:$0xff]
        %v910 = vld [vmem:[%s788 + $0x14] sm:$0xf]
        %v911 = vld [vmem:[%s788 + $0x18] sm:$0xff]
        %v912 = vld [vmem:[%s788 + $0x20] sm:$0xf]
        %v913 = vld [vmem:[%s788 + $0x24] sm:$0xff]
        %v914 = vld [vmem:[%s788 + $0x2c] sm:$0xf]
        %v915 = vld [vmem:[%s788 + $0x30] sm:$0xff]
        %v916 = vld [vmem:[%s788 + $0x38] sm:$0xf]
        %v917 = vld [vmem:[%s788 + $0x3c] sm:$0xff]
        %v918 = vld [vmem:[%s788 + $0x44] sm:$0xf]
        %v919 = vld [vmem:[%s788 + $0x48] sm:$0xff]
        %v920 = vld [vmem:[%s788 + $0x50] sm:$0xf]
        %v921 = vld [vmem:[%s788 + $0x54] sm:$0xff]
        %v922 = vld [vmem:[%s788 + $0x5c] sm:$0xf]
        %v923 = vld [vmem:[%s788 + $0x60] sm:$0xff]
        %v924 = vld [vmem:[%s788 + $0x68] sm:$0xf]
        %v925 = vld [vmem:[%s788 + $0x6c] sm:$0xff]
        %v926 = vld [vmem:[%s788 + $0x74] sm:$0xf]
        %v927 = vld [vmem:[%s788 + $0x78] sm:$0xff]
        %v928 = vld [vmem:[%s788 + $0x80] sm:$0xf]
        %v929 = vld [vmem:[%s788 + $0x84] sm:$0xff]
        %v930 = vld [vmem:[%s788 + $0x8c] sm:$0xf]
        %v931 = vld [vmem:[%s788 + $0x90] sm:$0xff]
        %v932 = vld [vmem:[%s788 + $0x98] sm:$0xf]
        %v933 = vld [vmem:[%s788 + $0x9c] sm:$0xff]
        %v934 = vld [vmem:[%s788 + $0xa4] sm:$0xf]
        %v935 = vld [vmem:[%s788 + $0xa8] sm:$0xff]
        %v936 = vld [vmem:[%s788 + $0xb0] sm:$0xf]
        %v937 = vld [vmem:[%s788 + $0xb4] sm:$0xff]
        %v938 = vld [vmem:[%s788 + $0xbc] sm:$0xf]
        %v939 = vld [vmem:[%s792] sm:$0x7]
        %v941 = vlaneseq
        %v942 = vshrl.u32 %v941, 7
        %v943 = vsub.s32 0, %v942
        %v944 = vrot.slane %v939, %v943
        %v945 = vlaneseq
        %v946 = vshrl.u32 %v945, 7
        %v947 = vsub.s32 1, %v946
        %v948 = vrot.slane %v939, %v947
        %v949 = vlaneseq
        %v950 = vshrl.u32 %v949, 7
        %v951 = vsub.s32 2, %v950
        %v952 = vrot.slane %v939, %v951
        %v988 = vunpack.c.l.b16 %v907
        %v989 = vunpack.c.h.b16 %v907
        %v990 = vunpack.c.l.b16 %v908
        %v991 = vunpack.c.l.b16 %v909
        %v992 = vunpack.c.h.b16 %v909
        %v993 = vunpack.c.l.b16 %v910
        %v994 = vunpack.c.l.b16 %v911
        %v995 = vunpack.c.h.b16 %v911
        %v996 = vunpack.c.l.b16 %v912
        %v997 = vunpack.c.l.b16 %v913
        %v998 = vunpack.c.h.b16 %v913
        %v999 = vunpack.c.l.b16 %v914
        %v1000 = vunpack.c.l.b16 %v915
        %v1001 = vunpack.c.h.b16 %v915
        %v1002 = vunpack.c.l.b16 %v916
        %v1003 = vunpack.c.l.b16 %v917
        %v1004 = vunpack.c.h.b16 %v917
        %v1005 = vunpack.c.l.b16 %v918
        %v1006 = vunpack.c.l.b16 %v919
        %v1007 = vunpack.c.h.b16 %v919
        %v1008 = vunpack.c.l.b16 %v920
        %v1009 = vunpack.c.l.b16 %v921
        %v1010 = vunpack.c.h.b16 %v921
        %v1011 = vunpack.c.l.b16 %v922
        %v1012 = vunpack.c.l.b16 %v923
        %v1013 = vunpack.c.h.b16 %v923
        %v1014 = vunpack.c.l.b16 %v924
        %v1015 = vunpack.c.l.b16 %v925
        %v1016 = vunpack.c.h.b16 %v925
        %v1017 = vunpack.c.l.b16 %v926
        %v1018 = vunpack.c.l.b16 %v927
        %v1019 = vunpack.c.h.b16 %v927
        %v1020 = vunpack.c.l.b16 %v928
        %v1021 = vunpack.c.l.b16 %v929
        %v1022 = vunpack.c.h.b16 %v929
        %v1023 = vunpack.c.l.b16 %v930
        %v1024 = vunpack.c.l.b16 %v931
        %v1025 = vunpack.c.h.b16 %v931
        %v1026 = vunpack.c.l.b16 %v932
        %v1027 = vunpack.c.l.b16 %v933
        %v1028 = vunpack.c.h.b16 %v933
        %v1029 = vunpack.c.l.b16 %v934
        %v1030 = vunpack.c.l.b16 %v935
        %v1031 = vunpack.c.h.b16 %v935
        %v1032 = vunpack.c.l.b16 %v936
        %v1033 = vunpack.c.l.b16 %v937
        %v1034 = vunpack.c.h.b16 %v937
        %v1035 = vunpack.c.l.b16 %v938
        %v1036 = vpack.c.b16 %v991, %v988
        %v1037 = vpack.c.b16 %v992, %v989
        %v1038 = vpack.c.b16 %v993, %v990
        %v1039 = vpack.c.b16 %v997, %v994
        %v1040 = vpack.c.b16 %v998, %v995
        %v1041 = vpack.c.b16 %v999, %v996
        %v1042 = vpack.c.b16 %v1003, %v1000
        %v1043 = vpack.c.b16 %v1004, %v1001
        %v1044 = vpack.c.b16 %v1005, %v1002
        %v1045 = vpack.c.b16 %v1009, %v1006
        %v1046 = vpack.c.b16 %v1010, %v1007
        %v1047 = vpack.c.b16 %v1011, %v1008
        %v1048 = vpack.c.b16 %v1015, %v1012
        %v1049 = vpack.c.b16 %v1016, %v1013
        %v1050 = vpack.c.b16 %v1017, %v1014
        %v1051 = vpack.c.b16 %v1021, %v1018
        %v1052 = vpack.c.b16 %v1022, %v1019
        %v1053 = vpack.c.b16 %v1023, %v1020
        %v1054 = vpack.c.b16 %v1027, %v1024
        %v1055 = vpack.c.b16 %v1028, %v1025
        %v1056 = vpack.c.b16 %v1029, %v1026
        %v1057 = vpack.c.b16 %v1033, %v1030
        %v1058 = vpack.c.b16 %v1034, %v1031
        %v1059 = vpack.c.b16 %v1035, %v1032
        %1084 = vmatprep.subr.bf16.mxu0 %v1037
        %1085 = vmatpush1.bf16.msra.mxu0 %v1036
        %1086 = vmatprep.subr.bf16.mxu0 %v1040
        %1087 = vmatpush1.bf16.msra.mxu0 %v1039
        %1088 = vmatprep.subr.bf16.mxu0 %v1043
        %1089 = vmatpush1.bf16.msra.mxu0 %v1042
        %1090 = vmatprep.subr.bf16.mxu0 %v1046
        %1091 = vmatpush1.bf16.msra.mxu0 %v1045
        %1092 = vmatprep.subr.bf16.mxu0 %v1049
        %1093 = vmatpush1.bf16.msra.mxu0 %v1048
        %1094 = vmatprep.subr.bf16.mxu0 %v1052
        %1095 = vmatpush1.bf16.msra.mxu0 %v1051
        %1096 = vmatprep.subr.bf16.mxu0 %v1055
        %1097 = vmatpush1.bf16.msra.mxu0 %v1054
        %1098 = vmatprep.subr.bf16.mxu0 %v1058
        %1099 = vmatpush1.bf16.msra.mxu0 %v1057
        %1100 = vmatprep.subr.bf16.mxu0 0
        %1101 = vmatpush1.bf16.msra.mxu0 0
        %1102 = vmatprep.subr.bf16.mxu0 0
        %1103 = vmatpush1.bf16.msra.mxu0 0
        %1104 = vmatprep.subr.bf16.mxu0 0
        %1105 = vmatpush1.bf16.msra.mxu0 0
        %1106 = vmatprep.subr.bf16.mxu0 0
        %1107 = vmatpush1.bf16.msra.mxu0 0
        %1108 = vmatprep.subr.bf16.mxu0 0
        %1109 = vmatpush1.bf16.msra.mxu0 0
        %1110 = vmatprep.subr.bf16.mxu0 0
        %1111 = vmatpush1.bf16.msra.mxu0 0
        %1112 = vmatprep.subr.bf16.mxu0 0
        %1113 = vmatpush1.bf16.msra.mxu0 0
        %1114 = vmatprep.subr.bf16.mxu0 0
        %1115 = vmatpush1.bf16.msra.mxu0 0
        %1116 = vmatprep.mubr.bf16.mxu0 0
        %1117 = vmatmul.mubr.bf16.gmra.mrb[0].mxu0 %v904
        %v1118 = vpop.f32.mrb[0].mxu0
        %v1119 = vadd.f32 %v944, %v1118
        %v1120 = vpop.f32.mrb[0].mxu0
        %v1121 = vadd.f32 %v948, %v1120
        %v1122 = vpop.f32.mrb[0].mxu0
        %v1123 = vadd.f32 %v944, %v1122
        %v1124 = vpop.f32.mrb[0].mxu0
        %v1125 = vadd.f32 %v948, %v1124
        %1126 = vmatprep.mubr.bf16.mxu0 0
        %1127 = vmatmul.mubr.bf16.gmra.mrb[0].mxu0 %v905
        %v1128 = vpop.f32.mrb[0].mxu0
        %v1129 = vadd.f32 %v944, %v1128
        %v1130 = vpop.f32.mrb[0].mxu0
        %v1131 = vadd.f32 %v948, %v1130
        %v1132 = vpop.f32.mrb[0].mxu0
        %v1133 = vadd.f32 %v944, %v1132
        %v1134 = vpop.f32.mrb[0].mxu0
        %v1135 = vadd.f32 %v948, %v1134
        %1136 = vdwg.mxu0
        %1137 = vmatprep.subr.bf16.mxu0 0
        %1138 = vmatpush1.bf16.msra.mxu0 %v1038
        %1139 = vmatprep.subr.bf16.mxu0 0
        %1140 = vmatpush1.bf16.msra.mxu0 %v1041
        %1141 = vmatprep.subr.bf16.mxu0 0
        %1142 = vmatpush1.bf16.msra.mxu0 %v1044
        %1143 = vmatprep.subr.bf16.mxu0 0
        %1144 = vmatpush1.bf16.msra.mxu0 %v1047
        %1145 = vmatprep.subr.bf16.mxu0 0
        %1146 = vmatpush1.bf16.msra.mxu0 %v1050
        %1147 = vmatprep.subr.bf16.mxu0 0
        %1148 = vmatpush1.bf16.msra.mxu0 %v1053
        %1149 = vmatprep.subr.bf16.mxu0 0
        %1150 = vmatpush1.bf16.msra.mxu0 %v1056
        %1151 = vmatprep.subr.bf16.mxu0 0
        %1152 = vmatpush1.bf16.msra.mxu0 %v1059
        %1153 = vmatprep.subr.bf16.mxu0 0
        %1154 = vmatpush1.bf16.msra.mxu0 0
        %1155 = vmatprep.subr.bf16.mxu0 0
        %1156 = vmatpush1.bf16.msra.mxu0 0
        %1157 = vmatprep.subr.bf16.mxu0 0
        %1158 = vmatpush1.bf16.msra.mxu0 0
        %1159 = vmatprep.subr.bf16.mxu0 0
        %1160 = vmatpush1.bf16.msra.mxu0 0
        %1161 = vmatprep.subr.bf16.mxu0 0
        %1162 = vmatpush1.bf16.msra.mxu0 0
        %1163 = vmatprep.subr.bf16.mxu0 0
        %1164 = vmatpush1.bf16.msra.mxu0 0
        %1165 = vmatprep.subr.bf16.mxu0 0
        %1166 = vmatpush1.bf16.msra.mxu0 0
        %1167 = vmatprep.subr.bf16.mxu0 0
        %1168 = vmatpush1.bf16.msra.mxu0 0
        %1169 = vmatprep.mubr.bf16.mxu0 0
        %1170 = vmatmul.mubr.bf16.gmra.mrb[0].mxu0 %v904
        %v1171 = vpop.f32.mrb[0].mxu0
        %v1172 = vadd.f32 %v952, %v1171
        %v1173 = vpop.f32.mrb[0].mxu0
        %v1174 = vpop.f32.mrb[0].mxu0
        %v1175 = vadd.f32 %v952, %v1174
        %v1176 = vpop.f32.mrb[0].mxu0
        %1177 = vmatprep.mubr.bf16.mxu0 0
        %1178 = vmatmul.mubr.bf16.gmra.mrb[0].mxu0 %v905
        %v1179 = vpop.f32.mrb[0].mxu0
        %v1180 = vadd.f32 %v952, %v1179
        %v1181 = vpop.f32.mrb[0].mxu0
        %v1182 = vpop.f32.mrb[0].mxu0
        %v1183 = vadd.f32 %v952, %v1182
        %v1184 = vpop.f32.mrb[0].mxu0
        %1185 = vdwg.mxu0
        %v1186 = vpack.c.bf16 %v1123, %v1119
        %v1187 = vpack.c.bf16 %v1133, %v1129
        %v1188 = vpack.c.bf16 %v1125, %v1121
        %v1189 = vpack.c.bf16 %v1135, %v1131
        %v1190 = vpack.c.bf16 %v1175, %v1172
        %v1191 = vpack.c.bf16 %v1183, %v1180
        %vm1192 = vcmask 261120
        %v1194 = vsel %vm1192, %v1186, 0
        %v1197 = vsel %vm1192, %v1188, 0
        %1199 = vmatprep.subr.bf16.mxu0 0
        %1200 = vmatpush1.bf16.xpose.msra.mxu0 %v1197
        %1201 = vmatprep.subr.bf16.mxu0 0
        %1202 = vmatpush1.bf16.xpose.msra.mxu0 0
        %1203 = vmatprep.subr.bf16.mxu0 0
        %1204 = vmatpush1.bf16.xpose.msra.mxu0 0
        %1205 = vmatprep.subr.bf16.mxu0 0
        %1206 = vmatpush1.bf16.xpose.msra.mxu0 0
        %1207 = vmatprep.subr.bf16.mxu0 0
        %1208 = vmatpush1.bf16.xpose.msra.mxu0 0
        %1209 = vmatprep.subr.bf16.mxu0 0
        %1210 = vmatpush1.bf16.xpose.msra.mxu0 0
        %1211 = vmatprep.subr.bf16.mxu0 0
        %1212 = vmatpush1.bf16.xpose.msra.mxu0 0
        %1213 = vmatprep.subr.bf16.mxu0 0
        %1214 = vmatpush1.bf16.xpose.msra.mxu0 0
        %1215 = vmatprep.subr.bf16.mxu0 0
        %1216 = vmatpush1.bf16.xpose.msra.mxu0 0
        %1217 = vmatprep.subr.bf16.mxu0 0
        %1218 = vmatpush1.bf16.xpose.msra.mxu0 0
        %1219 = vmatprep.subr.bf16.mxu0 0
        %1220 = vmatpush1.bf16.xpose.msra.mxu0 0
        %1221 = vmatprep.subr.bf16.mxu0 0
        %1222 = vmatpush1.bf16.xpose.msra.mxu0 0
        %1223 = vmatprep.subr.bf16.mxu0 0
        %1224 = vmatpush1.bf16.xpose.msra.mxu0 0
        %1225 = vmatprep.subr.bf16.mxu0 0
        %1226 = vmatpush1.bf16.xpose.msra.mxu0 0
        %1227 = vmatprep.subr.bf16.mxu0 0
        %1228 = vmatpush1.bf16.xpose.msra.mxu0 0
        %1229 = vmatprep.subr.bf16.mxu0 0
        %1230 = vmatpush1.bf16.xpose.msra.mxu0 0
        %1231 = vmatprep.mubr.bf16.mxu0 0
        %1232 = vmatmul.mubr.bf16.gmra.mrb[0].mxu0 %v1194
        %v1233 = vpop.f32.mrb[0].mxu0
        %v1234 = vadd.f32 0.0, %v1233
        %v1235 = vpop.f32.mrb[0].mxu0
        %v1236 = vpop.f32.mrb[0].mxu0
        %v1237 = vadd.f32 0.0, %v1236
        %v1238 = vpop.f32.mrb[0].mxu0
        %1239 = vdwg.mxu0
        %v1241 = vsel %vm1192, %v1187, 0
        %v1244 = vsel %vm1192, %v1189, 0
        %1246 = vmatprep.subr.bf16.mxu0 0
        %1247 = vmatpush1.bf16.xpose.msra.mxu0 %v1244
        %1248 = vmatprep.subr.bf16.mxu0 0
        %1249 = vmatpush1.bf16.xpose.msra.mxu0 0
        %1250 = vmatprep.subr.bf16.mxu0 0
        %1251 = vmatpush1.bf16.xpose.msra.mxu0 0
        %1252 = vmatprep.subr.bf16.mxu0 0
        %1253 = vmatpush1.bf16.xpose.msra.mxu0 0
        %1254 = vmatprep.subr.bf16.mxu0 0
        %1255 = vmatpush1.bf16.xpose.msra.mxu0 0
        %1256 = vmatprep.subr.bf16.mxu0 0
        %1257 = vmatpush1.bf16.xpose.msra.mxu0 0
        %1258 = vmatprep.subr.bf16.mxu0 0
        %1259 = vmatpush1.bf16.xpose.msra.mxu0 0
        %1260 = vmatprep.subr.bf16.mxu0 0
        %1261 = vmatpush1.bf16.xpose.msra.mxu0 0
        %1262 = vmatprep.subr.bf16.mxu0 0
        %1263 = vmatpush1.bf16.xpose.msra.mxu0 0
        %1264 = vmatprep.subr.bf16.mxu0 0
        %1265 = vmatpush1.bf16.xpose.msra.mxu0 0
        %1266 = vmatprep.subr.bf16.mxu0 0
        %1267 = vmatpush1.bf16.xpose.msra.mxu0 0
        %1268 = vmatprep.subr.bf16.mxu0 0
        %1269 = vmatpush1.bf16.xpose.msra.mxu0 0
        %1270 = vmatprep.subr.bf16.mxu0 0
        %1271 = vmatpush1.bf16.xpose.msra.mxu0 0
        %1272 = vmatprep.subr.bf16.mxu0 0
        %1273 = vmatpush1.bf16.xpose.msra.mxu0 0
        %1274 = vmatprep.subr.bf16.mxu0 0
        %1275 = vmatpush1.bf16.xpose.msra.mxu0 0
        %1276 = vmatprep.subr.bf16.mxu0 0
        %1277 = vmatpush1.bf16.xpose.msra.mxu0 0
        %1278 = vmatprep.mubr.bf16.mxu0 0
        %1279 = vmatmul.mubr.bf16.gmra.mrb[0].mxu0 %v1241
        %v1280 = vpop.f32.mrb[0].mxu0
        %v1281 = vadd.f32 0.0, %v1280
        %v1282 = vpop.f32.mrb[0].mxu0
        %v1283 = vpop.f32.mrb[0].mxu0
        %v1284 = vadd.f32 0.0, %v1283
        %v1285 = vpop.f32.mrb[0].mxu0
        %1286 = vdwg.mxu0
        %v1287 = vmul.f32 %v1234, 0.17677669
        %v1288 = vmul.f32 %v1237, 0.17677669
        %v1289 = vmul.f32 %v1281, 0.17677669
        %v1290 = vmul.f32 %v1284, 0.17677669
        %v1293 = vunpack.c.l.s4 1966171168
        %v1294 = vunpack.c.0.s8 %v1293
        %v1295 = vlaneseq
        %v1296 = vshrl.u32 %v1295, 7
        %v1297 = vsub.s32 %v1294, %v1296
        %v1298 = vrot.slane %v906, %v1297
        %v1299 = vcombine.high %v1298, %v1298
        %v1301 = vunpack.c.l.s4 1966171168
        %v1302 = vunpack.c.0.s8 %v1301
        %v1303 = vlaneseq
        %v1304 = vshrl.u32 %v1303, 7
        %v1305 = vsub.s32 %v1302, %v1304
        %v1306 = vrot.slane %v1298, %v1305
        %v1308 = vunpack.c.l.s4 1966171168
        %v1309 = vunpack.c.0.s8 %v1308
        %v1310 = vlaneseq
        %v1311 = vshrl.u32 %v1310, 7
        %v1312 = vsub.s32 %v1309, %v1311
        %v1313 = vrot.slane %v1299, %v1312
        %v1314 = vlaneseq
        %v1315 = vshrl.u32 %v1314, 7
        %v1316 = vsub.s32 0, %v1315
        %v1317 = vrot.slane %v1306, %v1316
        %v1318 = vlaneseq
        %v1319 = vshrl.u32 %v1318, 7
        %v1320 = vsub.s32 0, %v1319
        %v1321 = vrot.slane %v1313, %v1320
        %v1324 = vadd.f32 %v1287, %v1317
        %v1325 = vadd.f32 %v1288, %v1317
        %v1326 = vadd.f32 %v1289, %v1321
        %v1327 = vadd.f32 %v1290, %v1321
        %vm1328 = vcmask 130048
        %v1329 = vsel %vm1328, %v1324, -inf
        %1330 = vmax.xlane.f32.xlu0 %v1329
        %v1331 = vpop.xlane.xlu0 %1330
        %v1332 = vsel %vm1328, %v1325, -inf
        %1333 = vmax.xlane.f32.xlu0 %v1332
        %v1334 = vpop.xlane.xlu0 %1333
        %v1335 = vsel %vm1328, %v1326, -inf
        %1336 = vmax.xlane.f32.xlu0 %v1335
        %v1337 = vpop.xlane.xlu0 %1336
        %v1338 = vsel %vm1328, %v1327, -inf
        %1339 = vmax.xlane.f32.xlu0 %v1338
        %v1340 = vpop.xlane.xlu0 %1339
        %v1341 = vsub.f32 %v1324, %v1331
        %v1342 = vsub.f32 %v1325, %v1334
        %v1343 = vsub.f32 %v1326, %v1337
        %v1344 = vsub.f32 %v1327, %v1340
        %v1345 = vmul.f32 %v1341, 1.442695
        %v1346 = vpow.pop %v1345
        %v1347 = vmul.f32 %v1342, 1.442695
        %v1348 = vpow.pop %v1347
        %v1349 = vmul.f32 %v1343, 1.442695
        %v1350 = vpow.pop %v1349
        %v1351 = vmul.f32 %v1344, 1.442695
        %v1352 = vpow.pop %v1351
        %v1353 = vsel %vm1328, %v1346, 0.0
        %1354 = vadd.xlane.f32.xlu0 %v1353
        %v1355 = vpop.xlane.xlu0 %1354
        %v1356 = vsel %vm1328, %v1348, 0.0
        %1357 = vadd.xlane.f32.xlu0 %v1356
        %v1358 = vpop.xlane.xlu0 %1357
        %v1359 = vsel %vm1328, %v1350, 0.0
        %1360 = vadd.xlane.f32.xlu0 %v1359
        %v1361 = vpop.xlane.xlu0 %1360
        %v1362 = vsel %vm1328, %v1352, 0.0
        %1363 = vadd.xlane.f32.xlu0 %v1362
        %v1364 = vpop.xlane.xlu0 %1363
        %v1365 = vrcp.pop %v1355
        %v1366 = vrcp.pop %v1358
        %v1367 = vrcp.pop %v1361
        %v1368 = vrcp.pop %v1364
        %v1369 = vmul.f32 %v1346, %v1365
        %v1370 = vmul.f32 %v1348, %v1366
        %v1371 = vmul.f32 %v1350, %v1367
        %v1372 = vmul.f32 %v1352, %v1368
        %v1373 = vpack.c.bf16 %v1370, %v1369
        %v1374 = vpack.c.bf16 %v1372, %v1371
        %v1376 = vsel %vm1328, %v1373, 0
        %1378 = vmatprep.subr.bf16.mxu0 0
        %1379 = vmatpush1.bf16.msra.mxu0 %v1190
        %1380 = vmatprep.subr.bf16.mxu0 0
        %1381 = vmatpush1.bf16.msra.mxu0 0
        %1382 = vmatprep.subr.bf16.mxu0 0
        %1383 = vmatpush1.bf16.msra.mxu0 0
        %1384 = vmatprep.subr.bf16.mxu0 0
        %1385 = vmatpush1.bf16.msra.mxu0 0
        %1386 = vmatprep.subr.bf16.mxu0 0
        %1387 = vmatpush1.bf16.msra.mxu0 0
        %1388 = vmatprep.subr.bf16.mxu0 0
        %1389 = vmatpush1.bf16.msra.mxu0 0
        %1390 = vmatprep.subr.bf16.mxu0 0
        %1391 = vmatpush1.bf16.msra.mxu0 0
        %1392 = vmatprep.subr.bf16.mxu0 0
        %1393 = vmatpush1.bf16.msra.mxu0 0
        %1394 = vmatprep.subr.bf16.mxu0 0
        %1395 = vmatpush1.bf16.msra.mxu0 0
        %1396 = vmatprep.subr.bf16.mxu0 0
        %1397 = vmatpush1.bf16.msra.mxu0 0
        %1398 = vmatprep.subr.bf16.mxu0 0
        %1399 = vmatpush1.bf16.msra.mxu0 0
        %1400 = vmatprep.subr.bf16.mxu0 0
        %1401 = vmatpush1.bf16.msra.mxu0 0
        %1402 = vmatprep.subr.bf16.mxu0 0
        %1403 = vmatpush1.bf16.msra.mxu0 0
        %1404 = vmatprep.subr.bf16.mxu0 0
        %1405 = vmatpush1.bf16.msra.mxu0 0
        %1406 = vmatprep.subr.bf16.mxu0 0
        %1407 = vmatpush1.bf16.msra.mxu0 0
        %1408 = vmatprep.subr.bf16.mxu0 0
        %1409 = vmatpush1.bf16.msra.mxu0 0
        %1410 = vmatprep.mubr.bf16.mxu0 0
        %1411 = vmatmul.mubr.bf16.gmra.mrb[0].mxu0 %v1376
        %v1412 = vpop.f32.mrb[0].mxu0
        %v1413 = vadd.f32 0.0, %v1412
        %v1414 = vpop.f32.mrb[0].mxu0
        %v1415 = vpop.f32.mrb[0].mxu0
        %v1416 = vadd.f32 0.0, %v1415
        %v1417 = vpop.f32.mrb[0].mxu0
        %1418 = vdwg.mxu0
        %v1420 = vsel %vm1328, %v1374, 0
        %1422 = vmatprep.subr.bf16.mxu0 0
        %1423 = vmatpush1.bf16.msra.mxu0 %v1191
        %1424 = vmatprep.subr.bf16.mxu0 0
        %1425 = vmatpush1.bf16.msra.mxu0 0
        %1426 = vmatprep.subr.bf16.mxu0 0
        %1427 = vmatpush1.bf16.msra.mxu0 0
        %1428 = vmatprep.subr.bf16.mxu0 0
        %1429 = vmatpush1.bf16.msra.mxu0 0
        %1430 = vmatprep.subr.bf16.mxu0 0
        %1431 = vmatpush1.bf16.msra.mxu0 0
        %1432 = vmatprep.subr.bf16.mxu0 0
        %1433 = vmatpush1.bf16.msra.mxu0 0
        %1434 = vmatprep.subr.bf16.mxu0 0
        %1435 = vmatpush1.bf16.msra.mxu0 0
        %1436 = vmatprep.subr.bf16.mxu0 0
        %1437 = vmatpush1.bf16.msra.mxu0 0
        %1438 = vmatprep.subr.bf16.mxu0 0
        %1439 = vmatpush1.bf16.msra.mxu0 0
        %1440 = vmatprep.subr.bf16.mxu0 0
        %1441 = vmatpush1.bf16.msra.mxu0 0
        %1442 = vmatprep.subr.bf16.mxu0 0
        %1443 = vmatpush1.bf16.msra.mxu0 0
        %1444 = vmatprep.subr.bf16.mxu0 0
        %1445 = vmatpush1.bf16.msra.mxu0 0
        %1446 = vmatprep.subr.bf16.mxu0 0
        %1447 = vmatpush1.bf16.msra.mxu0 0
        %1448 = vmatprep.subr.bf16.mxu0 0
        %1449 = vmatpush1.bf16.msra.mxu0 0
        %1450 = vmatprep.subr.bf16.mxu0 0
        %1451 = vmatpush1.bf16.msra.mxu0 0
        %1452 = vmatprep.subr.bf16.mxu0 0
        %1453 = vmatpush1.bf16.msra.mxu0 0
        %1454 = vmatprep.mubr.bf16.mxu0 0
        %1455 = vmatmul.mubr.bf16.gmra.mrb[0].mxu0 %v1420
        %v1456 = vpop.f32.mrb[0].mxu0
        %v1457 = vadd.f32 0.0, %v1456
        %v1458 = vpop.f32.mrb[0].mxu0
        %v1459 = vpop.f32.mrb[0].mxu0
        %v1460 = vadd.f32 0.0, %v1459
        %v1461 = vpop.f32.mrb[0].mxu0
        %1462 = vdwg.mxu0
        %1463 = vst.msk [vmem:[#allocation3] sm:$0xff] %vm1192, %v1413
        %1464 = vst.msk [vmem:[#allocation3 + $0x8] sm:$0xff] %vm1192, %v1416
        %1465 = vst.msk [vmem:[#allocation3 + $0x10] sm:$0xff] %vm1192, %v1457
        %1466 = vst.msk [vmem:[#allocation3 + $0x18] sm:$0xff] %vm1192, %v1460
        %1468 = vrot.lane.b32.xlu0 %v1186, 96
        %v1469 = vpop.permute.xlu0 %1468
        %1471 = vrot.lane.b32.xlu0 %v1188, 96
        %v1472 = vpop.permute.xlu0 %1471
        %v1474 = vsel %vm1192, %v1469, 0
        %v1477 = vsel %vm1192, %v1472, 0
        %1479 = vmatprep.subr.bf16.mxu0 0
        %1480 = vmatpush1.bf16.xpose.msra.mxu0 %v1477
        %1481 = vmatprep.subr.bf16.mxu0 0
        %1482 = vmatpush1.bf16.xpose.msra.mxu0 0
        %1483 = vmatprep.subr.bf16.mxu0 0
        %1484 = vmatpush1.bf16.xpose.msra.mxu0 0
        %1485 = vmatprep.subr.bf16.mxu0 0
        %1486 = vmatpush1.bf16.xpose.msra.mxu0 0
        %1487 = vmatprep.subr.bf16.mxu0 0
        %1488 = vmatpush1.bf16.xpose.msra.mxu0 0
        %1489 = vmatprep.subr.bf16.mxu0 0
        %1490 = vmatpush1.bf16.xpose.msra.mxu0 0
        %1491 = vmatprep.subr.bf16.mxu0 0
        %1492 = vmatpush1.bf16.xpose.msra.mxu0 0
        %1493 = vmatprep.subr.bf16.mxu0 0
        %1494 = vmatpush1.bf16.xpose.msra.mxu0 0
        %1495 = vmatprep.subr.bf16.mxu0 0
        %1496 = vmatpush1.bf16.xpose.msra.mxu0 0
        %1497 = vmatprep.subr.bf16.mxu0 0
        %1498 = vmatpush1.bf16.xpose.msra.mxu0 0
        %1499 = vmatprep.subr.bf16.mxu0 0
        %1500 = vmatpush1.bf16.xpose.msra.mxu0 0
        %1501 = vmatprep.subr.bf16.mxu0 0
        %1502 = vmatpush1.bf16.xpose.msra.mxu0 0
        %1503 = vmatprep.subr.bf16.mxu0 0
        %1504 = vmatpush1.bf16.xpose.msra.mxu0 0
        %1505 = vmatprep.subr.bf16.mxu0 0
        %1506 = vmatpush1.bf16.xpose.msra.mxu0 0
        %1507 = vmatprep.subr.bf16.mxu0 0
        %1508 = vmatpush1.bf16.xpose.msra.mxu0 0
        %1509 = vmatprep.subr.bf16.mxu0 0
        %1510 = vmatpush1.bf16.xpose.msra.mxu0 0
        %1511 = vmatprep.mubr.bf16.mxu0 0
        %1512 = vmatmul.mubr.bf16.gmra.mrb[0].mxu0 %v1474
        %v1513 = vpop.f32.mrb[0].mxu0
        %v1514 = vadd.f32 0.0, %v1513
        %v1515 = vpop.f32.mrb[0].mxu0
        %v1516 = vpop.f32.mrb[0].mxu0
        %v1517 = vadd.f32 0.0, %v1516
        %v1518 = vpop.f32.mrb[0].mxu0
        %1519 = vdwg.mxu0
        %1521 = vrot.lane.b32.xlu0 %v1187, 96
        %v1522 = vpop.permute.xlu0 %1521
        %1524 = vrot.lane.b32.xlu0 %v1189, 96
        %v1525 = vpop.permute.xlu0 %1524
        %v1527 = vsel %vm1192, %v1522, 0
        %v1530 = vsel %vm1192, %v1525, 0
        %1532 = vmatprep.subr.bf16.mxu0 0
        %1533 = vmatpush1.bf16.xpose.msra.mxu0 %v1530
        %1534 = vmatprep.subr.bf16.mxu0 0
        %1535 = vmatpush1.bf16.xpose.msra.mxu0 0
        %1536 = vmatprep.subr.bf16.mxu0 0
        %1537 = vmatpush1.bf16.xpose.msra.mxu0 0
        %1538 = vmatprep.subr.bf16.mxu0 0
        %1539 = vmatpush1.bf16.xpose.msra.mxu0 0
        %1540 = vmatprep.subr.bf16.mxu0 0
        %1541 = vmatpush1.bf16.xpose.msra.mxu0 0
        %1542 = vmatprep.subr.bf16.mxu0 0
        %1543 = vmatpush1.bf16.xpose.msra.mxu0 0
        %1544 = vmatprep.subr.bf16.mxu0 0
        %1545 = vmatpush1.bf16.xpose.msra.mxu0 0
        %1546 = vmatprep.subr.bf16.mxu0 0
        %1547 = vmatpush1.bf16.xpose.msra.mxu0 0
        %1548 = vmatprep.subr.bf16.mxu0 0
        %1549 = vmatpush1.bf16.xpose.msra.mxu0 0
        %1550 = vmatprep.subr.bf16.mxu0 0
        %1551 = vmatpush1.bf16.xpose.msra.mxu0 0
        %1552 = vmatprep.subr.bf16.mxu0 0
        %1553 = vmatpush1.bf16.xpose.msra.mxu0 0
        %1554 = vmatprep.subr.bf16.mxu0 0
        %1555 = vmatpush1.bf16.xpose.msra.mxu0 0
        %1556 = vmatprep.subr.bf16.mxu0 0
        %1557 = vmatpush1.bf16.xpose.msra.mxu0 0
        %1558 = vmatprep.subr.bf16.mxu0 0
        %1559 = vmatpush1.bf16.xpose.msra.mxu0 0
        %1560 = vmatprep.subr.bf16.mxu0 0
        %1561 = vmatpush1.bf16.xpose.msra.mxu0 0
        %1562 = vmatprep.subr.bf16.mxu0 0
        %1563 = vmatpush1.bf16.xpose.msra.mxu0 0
        %1564 = vmatprep.mubr.bf16.mxu0 0
        %1565 = vmatmul.mubr.bf16.gmra.mrb[0].mxu0 %v1527
        %v1566 = vpop.f32.mrb[0].mxu0
        %v1567 = vadd.f32 0.0, %v1566
        %v1568 = vpop.f32.mrb[0].mxu0
        %v1569 = vpop.f32.mrb[0].mxu0
        %v1570 = vadd.f32 0.0, %v1569
        %v1571 = vpop.f32.mrb[0].mxu0
        %1572 = vdwg.mxu0
        %v1573 = vmul.f32 %v1514, 0.17677669
        %v1574 = vmul.f32 %v1517, 0.17677669
        %v1575 = vmul.f32 %v1567, 0.17677669
        %v1576 = vmul.f32 %v1570, 0.17677669
        %v1577 = vadd.f32 %v1573, %v1317
        %v1578 = vadd.f32 %v1574, %v1317
        %v1579 = vadd.f32 %v1575, %v1321
        %v1580 = vadd.f32 %v1576, %v1321
        %v1581 = vsel %vm1328, %v1577, -inf
        %1582 = vmax.xlane.f32.xlu0 %v1581
        %v1583 = vpop.xlane.xlu0 %1582
        %v1584 = vsel %vm1328, %v1578, -inf
        %1585 = vmax.xlane.f32.xlu0 %v1584
        %v1586 = vpop.xlane.xlu0 %1585
        %v1587 = vsel %vm1328, %v1579, -inf
        %1588 = vmax.xlane.f32.xlu0 %v1587
        %v1589 = vpop.xlane.xlu0 %1588
        %v1590 = vsel %vm1328, %v1580, -inf
        %1591 = vmax.xlane.f32.xlu0 %v1590
        %v1592 = vpop.xlane.xlu0 %1591
        %v1593 = vsub.f32 %v1577, %v1583
        %v1594 = vsub.f32 %v1578, %v1586
        %v1595 = vsub.f32 %v1579, %v1589
        %v1596 = vsub.f32 %v1580, %v1592
        %v1597 = vmul.f32 %v1593, 1.442695
        %v1598 = vpow.pop %v1597
        %v1599 = vmul.f32 %v1594, 1.442695
        %v1600 = vpow.pop %v1599
        %v1601 = vmul.f32 %v1595, 1.442695
        %v1602 = vpow.pop %v1601
        %v1603 = vmul.f32 %v1596, 1.442695
        %v1604 = vpow.pop %v1603
        %v1605 = vsel %vm1328, %v1598, 0.0
        %1606 = vadd.xlane.f32.xlu0 %v1605
        %v1607 = vpop.xlane.xlu0 %1606
        %v1608 = vsel %vm1328, %v1600, 0.0
        %1609 = vadd.xlane.f32.xlu0 %v1608
        %v1610 = vpop.xlane.xlu0 %1609
        %v1611 = vsel %vm1328, %v1602, 0.0
        %1612 = vadd.xlane.f32.xlu0 %v1611
        %v1613 = vpop.xlane.xlu0 %1612
        %v1614 = vsel %vm1328, %v1604, 0.0
        %1615 = vadd.xlane.f32.xlu0 %v1614
        %v1616 = vpop.xlane.xlu0 %1615
        %v1617 = vrcp.pop %v1607
        %v1618 = vrcp.pop %v1610
        %v1619 = vrcp.pop %v1613
        %v1620 = vrcp.pop %v1616
        %v1621 = vmul.f32 %v1598, %v1617
        %v1622 = vmul.f32 %v1600, %v1618
        %v1623 = vmul.f32 %v1602, %v1619
        %v1624 = vmul.f32 %v1604, %v1620
        %v1625 = vpack.c.bf16 %v1622, %v1621
        %v1626 = vpack.c.bf16 %v1624, %v1623
        %1628 = vrot.lane.b32.xlu0 %v1190, 96
        %v1629 = vpop.permute.xlu0 %1628
        %v1632 = vsel %vm1328, %v1625, 0
        %1634 = vmatprep.subr.bf16.mxu0 0
        %1635 = vmatpush1.bf16.msra.mxu0 %v1629
        %1636 = vmatprep.subr.bf16.mxu0 0
        %1637 = vmatpush1.bf16.msra.mxu0 0
        %1638 = vmatprep.subr.bf16.mxu0 0
        %1639 = vmatpush1.bf16.msra.mxu0 0
        %1640 = vmatprep.subr.bf16.mxu0 0
        %1641 = vmatpush1.bf16.msra.mxu0 0
        %1642 = vmatprep.subr.bf16.mxu0 0
        %1643 = vmatpush1.bf16.msra.mxu0 0
        %1644 = vmatprep.subr.bf16.mxu0 0
        %1645 = vmatpush1.bf16.msra.mxu0 0
        %1646 = vmatprep.subr.bf16.mxu0 0
        %1647 = vmatpush1.bf16.msra.mxu0 0
        %1648 = vmatprep.subr.bf16.mxu0 0
        %1649 = vmatpush1.bf16.msra.mxu0 0
        %1650 = vmatprep.subr.bf16.mxu0 0
        %1651 = vmatpush1.bf16.msra.mxu0 0
        %1652 = vmatprep.subr.bf16.mxu0 0
        %1653 = vmatpush1.bf16.msra.mxu0 0
        %1654 = vmatprep.subr.bf16.mxu0 0
        %1655 = vmatpush1.bf16.msra.mxu0 0
        %1656 = vmatprep.subr.bf16.mxu0 0
        %1657 = vmatpush1.bf16.msra.mxu0 0
        %1658 = vmatprep.subr.bf16.mxu0 0
        %1659 = vmatpush1.bf16.msra.mxu0 0
        %1660 = vmatprep.subr.bf16.mxu0 0
        %1661 = vmatpush1.bf16.msra.mxu0 0
        %1662 = vmatprep.subr.bf16.mxu0 0
        %1663 = vmatpush1.bf16.msra.mxu0 0
        %1664 = vmatprep.subr.bf16.mxu0 0
        %1665 = vmatpush1.bf16.msra.mxu0 0
        %1666 = vmatprep.mubr.bf16.mxu0 0
        %1667 = vmatmul.mubr.bf16.gmra.mrb[0].mxu0 %v1632
        %v1668 = vpop.f32.mrb[0].mxu0
        %v1669 = vadd.f32 0.0, %v1668
        %v1670 = vpop.f32.mrb[0].mxu0
        %v1671 = vpop.f32.mrb[0].mxu0
        %v1672 = vadd.f32 0.0, %v1671
        %v1673 = vpop.f32.mrb[0].mxu0
        %1674 = vdwg.mxu0
        %1676 = vrot.lane.b32.xlu0 %v1191, 96
        %v1677 = vpop.permute.xlu0 %1676
        %v1680 = vsel %vm1328, %v1626, 0
        %1682 = vmatprep.subr.bf16.mxu0 0
        %1683 = vmatpush1.bf16.msra.mxu0 %v1677
        %1684 = vmatprep.subr.bf16.mxu0 0
        %1685 = vmatpush1.bf16.msra.mxu0 0
        %1686 = vmatprep.subr.bf16.mxu0 0
        %1687 = vmatpush1.bf16.msra.mxu0 0
        %1688 = vmatprep.subr.bf16.mxu0 0
        %1689 = vmatpush1.bf16.msra.mxu0 0
        %1690 = vmatprep.subr.bf16.mxu0 0
        %1691 = vmatpush1.bf16.msra.mxu0 0
        %1692 = vmatprep.subr.bf16.mxu0 0
        %1693 = vmatpush1.bf16.msra.mxu0 0
        %1694 = vmatprep.subr.bf16.mxu0 0
        %1695 = vmatpush1.bf16.msra.mxu0 0
        %1696 = vmatprep.subr.bf16.mxu0 0
        %1697 = vmatpush1.bf16.msra.mxu0 0
        %1698 = vmatprep.subr.bf16.mxu0 0
        %1699 = vmatpush1.bf16.msra.mxu0 0
        %1700 = vmatprep.subr.bf16.mxu0 0
        %1701 = vmatpush1.bf16.msra.mxu0 0
        %1702 = vmatprep.subr.bf16.mxu0 0
        %1703 = vmatpush1.bf16.msra.mxu0 0
        %1704 = vmatprep.subr.bf16.mxu0 0
        %1705 = vmatpush1.bf16.msra.mxu0 0
        %1706 = vmatprep.subr.bf16.mxu0 0
        %1707 = vmatpush1.bf16.msra.mxu0 0
        %1708 = vmatprep.subr.bf16.mxu0 0
        %1709 = vmatpush1.bf16.msra.mxu0 0
        %1710 = vmatprep.subr.bf16.mxu0 0
        %1711 = vmatpush1.bf16.msra.mxu0 0
        %1712 = vmatprep.subr.bf16.mxu0 0
        %1713 = vmatpush1.bf16.msra.mxu0 0
        %1714 = vmatprep.mubr.bf16.mxu0 0
        %1715 = vmatmul.mubr.bf16.gmra.mrb[0].mxu0 %v1680
        %v1716 = vpop.f32.mrb[0].mxu0
        %v1717 = vadd.f32 0.0, %v1716
        %v1718 = vpop.f32.mrb[0].mxu0
        %v1719 = vpop.f32.mrb[0].mxu0
        %v1720 = vadd.f32 0.0, %v1719
        %v1721 = vpop.f32.mrb[0].mxu0
        %1722 = vdwg.mxu0
        %1727 = vrot.lane.b32.xlu0 %v1669, 32
        %v1728 = vpop.permute.xlu0 %1727
        %1729 = vrot.lane.b32.xlu0 %v1672, 32
        %v1730 = vpop.permute.xlu0 %1729
        %1731 = vrot.lane.b32.xlu0 %v1717, 32
        %v1732 = vpop.permute.xlu0 %1731
        %1733 = vrot.lane.b32.xlu0 %v1720, 32
        %v1734 = vpop.permute.xlu0 %1733
        %vm1739 = vcmask 523520
        %1740 = vst.msk [vmem:[#allocation3] sm:$0xff] %vm1739, %v1728
        %1741 = vst.msk [vmem:[#allocation3 + $0x8] sm:$0xff] %vm1739, %v1730
        %1742 = vst.msk [vmem:[#allocation3 + $0x10] sm:$0xff] %vm1739, %v1732
        %1743 = vst.msk [vmem:[#allocation3 + $0x18] sm:$0xff] %vm1739, %v1734
        %1744 = vrot.lane.b32.xlu0 %v1186, 64
        %v1745 = vpop.permute.xlu0 %1744
        %1746 = vrot.lane.b32.xlu0 %v1188, 64
        %v1747 = vpop.permute.xlu0 %1746
        %v1749 = vsel %vm1192, %v1745, 0
        %v1752 = vsel %vm1192, %v1747, 0
        %1754 = vmatprep.subr.bf16.mxu0 0
        %1755 = vmatpush1.bf16.xpose.msra.mxu0 %v1752
        %1756 = vmatprep.subr.bf16.mxu0 0
        %1757 = vmatpush1.bf16.xpose.msra.mxu0 0
        %1758 = vmatprep.subr.bf16.mxu0 0
        %1759 = vmatpush1.bf16.xpose.msra.mxu0 0
        %1760 = vmatprep.subr.bf16.mxu0 0
        %1761 = vmatpush1.bf16.xpose.msra.mxu0 0
        %1762 = vmatprep.subr.bf16.mxu0 0
        %1763 = vmatpush1.bf16.xpose.msra.mxu0 0
        %1764 = vmatprep.subr.bf16.mxu0 0
        %1765 = vmatpush1.bf16.xpose.msra.mxu0 0
        %1766 = vmatprep.subr.bf16.mxu0 0
        %1767 = vmatpush1.bf16.xpose.msra.mxu0 0
        %1768 = vmatprep.subr.bf16.mxu0 0
        %1769 = vmatpush1.bf16.xpose.msra.mxu0 0
        %1770 = vmatprep.subr.bf16.mxu0 0
        %1771 = vmatpush1.bf16.xpose.msra.mxu0 0
        %1772 = vmatprep.subr.bf16.mxu0 0
        %1773 = vmatpush1.bf16.xpose.msra.mxu0 0
        %1774 = vmatprep.subr.bf16.mxu0 0
        %1775 = vmatpush1.bf16.xpose.msra.mxu0 0
        %1776 = vmatprep.subr.bf16.mxu0 0
        %1777 = vmatpush1.bf16.xpose.msra.mxu0 0
        %1778 = vmatprep.subr.bf16.mxu0 0
        %1779 = vmatpush1.bf16.xpose.msra.mxu0 0
        %1780 = vmatprep.subr.bf16.mxu0 0
        %1781 = vmatpush1.bf16.xpose.msra.mxu0 0
        %1782 = vmatprep.subr.bf16.mxu0 0
        %1783 = vmatpush1.bf16.xpose.msra.mxu0 0
        %1784 = vmatprep.subr.bf16.mxu0 0
        %1785 = vmatpush1.bf16.xpose.msra.mxu0 0
        %1786 = vmatprep.mubr.bf16.mxu0 0
        %1787 = vmatmul.mubr.bf16.gmra.mrb[0].mxu0 %v1749
        %v1788 = vpop.f32.mrb[0].mxu0
        %v1789 = vadd.f32 0.0, %v1788
        %v1790 = vpop.f32.mrb[0].mxu0
        %v1791 = vpop.f32.mrb[0].mxu0
        %v1792 = vadd.f32 0.0, %v1791
        %v1793 = vpop.f32.mrb[0].mxu0
        %1794 = vdwg.mxu0
        %1795 = vrot.lane.b32.xlu0 %v1187, 64
        %v1796 = vpop.permute.xlu0 %1795
        %1797 = vrot.lane.b32.xlu0 %v1189, 64
        %v1798 = vpop.permute.xlu0 %1797
        %v1800 = vsel %vm1192, %v1796, 0
        %v1803 = vsel %vm1192, %v1798, 0
        %1805 = vmatprep.subr.bf16.mxu0 0
        %1806 = vmatpush1.bf16.xpose.msra.mxu0 %v1803
        %1807 = vmatprep.subr.bf16.mxu0 0
        %1808 = vmatpush1.bf16.xpose.msra.mxu0 0
        %1809 = vmatprep.subr.bf16.mxu0 0
        %1810 = vmatpush1.bf16.xpose.msra.mxu0 0
        %1811 = vmatprep.subr.bf16.mxu0 0
        %1812 = vmatpush1.bf16.xpose.msra.mxu0 0
        %1813 = vmatprep.subr.bf16.mxu0 0
        %1814 = vmatpush1.bf16.xpose.msra.mxu0 0
        %1815 = vmatprep.subr.bf16.mxu0 0
        %1816 = vmatpush1.bf16.xpose.msra.mxu0 0
        %1817 = vmatprep.subr.bf16.mxu0 0
        %1818 = vmatpush1.bf16.xpose.msra.mxu0 0
        %1819 = vmatprep.subr.bf16.mxu0 0
        %1820 = vmatpush1.bf16.xpose.msra.mxu0 0
        %1821 = vmatprep.subr.bf16.mxu0 0
        %1822 = vmatpush1.bf16.xpose.msra.mxu0 0
        %1823 = vmatprep.subr.bf16.mxu0 0
        %1824 = vmatpush1.bf16.xpose.msra.mxu0 0
        %1825 = vmatprep.subr.bf16.mxu0 0
        %1826 = vmatpush1.bf16.xpose.msra.mxu0 0
        %1827 = vmatprep.subr.bf16.mxu0 0
        %1828 = vmatpush1.bf16.xpose.msra.mxu0 0
        %1829 = vmatprep.subr.bf16.mxu0 0
        %1830 = vmatpush1.bf16.xpose.msra.mxu0 0
        %1831 = vmatprep.subr.bf16.mxu0 0
        %1832 = vmatpush1.bf16.xpose.msra.mxu0 0
        %1833 = vmatprep.subr.bf16.mxu0 0
        %1834 = vmatpush1.bf16.xpose.msra.mxu0 0
        %1835 = vmatprep.subr.bf16.mxu0 0
        %1836 = vmatpush1.bf16.xpose.msra.mxu0 0
        %1837 = vmatprep.mubr.bf16.mxu0 0
        %1838 = vmatmul.mubr.bf16.gmra.mrb[0].mxu0 %v1800
        %v1839 = vpop.f32.mrb[0].mxu0
        %v1840 = vadd.f32 0.0, %v1839
        %v1841 = vpop.f32.mrb[0].mxu0
        %v1842 = vpop.f32.mrb[0].mxu0
        %v1843 = vadd.f32 0.0, %v1842
        %v1844 = vpop.f32.mrb[0].mxu0
        %1845 = vdwg.mxu0
        %v1846 = vmul.f32 %v1789, 0.17677669
        %v1847 = vmul.f32 %v1792, 0.17677669
        %v1848 = vmul.f32 %v1840, 0.17677669
        %v1849 = vmul.f32 %v1843, 0.17677669
        %v1850 = vadd.f32 %v1846, %v1317
        %v1851 = vadd.f32 %v1847, %v1317
        %v1852 = vadd.f32 %v1848, %v1321
        %v1853 = vadd.f32 %v1849, %v1321
        %v1854 = vsel %vm1328, %v1850, -inf
        %1855 = vmax.xlane.f32.xlu0 %v1854
        %v1856 = vpop.xlane.xlu0 %1855
        %v1857 = vsel %vm1328, %v1851, -inf
        %1858 = vmax.xlane.f32.xlu0 %v1857
        %v1859 = vpop.xlane.xlu0 %1858
        %v1860 = vsel %vm1328, %v1852, -inf
        %1861 = vmax.xlane.f32.xlu0 %v1860
        %v1862 = vpop.xlane.xlu0 %1861
        %v1863 = vsel %vm1328, %v1853, -inf
        %1864 = vmax.xlane.f32.xlu0 %v1863
        %v1865 = vpop.xlane.xlu0 %1864
        %v1866 = vsub.f32 %v1850, %v1856
        %v1867 = vsub.f32 %v1851, %v1859
        %v1868 = vsub.f32 %v1852, %v1862
        %v1869 = vsub.f32 %v1853, %v1865
        %v1870 = vmul.f32 %v1866, 1.442695
        %v1871 = vpow.pop %v1870
        %v1872 = vmul.f32 %v1867, 1.442695
        %v1873 = vpow.pop %v1872
        %v1874 = vmul.f32 %v1868, 1.442695
        %v1875 = vpow.pop %v1874
        %v1876 = vmul.f32 %v1869, 1.442695
        %v1877 = vpow.pop %v1876
        %v1878 = vsel %vm1328, %v1871, 0.0
        %1879 = vadd.xlane.f32.xlu0 %v1878
        %v1880 = vpop.xlane.xlu0 %1879
        %v1881 = vsel %vm1328, %v1873, 0.0
        %1882 = vadd.xlane.f32.xlu0 %v1881
        %v1883 = vpop.xlane.xlu0 %1882
        %v1884 = vsel %vm1328, %v1875, 0.0
        %1885 = vadd.xlane.f32.xlu0 %v1884
        %v1886 = vpop.xlane.xlu0 %1885
        %v1887 = vsel %vm1328, %v1877, 0.0
        %1888 = vadd.xlane.f32.xlu0 %v1887
        %v1889 = vpop.xlane.xlu0 %1888
        %v1890 = vrcp.pop %v1880
        %v1891 = vrcp.pop %v1883
        %v1892 = vrcp.pop %v1886
        %v1893 = vrcp.pop %v1889
        %v1894 = vmul.f32 %v1871, %v1890
        %v1895 = vmul.f32 %v1873, %v1891
        %v1896 = vmul.f32 %v1875, %v1892
        %v1897 = vmul.f32 %v1877, %v1893
        %v1898 = vpack.c.bf16 %v1895, %v1894
        %v1899 = vpack.c.bf16 %v1897, %v1896
        %1900 = vrot.lane.b32.xlu0 %v1190, 64
        %v1901 = vpop.permute.xlu0 %1900
        %v1904 = vsel %vm1328, %v1898, 0
        %1906 = vmatprep.subr.bf16.mxu0 0
        %1907 = vmatpush1.bf16.msra.mxu0 %v1901
        %1908 = vmatprep.subr.bf16.mxu0 0
        %1909 = vmatpush1.bf16.msra.mxu0 0
        %1910 = vmatprep.subr.bf16.mxu0 0
        %1911 = vmatpush1.bf16.msra.mxu0 0
        %1912 = vmatprep.subr.bf16.mxu0 0
        %1913 = vmatpush1.bf16.msra.mxu0 0
        %1914 = vmatprep.subr.bf16.mxu0 0
        %1915 = vmatpush1.bf16.msra.mxu0 0
        %1916 = vmatprep.subr.bf16.mxu0 0
        %1917 = vmatpush1.bf16.msra.mxu0 0
        %1918 = vmatprep.subr.bf16.mxu0 0
        %1919 = vmatpush1.bf16.msra.mxu0 0
        %1920 = vmatprep.subr.bf16.mxu0 0
        %1921 = vmatpush1.bf16.msra.mxu0 0
        %1922 = vmatprep.subr.bf16.mxu0 0
        %1923 = vmatpush1.bf16.msra.mxu0 0
        %1924 = vmatprep.subr.bf16.mxu0 0
        %1925 = vmatpush1.bf16.msra.mxu0 0
        %1926 = vmatprep.subr.bf16.mxu0 0
        %1927 = vmatpush1.bf16.msra.mxu0 0
        %1928 = vmatprep.subr.bf16.mxu0 0
        %1929 = vmatpush1.bf16.msra.mxu0 0
        %1930 = vmatprep.subr.bf16.mxu0 0
        %1931 = vmatpush1.bf16.msra.mxu0 0
        %1932 = vmatprep.subr.bf16.mxu0 0
        %1933 = vmatpush1.bf16.msra.mxu0 0
        %1934 = vmatprep.subr.bf16.mxu0 0
        %1935 = vmatpush1.bf16.msra.mxu0 0
        %1936 = vmatprep.subr.bf16.mxu0 0
        %1937 = vmatpush1.bf16.msra.mxu0 0
        %1938 = vmatprep.mubr.bf16.mxu0 0
        %1939 = vmatmul.mubr.bf16.gmra.mrb[0].mxu0 %v1904
        %v1940 = vpop.f32.mrb[0].mxu0
        %v1941 = vadd.f32 0.0, %v1940
        %v1942 = vpop.f32.mrb[0].mxu0
        %v1943 = vpop.f32.mrb[0].mxu0
        %v1944 = vadd.f32 0.0, %v1943
        %v1945 = vpop.f32.mrb[0].mxu0
        %1946 = vdwg.mxu0
        %1947 = vrot.lane.b32.xlu0 %v1191, 64
        %v1948 = vpop.permute.xlu0 %1947
        %v1951 = vsel %vm1328, %v1899, 0
        %1953 = vmatprep.subr.bf16.mxu0 0
        %1954 = vmatpush1.bf16.msra.mxu0 %v1948
        %1955 = vmatprep.subr.bf16.mxu0 0
        %1956 = vmatpush1.bf16.msra.mxu0 0
        %1957 = vmatprep.subr.bf16.mxu0 0
        %1958 = vmatpush1.bf16.msra.mxu0 0
        %1959 = vmatprep.subr.bf16.mxu0 0
        %1960 = vmatpush1.bf16.msra.mxu0 0
        %1961 = vmatprep.subr.bf16.mxu0 0
        %1962 = vmatpush1.bf16.msra.mxu0 0
        %1963 = vmatprep.subr.bf16.mxu0 0
        %1964 = vmatpush1.bf16.msra.mxu0 0
        %1965 = vmatprep.subr.bf16.mxu0 0
        %1966 = vmatpush1.bf16.msra.mxu0 0
        %1967 = vmatprep.subr.bf16.mxu0 0
        %1968 = vmatpush1.bf16.msra.mxu0 0
        %1969 = vmatprep.subr.bf16.mxu0 0
        %1970 = vmatpush1.bf16.msra.mxu0 0
        %1971 = vmatprep.subr.bf16.mxu0 0
        %1972 = vmatpush1.bf16.msra.mxu0 0
        %1973 = vmatprep.subr.bf16.mxu0 0
        %1974 = vmatpush1.bf16.msra.mxu0 0
        %1975 = vmatprep.subr.bf16.mxu0 0
        %1976 = vmatpush1.bf16.msra.mxu0 0
        %1977 = vmatprep.subr.bf16.mxu0 0
        %1978 = vmatpush1.bf16.msra.mxu0 0
        %1979 = vmatprep.subr.bf16.mxu0 0
        %1980 = vmatpush1.bf16.msra.mxu0 0
        %1981 = vmatprep.subr.bf16.mxu0 0
        %1982 = vmatpush1.bf16.msra.mxu0 0
        %1983 = vmatprep.subr.bf16.mxu0 0
        %1984 = vmatpush1.bf16.msra.mxu0 0
        %1985 = vmatprep.mubr.bf16.mxu0 0
        %1986 = vmatmul.mubr.bf16.gmra.mrb[0].mxu0 %v1951
        %v1987 = vpop.f32.mrb[0].mxu0
        %v1988 = vadd.f32 0.0, %v1987
        %v1989 = vpop.f32.mrb[0].mxu0
        %v1990 = vpop.f32.mrb[0].mxu0
        %v1991 = vadd.f32 0.0, %v1990
        %v1992 = vpop.f32.mrb[0].mxu0
        %1993 = vdwg.mxu0
        %1998 = vrot.lane.b32.xlu0 %v1941, 64
        %v1999 = vpop.permute.xlu0 %1998
        %2000 = vrot.lane.b32.xlu0 %v1944, 64
        %v2001 = vpop.permute.xlu0 %2000
        %2002 = vrot.lane.b32.xlu0 %v1988, 64
        %v2003 = vpop.permute.xlu0 %2002
        %2004 = vrot.lane.b32.xlu0 %v1991, 64
        %v2005 = vpop.permute.xlu0 %2004
        %vm2010 = vcmask 785920
        %2011 = vst.msk [vmem:[#allocation3] sm:$0xff] %vm2010, %v1999
        %2012 = vst.msk [vmem:[#allocation3 + $0x8] sm:$0xff] %vm2010, %v2001
        %2013 = vst.msk [vmem:[#allocation3 + $0x10] sm:$0xff] %vm2010, %v2003
        %2014 = vst.msk [vmem:[#allocation3 + $0x18] sm:$0xff] %vm2010, %v2005
        %2015 = vrot.lane.b32.xlu0 %v1186, 32
        %v2016 = vpop.permute.xlu0 %2015
        %2017 = vrot.lane.b32.xlu0 %v1188, 32
        %v2018 = vpop.permute.xlu0 %2017
        %v2020 = vsel %vm1192, %v2016, 0
        %v2023 = vsel %vm1192, %v2018, 0
        %2025 = vmatprep.subr.bf16.mxu0 0
        %2026 = vmatpush1.bf16.xpose.msra.mxu0 %v2023
        %2027 = vmatprep.subr.bf16.mxu0 0
        %2028 = vmatpush1.bf16.xpose.msra.mxu0 0
        %2029 = vmatprep.subr.bf16.mxu0 0
        %2030 = vmatpush1.bf16.xpose.msra.mxu0 0
        %2031 = vmatprep.subr.bf16.mxu0 0
        %2032 = vmatpush1.bf16.xpose.msra.mxu0 0
        %2033 = vmatprep.subr.bf16.mxu0 0
        %2034 = vmatpush1.bf16.xpose.msra.mxu0 0
        %2035 = vmatprep.subr.bf16.mxu0 0
        %2036 = vmatpush1.bf16.xpose.msra.mxu0 0
        %2037 = vmatprep.subr.bf16.mxu0 0
        %2038 = vmatpush1.bf16.xpose.msra.mxu0 0
        %2039 = vmatprep.subr.bf16.mxu0 0
        %2040 = vmatpush1.bf16.xpose.msra.mxu0 0
        %2041 = vmatprep.subr.bf16.mxu0 0
        %2042 = vmatpush1.bf16.xpose.msra.mxu0 0
        %2043 = vmatprep.subr.bf16.mxu0 0
        %2044 = vmatpush1.bf16.xpose.msra.mxu0 0
        %2045 = vmatprep.subr.bf16.mxu0 0
        %2046 = vmatpush1.bf16.xpose.msra.mxu0 0
        %2047 = vmatprep.subr.bf16.mxu0 0
        %2048 = vmatpush1.bf16.xpose.msra.mxu0 0
        %2049 = vmatprep.subr.bf16.mxu0 0
        %2050 = vmatpush1.bf16.xpose.msra.mxu0 0
        %2051 = vmatprep.subr.bf16.mxu0 0
        %2052 = vmatpush1.bf16.xpose.msra.mxu0 0
        %2053 = vmatprep.subr.bf16.mxu0 0
        %2054 = vmatpush1.bf16.xpose.msra.mxu0 0
        %2055 = vmatprep.subr.bf16.mxu0 0
        %2056 = vmatpush1.bf16.xpose.msra.mxu0 0
        %2057 = vmatprep.mubr.bf16.mxu0 0
        %2058 = vmatmul.mubr.bf16.gmra.mrb[0].mxu0 %v2020
        %v2059 = vpop.f32.mrb[0].mxu0
        %v2060 = vadd.f32 0.0, %v2059
        %v2061 = vpop.f32.mrb[0].mxu0
        %v2062 = vpop.f32.mrb[0].mxu0
        %v2063 = vadd.f32 0.0, %v2062
        %v2064 = vpop.f32.mrb[0].mxu0
        %2065 = vdwg.mxu0
        %2066 = vrot.lane.b32.xlu0 %v1187, 32
        %v2067 = vpop.permute.xlu0 %2066
        %2068 = vrot.lane.b32.xlu0 %v1189, 32
        %v2069 = vpop.permute.xlu0 %2068
        %v2071 = vsel %vm1192, %v2067, 0
        %v2074 = vsel %vm1192, %v2069, 0
        %2076 = vmatprep.subr.bf16.mxu0 0
        %2077 = vmatpush1.bf16.xpose.msra.mxu0 %v2074
        %2078 = vmatprep.subr.bf16.mxu0 0
        %2079 = vmatpush1.bf16.xpose.msra.mxu0 0
        %2080 = vmatprep.subr.bf16.mxu0 0
        %2081 = vmatpush1.bf16.xpose.msra.mxu0 0
        %2082 = vmatprep.subr.bf16.mxu0 0
        %2083 = vmatpush1.bf16.xpose.msra.mxu0 0
        %2084 = vmatprep.subr.bf16.mxu0 0
        %2085 = vmatpush1.bf16.xpose.msra.mxu0 0
        %2086 = vmatprep.subr.bf16.mxu0 0
        %2087 = vmatpush1.bf16.xpose.msra.mxu0 0
        %2088 = vmatprep.subr.bf16.mxu0 0
        %2089 = vmatpush1.bf16.xpose.msra.mxu0 0
        %2090 = vmatprep.subr.bf16.mxu0 0
        %2091 = vmatpush1.bf16.xpose.msra.mxu0 0
        %2092 = vmatprep.subr.bf16.mxu0 0
        %2093 = vmatpush1.bf16.xpose.msra.mxu0 0
        %2094 = vmatprep.subr.bf16.mxu0 0
        %2095 = vmatpush1.bf16.xpose.msra.mxu0 0
        %2096 = vmatprep.subr.bf16.mxu0 0
        %2097 = vmatpush1.bf16.xpose.msra.mxu0 0
        %2098 = vmatprep.subr.bf16.mxu0 0
        %2099 = vmatpush1.bf16.xpose.msra.mxu0 0
        %2100 = vmatprep.subr.bf16.mxu0 0
        %2101 = vmatpush1.bf16.xpose.msra.mxu0 0
        %2102 = vmatprep.subr.bf16.mxu0 0
        %2103 = vmatpush1.bf16.xpose.msra.mxu0 0
        %2104 = vmatprep.subr.bf16.mxu0 0
        %2105 = vmatpush1.bf16.xpose.msra.mxu0 0
        %2106 = vmatprep.subr.bf16.mxu0 0
        %2107 = vmatpush1.bf16.xpose.msra.mxu0 0
        %2108 = vmatprep.mubr.bf16.mxu0 0
        %2109 = vmatmul.mubr.bf16.gmra.mrb[0].mxu0 %v2071
        %v2110 = vpop.f32.mrb[0].mxu0
        %v2111 = vadd.f32 0.0, %v2110
        %v2112 = vpop.f32.mrb[0].mxu0
        %v2113 = vpop.f32.mrb[0].mxu0
        %v2114 = vadd.f32 0.0, %v2113
        %v2115 = vpop.f32.mrb[0].mxu0
        %2116 = vdwg.mxu0
        %v2117 = vmul.f32 %v2060, 0.17677669
        %v2118 = vmul.f32 %v2063, 0.17677669
        %v2119 = vmul.f32 %v2111, 0.17677669
        %v2120 = vmul.f32 %v2114, 0.17677669
        %v2121 = vadd.f32 %v2117, %v1317
        %v2122 = vadd.f32 %v2118, %v1317
        %v2123 = vadd.f32 %v2119, %v1321
        %v2124 = vadd.f32 %v2120, %v1321
        %v2125 = vsel %vm1328, %v2121, -inf
        %2126 = vmax.xlane.f32.xlu0 %v2125
        %v2127 = vpop.xlane.xlu0 %2126
        %v2128 = vsel %vm1328, %v2122, -inf
        %2129 = vmax.xlane.f32.xlu0 %v2128
        %v2130 = vpop.xlane.xlu0 %2129
        %v2131 = vsel %vm1328, %v2123, -inf
        %2132 = vmax.xlane.f32.xlu0 %v2131
        %v2133 = vpop.xlane.xlu0 %2132
        %v2134 = vsel %vm1328, %v2124, -inf
        %2135 = vmax.xlane.f32.xlu0 %v2134
        %v2136 = vpop.xlane.xlu0 %2135
        %v2137 = vsub.f32 %v2121, %v2127
        %v2138 = vsub.f32 %v2122, %v2130
        %v2139 = vsub.f32 %v2123, %v2133
        %v2140 = vsub.f32 %v2124, %v2136
        %v2141 = vmul.f32 %v2137, 1.442695
        %v2142 = vpow.pop %v2141
        %v2143 = vmul.f32 %v2138, 1.442695
        %v2144 = vpow.pop %v2143
        %v2145 = vmul.f32 %v2139, 1.442695
        %v2146 = vpow.pop %v2145
        %v2147 = vmul.f32 %v2140, 1.442695
        %v2148 = vpow.pop %v2147
        %v2149 = vsel %vm1328, %v2142, 0.0
        %2150 = vadd.xlane.f32.xlu0 %v2149
        %v2151 = vpop.xlane.xlu0 %2150
        %v2152 = vsel %vm1328, %v2144, 0.0
        %2153 = vadd.xlane.f32.xlu0 %v2152
        %v2154 = vpop.xlane.xlu0 %2153
        %v2155 = vsel %vm1328, %v2146, 0.0
        %2156 = vadd.xlane.f32.xlu0 %v2155
        %v2157 = vpop.xlane.xlu0 %2156
        %v2158 = vsel %vm1328, %v2148, 0.0
        %2159 = vadd.xlane.f32.xlu0 %v2158
        %v2160 = vpop.xlane.xlu0 %2159
        %v2161 = vrcp.pop %v2151
        %v2162 = vrcp.pop %v2154
        %v2163 = vrcp.pop %v2157
        %v2164 = vrcp.pop %v2160
        %v2165 = vmul.f32 %v2142, %v2161
        %v2166 = vmul.f32 %v2144, %v2162
        %v2167 = vmul.f32 %v2146, %v2163
        %v2168 = vmul.f32 %v2148, %v2164
        %v2169 = vpack.c.bf16 %v2166, %v2165
        %v2170 = vpack.c.bf16 %v2168, %v2167
        %2171 = vrot.lane.b32.xlu0 %v1190, 32
        %v2172 = vpop.permute.xlu0 %2171
        %v2175 = vsel %vm1328, %v2169, 0
        %2177 = vmatprep.subr.bf16.mxu0 0
        %2178 = vmatpush1.bf16.msra.mxu0 %v2172
        %2179 = vmatprep.subr.bf16.mxu0 0
        %2180 = vmatpush1.bf16.msra.mxu0 0
        %2181 = vmatprep.subr.bf16.mxu0 0
        %2182 = vmatpush1.bf16.msra.mxu0 0
        %2183 = vmatprep.subr.bf16.mxu0 0
        %2184 = vmatpush1.bf16.msra.mxu0 0
        %2185 = vmatprep.subr.bf16.mxu0 0
        %2186 = vmatpush1.bf16.msra.mxu0 0
        %2187 = vmatprep.subr.bf16.mxu0 0
        %2188 = vmatpush1.bf16.msra.mxu0 0
        %2189 = vmatprep.subr.bf16.mxu0 0
        %2190 = vmatpush1.bf16.msra.mxu0 0
        %2191 = vmatprep.subr.bf16.mxu0 0
        %2192 = vmatpush1.bf16.msra.mxu0 0
        %2193 = vmatprep.subr.bf16.mxu0 0
        %2194 = vmatpush1.bf16.msra.mxu0 0
        %2195 = vmatprep.subr.bf16.mxu0 0
        %2196 = vmatpush1.bf16.msra.mxu0 0
        %2197 = vmatprep.subr.bf16.mxu0 0
        %2198 = vmatpush1.bf16.msra.mxu0 0
        %2199 = vmatprep.subr.bf16.mxu0 0
        %2200 = vmatpush1.bf16.msra.mxu0 0
        %2201 = vmatprep.subr.bf16.mxu0 0
        %2202 = vmatpush1.bf16.msra.mxu0 0
        %2203 = vmatprep.subr.bf16.mxu0 0
        %2204 = vmatpush1.bf16.msra.mxu0 0
        %2205 = vmatprep.subr.bf16.mxu0 0
        %2206 = vmatpush1.bf16.msra.mxu0 0
        %2207 = vmatprep.subr.bf16.mxu0 0
        %2208 = vmatpush1.bf16.msra.mxu0 0
        %2209 = vmatprep.mubr.bf16.mxu0 0
        %2210 = vmatmul.mubr.bf16.gmra.mrb[0].mxu0 %v2175
        %v2211 = vpop.f32.mrb[0].mxu0
        %v2212 = vadd.f32 0.0, %v2211
        %v2213 = vpop.f32.mrb[0].mxu0
        %v2214 = vpop.f32.mrb[0].mxu0
        %v2215 = vadd.f32 0.0, %v2214
        %v2216 = vpop.f32.mrb[0].mxu0
        %2217 = vdwg.mxu0
        %2218 = vrot.lane.b32.xlu0 %v1191, 32
        %v2219 = vpop.permute.xlu0 %2218
        %v2222 = vsel %vm1328, %v2170, 0
        %2224 = vmatprep.subr.bf16.mxu0 0
        %2225 = vmatpush1.bf16.msra.mxu0 %v2219
        %2226 = vmatprep.subr.bf16.mxu0 0
        %2227 = vmatpush1.bf16.msra.mxu0 0
        %2228 = vmatprep.subr.bf16.mxu0 0
        %2229 = vmatpush1.bf16.msra.mxu0 0
        %2230 = vmatprep.subr.bf16.mxu0 0
        %2231 = vmatpush1.bf16.msra.mxu0 0
        %2232 = vmatprep.subr.bf16.mxu0 0
        %2233 = vmatpush1.bf16.msra.mxu0 0
        %2234 = vmatprep.subr.bf16.mxu0 0
        %2235 = vmatpush1.bf16.msra.mxu0 0
        %2236 = vmatprep.subr.bf16.mxu0 0
        %2237 = vmatpush1.bf16.msra.mxu0 0
        %2238 = vmatprep.subr.bf16.mxu0 0
        %2239 = vmatpush1.bf16.msra.mxu0 0
        %2240 = vmatprep.subr.bf16.mxu0 0
        %2241 = vmatpush1.bf16.msra.mxu0 0
        %2242 = vmatprep.subr.bf16.mxu0 0
        %2243 = vmatpush1.bf16.msra.mxu0 0
        %2244 = vmatprep.subr.bf16.mxu0 0
        %2245 = vmatpush1.bf16.msra.mxu0 0
        %2246 = vmatprep.subr.bf16.mxu0 0
        %2247 = vmatpush1.bf16.msra.mxu0 0
        %2248 = vmatprep.subr.bf16.mxu0 0
        %2249 = vmatpush1.bf16.msra.mxu0 0
        %2250 = vmatprep.subr.bf16.mxu0 0
        %2251 = vmatpush1.bf16.msra.mxu0 0
        %2252 = vmatprep.subr.bf16.mxu0 0
        %2253 = vmatpush1.bf16.msra.mxu0 0
        %2254 = vmatprep.subr.bf16.mxu0 0
        %2255 = vmatpush1.bf16.msra.mxu0 0
        %2256 = vmatprep.mubr.bf16.mxu0 0
        %2257 = vmatmul.mubr.bf16.gmra.mrb[0].mxu0 %v2222
        %v2258 = vpop.f32.mrb[0].mxu0
        %v2259 = vadd.f32 0.0, %v2258
        %v2260 = vpop.f32.mrb[0].mxu0
        %v2261 = vpop.f32.mrb[0].mxu0
        %v2262 = vadd.f32 0.0, %v2261
        %v2263 = vpop.f32.mrb[0].mxu0
        %2264 = vdwg.mxu0
        %2269 = vrot.lane.b32.xlu0 %v2212, 96
        %v2270 = vpop.permute.xlu0 %2269
        %2271 = vrot.lane.b32.xlu0 %v2215, 96
        %v2272 = vpop.permute.xlu0 %2271
        %2273 = vrot.lane.b32.xlu0 %v2259, 96
        %v2274 = vpop.permute.xlu0 %2273
        %2275 = vrot.lane.b32.xlu0 %v2262, 96
        %v2276 = vpop.permute.xlu0 %2275
        %vm2281 = vcmask 1048320
        %2282 = vst.msk [vmem:[#allocation3] sm:$0xff] %vm2281, %v2270
        %2283 = vst.msk [vmem:[#allocation3 + $0x8] sm:$0xff] %vm2281, %v2272
        %2284 = vst.msk [vmem:[#allocation3 + $0x10] sm:$0xff] %vm2281, %v2274
        %2285 = vst.msk [vmem:[#allocation3 + $0x18] sm:$0xff] %vm2281, %v2276
        %v2286 = vld [vmem:[#allocation3] sm:$0xff]
        %v2287 = vld [vmem:[#allocation3 + $0x8] sm:$0xff]
        %v2288 = vld [vmem:[#allocation3 + $0x10] sm:$0xff]
        %v2289 = vld [vmem:[#allocation3 + $0x18] sm:$0xff]
        %v2290 = vpack.c.bf16 %v2287, %v2286
        %v2291 = vpack.c.bf16 %v2289, %v2288
        %v2292 = vld [vmem:[%s797] sm:$0xf]
        %v2293 = vld [vmem:[%s797 + $0x4] sm:$0xf]
        %v2294 = vld [vmem:[%s797 + $0x8] sm:$0xf]
        %v2295 = vld [vmem:[%s797 + $0xc] sm:$0xf]
        %v2296 = vld [vmem:[%s797 + $0x10] sm:$0xf]
        %v2297 = vld [vmem:[%s797 + $0x14] sm:$0xf]
        %v2298 = vld [vmem:[%s797 + $0x18] sm:$0xf]
        %v2299 = vld [vmem:[%s797 + $0x1c] sm:$0xf]
        %v2300 = vld [vmem:[%s797 + $0x20] sm:$0xf]
        %v2301 = vld [vmem:[%s797 + $0x24] sm:$0xf]
        %v2302 = vld [vmem:[%s797 + $0x28] sm:$0xf]
        %v2303 = vld [vmem:[%s797 + $0x2c] sm:$0xf]
        %v2304 = vld [vmem:[%s797 + $0x30] sm:$0xf]
        %v2305 = vld [vmem:[%s797 + $0x34] sm:$0xf]
        %v2306 = vld [vmem:[%s797 + $0x38] sm:$0xf]
        %v2307 = vld [vmem:[%s797 + $0x3c] sm:$0xf]
        %v2308 = vld [vmem:[%s800] sm:$0x1]
        %v2310 = vlaneseq
        %v2311 = vshrl.u32 %v2310, 7
        %v2312 = vsub.s32 0, %v2311
        %v2313 = vrot.slane %v2308, %v2312
        %v2331 = vunpack.c.l.b16 %v2292
        %v2332 = vunpack.c.l.b16 %v2293
        %v2333 = vunpack.c.l.b16 %v2294
        %v2334 = vunpack.c.l.b16 %v2295
        %v2335 = vunpack.c.l.b16 %v2296
        %v2336 = vunpack.c.l.b16 %v2297
        %v2337 = vunpack.c.l.b16 %v2298
        %v2338 = vunpack.c.l.b16 %v2299
        %v2339 = vunpack.c.l.b16 %v2300
        %v2340 = vunpack.c.l.b16 %v2301
        %v2341 = vunpack.c.l.b16 %v2302
        %v2342 = vunpack.c.l.b16 %v2303
        %v2343 = vunpack.c.l.b16 %v2304
        %v2344 = vunpack.c.l.b16 %v2305
        %v2345 = vunpack.c.l.b16 %v2306
        %v2346 = vunpack.c.l.b16 %v2307
        %v2347 = vpack.c.b16 %v2332, %v2331
        %v2348 = vpack.c.b16 %v2334, %v2333
        %v2349 = vpack.c.b16 %v2336, %v2335
        %v2350 = vpack.c.b16 %v2338, %v2337
        %v2351 = vpack.c.b16 %v2340, %v2339
        %v2352 = vpack.c.b16 %v2342, %v2341
        %v2353 = vpack.c.b16 %v2344, %v2343
        %v2354 = vpack.c.b16 %v2346, %v2345
        %2363 = vmatprep.subr.bf16.mxu0 0
        %2364 = vmatpush1.bf16.msra.mxu0 %v2347
        %2365 = vmatprep.subr.bf16.mxu0 0
        %2366 = vmatpush1.bf16.msra.mxu0 %v2348
        %2367 = vmatprep.subr.bf16.mxu0 0
        %2368 = vmatpush1.bf16.msra.mxu0 %v2349
        %2369 = vmatprep.subr.bf16.mxu0 0
        %2370 = vmatpush1.bf16.msra.mxu0 %v2350
        %2371 = vmatprep.subr.bf16.mxu0 0
        %2372 = vmatpush1.bf16.msra.mxu0 %v2351
        %2373 = vmatprep.subr.bf16.mxu0 0
        %2374 = vmatpush1.bf16.msra.mxu0 %v2352
        %2375 = vmatprep.subr.bf16.mxu0 0
        %2376 = vmatpush1.bf16.msra.mxu0 %v2353
        %2377 = vmatprep.subr.bf16.mxu0 0
        %2378 = vmatpush1.bf16.msra.mxu0 %v2354
        %2379 = vmatprep.subr.bf16.mxu0 0
        %2380 = vmatpush1.bf16.msra.mxu0 0
        %2381 = vmatprep.subr.bf16.mxu0 0
        %2382 = vmatpush1.bf16.msra.mxu0 0
        %2383 = vmatprep.subr.bf16.mxu0 0
        %2384 = vmatpush1.bf16.msra.mxu0 0
        %2385 = vmatprep.subr.bf16.mxu0 0
        %2386 = vmatpush1.bf16.msra.mxu0 0
        %2387 = vmatprep.subr.bf16.mxu0 0
        %2388 = vmatpush1.bf16.msra.mxu0 0
        %2389 = vmatprep.subr.bf16.mxu0 0
        %2390 = vmatpush1.bf16.msra.mxu0 0
        %2391 = vmatprep.subr.bf16.mxu0 0
        %2392 = vmatpush1.bf16.msra.mxu0 0
        %2393 = vmatprep.subr.bf16.mxu0 0
        %2394 = vmatpush1.bf16.msra.mxu0 0
        %2395 = vmatprep.mubr.bf16.mxu0 0
        %2396 = vmatmul.mubr.bf16.gmra.mrb[0].mxu0 %v2290
        %v2397 = vpop.f32.mrb[0].mxu0
        %v2398 = vadd.f32 %v2313, %v2397
        %v2399 = vpop.f32.mrb[0].mxu0
        %v2400 = vpop.f32.mrb[0].mxu0
        %v2401 = vadd.f32 %v2313, %v2400
        %v2402 = vpop.f32.mrb[0].mxu0
        %2403 = vmatprep.mubr.bf16.mxu0 0
        %2404 = vmatmul.mubr.bf16.gmra.mrb[0].mxu0 %v2291
        %v2405 = vpop.f32.mrb[0].mxu0
        %v2406 = vadd.f32 %v2313, %v2405
        %v2407 = vpop.f32.mrb[0].mxu0
        %v2408 = vpop.f32.mrb[0].mxu0
        %v2409 = vadd.f32 %v2313, %v2408
        %v2410 = vpop.f32.mrb[0].mxu0
        %2411 = vdwg.mxu0
        %v2412 = vadd.f32 %v2398, %v900
        %v2413 = vadd.f32 %v2401, %v901
        %v2414 = vadd.f32 %v2406, %v902
        %v2415 = vadd.f32 %v2409, %v903
        %v2416 = vld [vmem:[%s803] sm:$0x1]
        %v2417 = vld [vmem:[%s806] sm:$0x1]
        %2418 = vadd.xlane.f32.xlu0 %v2412
        %v2419 = vpop.xlane.xlu0 %2418
        %2420 = vadd.xlane.f32.xlu0 %v2413
        %v2421 = vpop.xlane.xlu0 %2420
        %2422 = vadd.xlane.f32.xlu0 %v2414
        %v2423 = vpop.xlane.xlu0 %2422
        %2424 = vadd.xlane.f32.xlu0 %v2415
        %v2425 = vpop.xlane.xlu0 %2424
        %v2426 = vrcp.pop 128.0
        %v2427 = vmul.f32 %v2419, %v2426
        %v2428 = vmul.f32 %v2421, %v2426
        %v2429 = vmul.f32 %v2423, %v2426
        %v2430 = vmul.f32 %v2425, %v2426
        %v2431 = vsub.f32 %v2412, %v2427
        %v2432 = vsub.f32 %v2413, %v2428
        %v2433 = vsub.f32 %v2414, %v2429
        %v2434 = vsub.f32 %v2415, %v2430
        %v2435 = vmul.f32 %v2431, %v2431
        %v2436 = vmul.f32 %v2432, %v2432
        %v2437 = vmul.f32 %v2433, %v2433
        %v2438 = vmul.f32 %v2434, %v2434
        %2439 = vadd.xlane.f32.xlu0 %v2435
        %v2440 = vpop.xlane.xlu0 %2439
        %2441 = vadd.xlane.f32.xlu0 %v2436
        %v2442 = vpop.xlane.xlu0 %2441
        %2443 = vadd.xlane.f32.xlu0 %v2437
        %v2444 = vpop.xlane.xlu0 %2443
        %2445 = vadd.xlane.f32.xlu0 %v2438
        %v2446 = vpop.xlane.xlu0 %2445
        %v2447 = vmul.f32 %v2440, %v2426
        %v2448 = vmul.f32 %v2442, %v2426
        %v2449 = vmul.f32 %v2444, %v2426
        %v2450 = vmul.f32 %v2446, %v2426
        %v2451 = vadd.f32 %v2447, 1e-12
        %v2452 = vadd.f32 %v2448, 1e-12
        %v2453 = vadd.f32 %v2449, 1e-12
        %v2454 = vadd.f32 %v2450, 1e-12
        %v2455 = vrsqrt.pop %v2451
        %v2456 = vrsqrt.pop %v2452
        %v2457 = vrsqrt.pop %v2453
        %v2458 = vrsqrt.pop %v2454
        %v2459 = vmul.f32 %v2431, %v2455
        %v2460 = vmul.f32 %v2432, %v2456
        %v2461 = vmul.f32 %v2433, %v2457
        %v2462 = vmul.f32 %v2434, %v2458
        %v2464 = vlaneseq
        %v2465 = vshrl.u32 %v2464, 7
        %v2466 = vsub.s32 0, %v2465
        %v2467 = vrot.slane %v2416, %v2466
        %v2469 = vmul.f32 %v2459, %v2467
        %v2470 = vmul.f32 %v2460, %v2467
        %v2471 = vmul.f32 %v2461, %v2467
        %v2472 = vmul.f32 %v2462, %v2467
        %v2474 = vlaneseq
        %v2475 = vshrl.u32 %v2474, 7
        %v2476 = vsub.s32 0, %v2475
        %v2477 = vrot.slane %v2417, %v2476
        %v2479 = vadd.f32 %v2469, %v2477
        %v2480 = vadd.f32 %v2470, %v2477
        %v2481 = vadd.f32 %v2471, %v2477
        %v2482 = vadd.f32 %v2472, %v2477
        %v2483 = vpack.c.bf16 %v2480, %v2479
        %v2484 = vpack.c.bf16 %v2482, %v2481
        %v2485 = vld [vmem:[%s680] sm:$0xff]
        %v2486 = vld [vmem:[%s680 + $0x8] sm:$0xff]
        %v2487 = vld [vmem:[%s680 + $0x10] sm:$0xff]
        %v2488 = vld [vmem:[%s680 + $0x18] sm:$0xff]
        %v2489 = vld [vmem:[%s680 + $0x20] sm:$0xff]
        %v2490 = vld [vmem:[%s680 + $0x28] sm:$0xff]
        %v2491 = vld [vmem:[%s680 + $0x30] sm:$0xff]
        %v2492 = vld [vmem:[%s680 + $0x38] sm:$0xff]
        %v2493 = vld [vmem:[%s680 + $0x40] sm:$0xff]
        %v2494 = vld [vmem:[%s680 + $0x48] sm:$0xff]
        %v2495 = vld [vmem:[%s680 + $0x50] sm:$0xff]
        %v2496 = vld [vmem:[%s680 + $0x58] sm:$0xff]
        %v2497 = vld [vmem:[%s680 + $0x60] sm:$0xff]
        %v2498 = vld [vmem:[%s680 + $0x68] sm:$0xff]
        %v2499 = vld [vmem:[%s680 + $0x70] sm:$0xff]
        %v2500 = vld [vmem:[%s680 + $0x78] sm:$0xff]
        %v2501 = vld [vmem:[%s810] sm:$0x3]
        %v2503 = vlaneseq
        %v2504 = vshrl.u32 %v2503, 7
        %v2505 = vsub.s32 0, %v2504
        %v2506 = vrot.slane %v2501, %v2505
        %v2507 = vlaneseq
        %v2508 = vshrl.u32 %v2507, 7
        %v2509 = vsub.s32 1, %v2508
        %v2510 = vrot.slane %v2501, %v2509
        %v2529 = vunpack.c.l.b16 %v2485
        %v2530 = vunpack.c.h.b16 %v2485
        %v2531 = vunpack.c.l.b16 %v2486
        %v2532 = vunpack.c.h.b16 %v2486
        %v2533 = vunpack.c.l.b16 %v2487
        %v2534 = vunpack.c.h.b16 %v2487
        %v2535 = vunpack.c.l.b16 %v2488
        %v2536 = vunpack.c.h.b16 %v2488
        %v2537 = vunpack.c.l.b16 %v2489
        %v2538 = vunpack.c.h.b16 %v2489
        %v2539 = vunpack.c.l.b16 %v2490
        %v2540 = vunpack.c.h.b16 %v2490
        %v2541 = vunpack.c.l.b16 %v2491
        %v2542 = vunpack.c.h.b16 %v2491
        %v2543 = vunpack.c.l.b16 %v2492
        %v2544 = vunpack.c.h.b16 %v2492
        %v2545 = vunpack.c.l.b16 %v2493
        %v2546 = vunpack.c.h.b16 %v2493
        %v2547 = vunpack.c.l.b16 %v2494
        %v2548 = vunpack.c.h.b16 %v2494
        %v2549 = vunpack.c.l.b16 %v2495
        %v2550 = vunpack.c.h.b16 %v2495
        %v2551 = vunpack.c.l.b16 %v2496
        %v2552 = vunpack.c.h.b16 %v2496
        %v2553 = vunpack.c.l.b16 %v2497
        %v2554 = vunpack.c.h.b16 %v2497
        %v2555 = vunpack.c.l.b16 %v2498
        %v2556 = vunpack.c.h.b16 %v2498
        %v2557 = vunpack.c.l.b16 %v2499
        %v2558 = vunpack.c.h.b16 %v2499
        %v2559 = vunpack.c.l.b16 %v2500
        %v2560 = vunpack.c.h.b16 %v2500
        %v2561 = vpack.c.b16 %v2531, %v2529
        %v2562 = vpack.c.b16 %v2532, %v2530
        %v2563 = vpack.c.b16 %v2535, %v2533
        %v2564 = vpack.c.b16 %v2536, %v2534
        %v2565 = vpack.c.b16 %v2539, %v2537
        %v2566 = vpack.c.b16 %v2540, %v2538
        %v2567 = vpack.c.b16 %v2543, %v2541
        %v2568 = vpack.c.b16 %v2544, %v2542
        %v2569 = vpack.c.b16 %v2547, %v2545
        %v2570 = vpack.c.b16 %v2548, %v2546
        %v2571 = vpack.c.b16 %v2551, %v2549
        %v2572 = vpack.c.b16 %v2552, %v2550
        %v2573 = vpack.c.b16 %v2555, %v2553
        %v2574 = vpack.c.b16 %v2556, %v2554
        %v2575 = vpack.c.b16 %v2559, %v2557
        %v2576 = vpack.c.b16 %v2560, %v2558
        %2593 = vmatprep.subr.bf16.mxu0 %v2562
        %2594 = vmatpush1.bf16.msra.mxu0 %v2561
        %2595 = vmatprep.subr.bf16.mxu0 %v2564
        %2596 = vmatpush1.bf16.msra.mxu0 %v2563
        %2597 = vmatprep.subr.bf16.mxu0 %v2566
        %2598 = vmatpush1.bf16.msra.mxu0 %v2565
        %2599 = vmatprep.subr.bf16.mxu0 %v2568
        %2600 = vmatpush1.bf16.msra.mxu0 %v2567
        %2601 = vmatprep.subr.bf16.mxu0 %v2570
        %2602 = vmatpush1.bf16.msra.mxu0 %v2569
        %2603 = vmatprep.subr.bf16.mxu0 %v2572
        %2604 = vmatpush1.bf16.msra.mxu0 %v2571
        %2605 = vmatprep.subr.bf16.mxu0 %v2574
        %2606 = vmatpush1.bf16.msra.mxu0 %v2573
        %2607 = vmatprep.subr.bf16.mxu0 %v2576
        %2608 = vmatpush1.bf16.msra.mxu0 %v2575
        %2609 = vmatprep.subr.bf16.mxu0 0
        %2610 = vmatpush1.bf16.msra.mxu0 0
        %2611 = vmatprep.subr.bf16.mxu0 0
        %2612 = vmatpush1.bf16.msra.mxu0 0
        %2613 = vmatprep.subr.bf16.mxu0 0
        %2614 = vmatpush1.bf16.msra.mxu0 0
        %2615 = vmatprep.subr.bf16.mxu0 0
        %2616 = vmatpush1.bf16.msra.mxu0 0
        %2617 = vmatprep.subr.bf16.mxu0 0
        %2618 = vmatpush1.bf16.msra.mxu0 0
        %2619 = vmatprep.subr.bf16.mxu0 0
        %2620 = vmatpush1.bf16.msra.mxu0 0
        %2621 = vmatprep.subr.bf16.mxu0 0
        %2622 = vmatpush1.bf16.msra.mxu0 0
        %2623 = vmatprep.subr.bf16.mxu0 0
        %2624 = vmatpush1.bf16.msra.mxu0 0
        %2625 = vmatprep.mubr.bf16.mxu0 0
        %2626 = vmatmul.mubr.bf16.gmra.mrb[0].mxu0 %v2483
        %v2627 = vpop.f32.mrb[0].mxu0
        %v2628 = vadd.f32 %v2506, %v2627
        %v2629 = vpop.f32.mrb[0].mxu0
        %v2630 = vadd.f32 %v2510, %v2629
        %v2631 = vpop.f32.mrb[0].mxu0
        %v2632 = vadd.f32 %v2506, %v2631
        %v2633 = vpop.f32.mrb[0].mxu0
        %v2634 = vadd.f32 %v2510, %v2633
        %2635 = vmatprep.mubr.bf16.mxu0 0
        %2636 = vmatmul.mubr.bf16.gmra.mrb[0].mxu0 %v2484
        %v2637 = vpop.f32.mrb[0].mxu0
        %v2638 = vadd.f32 %v2506, %v2637
        %v2639 = vpop.f32.mrb[0].mxu0
        %v2640 = vadd.f32 %v2510, %v2639
        %v2641 = vpop.f32.mrb[0].mxu0
        %v2642 = vadd.f32 %v2506, %v2641
        %v2643 = vpop.f32.mrb[0].mxu0
        %v2644 = vadd.f32 %v2510, %v2643
        %2645 = vdwg.mxu0
        %v2646 = vmul.f32 %v2628, 0.5
        %v2647 = vmul.f32 %v2630, 0.5
        %v2648 = vmul.f32 %v2632, 0.5
        %v2649 = vmul.f32 %v2634, 0.5
        %v2650 = vmul.f32 %v2638, 0.5
        %v2651 = vmul.f32 %v2640, 0.5
        %v2652 = vmul.f32 %v2642, 0.5
        %v2653 = vmul.f32 %v2644, 0.5
        %v2654 = vmul.f32 %v2628, 0.044715
        %v2655 = vmul.f32 %v2630, 0.044715
        %v2656 = vmul.f32 %v2632, 0.044715
        %v2657 = vmul.f32 %v2634, 0.044715
        %v2658 = vmul.f32 %v2638, 0.044715
        %v2659 = vmul.f32 %v2640, 0.044715
        %v2660 = vmul.f32 %v2642, 0.044715
        %v2661 = vmul.f32 %v2644, 0.044715
        %v2662 = vmul.f32 %v2654, %v2628
        %v2663 = vmul.f32 %v2655, %v2630
        %v2664 = vmul.f32 %v2656, %v2632
        %v2665 = vmul.f32 %v2657, %v2634
        %v2666 = vmul.f32 %v2658, %v2638
        %v2667 = vmul.f32 %v2659, %v2640
        %v2668 = vmul.f32 %v2660, %v2642
        %v2669 = vmul.f32 %v2661, %v2644
        %v2670 = vmul.f32 %v2662, %v2628
        %v2671 = vmul.f32 %v2663, %v2630
        %v2672 = vmul.f32 %v2664, %v2632
        %v2673 = vmul.f32 %v2665, %v2634
        %v2674 = vmul.f32 %v2666, %v2638
        %v2675 = vmul.f32 %v2667, %v2640
        %v2676 = vmul.f32 %v2668, %v2642
        %v2677 = vmul.f32 %v2669, %v2644
        %v2678 = vadd.f32 %v2628, %v2670
        %v2679 = vadd.f32 %v2630, %v2671
        %v2680 = vadd.f32 %v2632, %v2672
        %v2681 = vadd.f32 %v2634, %v2673
        %v2682 = vadd.f32 %v2638, %v2674
        %v2683 = vadd.f32 %v2640, %v2675
        %v2684 = vadd.f32 %v2642, %v2676
        %v2685 = vadd.f32 %v2644, %v2677
        %v2686 = vmul.f32 %v2678, 0.7978846
        %v2687 = vmul.f32 %v2679, 0.7978846
        %v2688 = vmul.f32 %v2680, 0.7978846
        %v2689 = vmul.f32 %v2681, 0.7978846
        %v2690 = vmul.f32 %v2682, 0.7978846
        %v2691 = vmul.f32 %v2683, 0.7978846
        %v2692 = vmul.f32 %v2684, 0.7978846
        %v2693 = vmul.f32 %v2685, 0.7978846
        %v2694 = vtanh.pop %v2686
        %v2695 = vtanh.pop %v2687
        %v2696 = vtanh.pop %v2688
        %v2697 = vtanh.pop %v2689
        %v2698 = vtanh.pop %v2690
        %v2699 = vtanh.pop %v2691
        %v2700 = vtanh.pop %v2692
        %v2701 = vtanh.pop %v2693
        %v2702 = vadd.f32 %v2694, 1.0
        %v2703 = vadd.f32 %v2695, 1.0
        %v2704 = vadd.f32 %v2696, 1.0
        %v2705 = vadd.f32 %v2697, 1.0
        %v2706 = vadd.f32 %v2698, 1.0
        %v2707 = vadd.f32 %v2699, 1.0
        %v2708 = vadd.f32 %v2700, 1.0
        %v2709 = vadd.f32 %v2701, 1.0
        %v2710 = vmul.f32 %v2646, %v2702
        %v2711 = vmul.f32 %v2647, %v2703
        %v2712 = vmul.f32 %v2648, %v2704
        %v2713 = vmul.f32 %v2649, %v2705
        %v2714 = vmul.f32 %v2650, %v2706
        %v2715 = vmul.f32 %v2651, %v2707
        %v2716 = vmul.f32 %v2652, %v2708
        %v2717 = vmul.f32 %v2653, %v2709
        %v2718 = vpack.c.bf16 %v2712, %v2710
        %v2719 = vpack.c.bf16 %v2713, %v2711
        %v2720 = vpack.c.bf16 %v2716, %v2714
        %v2721 = vpack.c.bf16 %v2717, %v2715
        %v2722 = vld [vmem:[%s689] sm:$0xf]
        %v2723 = vld [vmem:[%s689 + $0x4] sm:$0xf]
        %v2724 = vld [vmem:[%s689 + $0x8] sm:$0xf]
        %v2725 = vld [vmem:[%s689 + $0xc] sm:$0xf]
        %v2726 = vld [vmem:[%s689 + $0x10] sm:$0xf]
        %v2727 = vld [vmem:[%s689 + $0x14] sm:$0xf]
        %v2728 = vld [vmem:[%s689 + $0x18] sm:$0xf]
        %v2729 = vld [vmem:[%s689 + $0x1c] sm:$0xf]
        %v2730 = vld [vmem:[%s689 + $0x20] sm:$0xf]
        %v2731 = vld [vmem:[%s689 + $0x24] sm:$0xf]
        %v2732 = vld [vmem:[%s689 + $0x28] sm:$0xf]
        %v2733 = vld [vmem:[%s689 + $0x2c] sm:$0xf]
        %v2734 = vld [vmem:[%s689 + $0x30] sm:$0xf]
        %v2735 = vld [vmem:[%s689 + $0x34] sm:$0xf]
        %v2736 = vld [vmem:[%s689 + $0x38] sm:$0xf]
        %v2737 = vld [vmem:[%s689 + $0x3c] sm:$0xf]
        %v2738 = vld [vmem:[%s689 + $0x40] sm:$0xf]
        %v2739 = vld [vmem:[%s689 + $0x44] sm:$0xf]
        %v2740 = vld [vmem:[%s689 + $0x48] sm:$0xf]
        %v2741 = vld [vmem:[%s689 + $0x4c] sm:$0xf]
        %v2742 = vld [vmem:[%s689 + $0x50] sm:$0xf]
        %v2743 = vld [vmem:[%s689 + $0x54] sm:$0xf]
        %v2744 = vld [vmem:[%s689 + $0x58] sm:$0xf]
        %v2745 = vld [vmem:[%s689 + $0x5c] sm:$0xf]
        %v2746 = vld [vmem:[%s689 + $0x60] sm:$0xf]
        %v2747 = vld [vmem:[%s689 + $0x64] sm:$0xf]
        %v2748 = vld [vmem:[%s689 + $0x68] sm:$0xf]
        %v2749 = vld [vmem:[%s689 + $0x6c] sm:$0xf]
        %v2750 = vld [vmem:[%s689 + $0x70] sm:$0xf]
        %v2751 = vld [vmem:[%s689 + $0x74] sm:$0xf]
        %v2752 = vld [vmem:[%s689 + $0x78] sm:$0xf]
        %v2753 = vld [vmem:[%s689 + $0x7c] sm:$0xf]
        %v2754 = vld [vmem:[%s813] sm:$0x1]
        %v2756 = vlaneseq
        %v2757 = vshrl.u32 %v2756, 7
        %v2758 = vsub.s32 0, %v2757
        %v2759 = vrot.slane %v2754, %v2758
        %v2793 = vunpack.c.l.b16 %v2722
        %v2794 = vunpack.c.l.b16 %v2723
        %v2795 = vunpack.c.l.b16 %v2724
        %v2796 = vunpack.c.l.b16 %v2725
        %v2797 = vunpack.c.l.b16 %v2726
        %v2798 = vunpack.c.l.b16 %v2727
        %v2799 = vunpack.c.l.b16 %v2728
        %v2800 = vunpack.c.l.b16 %v2729
        %v2801 = vunpack.c.l.b16 %v2730
        %v2802 = vunpack.c.l.b16 %v2731
        %v2803 = vunpack.c.l.b16 %v2732
        %v2804 = vunpack.c.l.b16 %v2733
        %v2805 = vunpack.c.l.b16 %v2734
        %v2806 = vunpack.c.l.b16 %v2735
        %v2807 = vunpack.c.l.b16 %v2736
        %v2808 = vunpack.c.l.b16 %v2737
        %v2809 = vunpack.c.l.b16 %v2738
        %v2810 = vunpack.c.l.b16 %v2739
        %v2811 = vunpack.c.l.b16 %v2740
        %v2812 = vunpack.c.l.b16 %v2741
        %v2813 = vunpack.c.l.b16 %v2742
        %v2814 = vunpack.c.l.b16 %v2743
        %v2815 = vunpack.c.l.b16 %v2744
        %v2816 = vunpack.c.l.b16 %v2745
        %v2817 = vunpack.c.l.b16 %v2746
        %v2818 = vunpack.c.l.b16 %v2747
        %v2819 = vunpack.c.l.b16 %v2748
        %v2820 = vunpack.c.l.b16 %v2749
        %v2821 = vunpack.c.l.b16 %v2750
        %v2822 = vunpack.c.l.b16 %v2751
        %v2823 = vunpack.c.l.b16 %v2752
        %v2824 = vunpack.c.l.b16 %v2753
        %v2825 = vpack.c.b16 %v2794, %v2793
        %v2826 = vpack.c.b16 %v2796, %v2795
        %v2827 = vpack.c.b16 %v2798, %v2797
        %v2828 = vpack.c.b16 %v2800, %v2799
        %v2829 = vpack.c.b16 %v2802, %v2801
        %v2830 = vpack.c.b16 %v2804, %v2803
        %v2831 = vpack.c.b16 %v2806, %v2805
        %v2832 = vpack.c.b16 %v2808, %v2807
        %v2833 = vpack.c.b16 %v2810, %v2809
        %v2834 = vpack.c.b16 %v2812, %v2811
        %v2835 = vpack.c.b16 %v2814, %v2813
        %v2836 = vpack.c.b16 %v2816, %v2815
        %v2837 = vpack.c.b16 %v2818, %v2817
        %v2838 = vpack.c.b16 %v2820, %v2819
        %v2839 = vpack.c.b16 %v2822, %v2821
        %v2840 = vpack.c.b16 %v2824, %v2823
        %2857 = vmatprep.subr.bf16.mxu0 0
        %2858 = vmatpush1.bf16.msra.mxu0 %v2825
        %2859 = vmatprep.subr.bf16.mxu0 0
        %2860 = vmatpush1.bf16.msra.mxu0 %v2826
        %2861 = vmatprep.subr.bf16.mxu0 0
        %2862 = vmatpush1.bf16.msra.mxu0 %v2827
        %2863 = vmatprep.subr.bf16.mxu0 0
        %2864 = vmatpush1.bf16.msra.mxu0 %v2828
        %2865 = vmatprep.subr.bf16.mxu0 0
        %2866 = vmatpush1.bf16.msra.mxu0 %v2829
        %2867 = vmatprep.subr.bf16.mxu0 0
        %2868 = vmatpush1.bf16.msra.mxu0 %v2830
        %2869 = vmatprep.subr.bf16.mxu0 0
        %2870 = vmatpush1.bf16.msra.mxu0 %v2831
        %2871 = vmatprep.subr.bf16.mxu0 0
        %2872 = vmatpush1.bf16.msra.mxu0 %v2832
        %2873 = vmatprep.subr.bf16.mxu0 0
        %2874 = vmatpush1.bf16.msra.mxu0 %v2833
        %2875 = vmatprep.subr.bf16.mxu0 0
        %2876 = vmatpush1.bf16.msra.mxu0 %v2834
        %2877 = vmatprep.subr.bf16.mxu0 0
        %2878 = vmatpush1.bf16.msra.mxu0 %v2835
        %2879 = vmatprep.subr.bf16.mxu0 0
        %2880 = vmatpush1.bf16.msra.mxu0 %v2836
        %2881 = vmatprep.subr.bf16.mxu0 0
        %2882 = vmatpush1.bf16.msra.mxu0 %v2837
        %2883 = vmatprep.subr.bf16.mxu0 0
        %2884 = vmatpush1.bf16.msra.mxu0 %v2838
        %2885 = vmatprep.subr.bf16.mxu0 0
        %2886 = vmatpush1.bf16.msra.mxu0 %v2839
        %2887 = vmatprep.subr.bf16.mxu0 0
        %2888 = vmatpush1.bf16.msra.mxu0 %v2840
        %2889 = vmatprep.mubr.bf16.mxu0 %v2719
        %2890 = vmatmul.mubr.bf16.gmra.mrb[0].mxu0 %v2718
        %v2891 = vpop.f32.mrb[0].mxu0
        %v2892 = vadd.f32 %v2759, %v2891
        %v2893 = vpop.f32.mrb[0].mxu0
        %v2894 = vpop.f32.mrb[0].mxu0
        %v2895 = vadd.f32 %v2759, %v2894
        %v2896 = vpop.f32.mrb[0].mxu0
        %2897 = vmatprep.mubr.bf16.mxu0 %v2721
        %2898 = vmatmul.mubr.bf16.gmra.mrb[0].mxu0 %v2720
        %v2899 = vpop.f32.mrb[0].mxu0
        %v2900 = vadd.f32 %v2759, %v2899
        %v2901 = vpop.f32.mrb[0].mxu0
        %v2902 = vpop.f32.mrb[0].mxu0
        %v2903 = vadd.f32 %v2759, %v2902
        %v2904 = vpop.f32.mrb[0].mxu0
        %2905 = vdwg.mxu0
        %v2906 = vadd.f32 %v2892, %v2479
        %v2907 = vadd.f32 %v2895, %v2480
        %v2908 = vadd.f32 %v2900, %v2481
        %v2909 = vadd.f32 %v2903, %v2482
        %v2910 = vld [vmem:[%s816] sm:$0x1]
        %v2911 = vld [vmem:[%s819] sm:$0x1]
        %2912 = vadd.xlane.f32.xlu0 %v2906
        %v2913 = vpop.xlane.xlu0 %2912
        %2914 = vadd.xlane.f32.xlu0 %v2907
        %v2915 = vpop.xlane.xlu0 %2914
        %2916 = vadd.xlane.f32.xlu0 %v2908
        %v2917 = vpop.xlane.xlu0 %2916
        %2918 = vadd.xlane.f32.xlu0 %v2909
        %v2919 = vpop.xlane.xlu0 %2918
        %v2920 = vmul.f32 %v2913, %v2426
        %v2921 = vmul.f32 %v2915, %v2426
        %v2922 = vmul.f32 %v2917, %v2426
        %v2923 = vmul.f32 %v2919, %v2426
        %v2924 = vsub.f32 %v2906, %v2920
        %v2925 = vsub.f32 %v2907, %v2921
        %v2926 = vsub.f32 %v2908, %v2922
        %v2927 = vsub.f32 %v2909, %v2923
        %v2928 = vmul.f32 %v2924, %v2924
        %v2929 = vmul.f32 %v2925, %v2925
        %v2930 = vmul.f32 %v2926, %v2926
        %v2931 = vmul.f32 %v2927, %v2927
        %2932 = vadd.xlane.f32.xlu0 %v2928
        %v2933 = vpop.xlane.xlu0 %2932
        %2934 = vadd.xlane.f32.xlu0 %v2929
        %v2935 = vpop.xlane.xlu0 %2934
        %2936 = vadd.xlane.f32.xlu0 %v2930
        %v2937 = vpop.xlane.xlu0 %2936
        %2938 = vadd.xlane.f32.xlu0 %v2931
        %v2939 = vpop.xlane.xlu0 %2938
        %v2940 = vmul.f32 %v2933, %v2426
        %v2941 = vmul.f32 %v2935, %v2426
        %v2942 = vmul.f32 %v2937, %v2426
        %v2943 = vmul.f32 %v2939, %v2426
        %v2944 = vadd.f32 %v2940, 1e-12
        %v2945 = vadd.f32 %v2941, 1e-12
        %v2946 = vadd.f32 %v2942, 1e-12
        %v2947 = vadd.f32 %v2943, 1e-12
        %v2948 = vrsqrt.pop %v2944
        %v2949 = vrsqrt.pop %v2945
        %v2950 = vrsqrt.pop %v2946
        %v2951 = vrsqrt.pop %v2947
        %v2952 = vmul.f32 %v2924, %v2948
        %v2953 = vmul.f32 %v2925, %v2949
        %v2954 = vmul.f32 %v2926, %v2950
        %v2955 = vmul.f32 %v2927, %v2951
        %v2957 = vlaneseq
        %v2958 = vshrl.u32 %v2957, 7
        %v2959 = vsub.s32 0, %v2958
        %v2960 = vrot.slane %v2910, %v2959
        %v2962 = vmul.f32 %v2952, %v2960
        %v2963 = vmul.f32 %v2953, %v2960
        %v2964 = vmul.f32 %v2954, %v2960
        %v2965 = vmul.f32 %v2955, %v2960
        %v2967 = vlaneseq
        %v2968 = vshrl.u32 %v2967, 7
        %v2969 = vsub.s32 0, %v2968
        %v2970 = vrot.slane %v2911, %v2969
        %v2972 = vadd.f32 %v2962, %v2970
        %v2973 = vadd.f32 %v2963, %v2970
        %v2974 = vadd.f32 %v2964, %v2970
        %v2975 = vadd.f32 %v2965, %v2970
        %2976 = vst [vmem:[#allocation2] sm:$0xff] %v2972
        %2977 = vst [vmem:[#allocation2 + $0x8] sm:$0xff] %v2973
        %2978 = vst [vmem:[#allocation2 + $0x10] sm:$0xff] %v2974
        %2979 = vst [vmem:[#allocation2 + $0x18] sm:$0xff] %v2975
        %2980 = vst [vmem:[#allocation10] sm:$0xff] %v2972
        %2981 = vst [vmem:[#allocation10 + $0x8] sm:$0xff] %v2973
        %2982 = vst [vmem:[#allocation10 + $0x10] sm:$0xff] %v2974
        %2983 = vst [vmem:[#allocation10 + $0x18] sm:$0xff] %v2975
        %v2984 = vlaneseq
        %v2985 = vand.u32 %v2984, 127
        %v2986 = vlaneseq
        %v2987 = vshrl.u32 %v2986, 7
        %v2988 = vmul.u32 %v2987, 16
        %vm2989 = vcmp.eq.s32.totalorder %v2985, %v2988
        %v2990 = vsel %vm2989, 1, 0
        %v2991 = vcvt.s32.f32 %v2990
        %v2992 = vpack.c.bf16 %v2991, %v2991
        %v2993 = vpack.c.bf16 %v2973, %v2972
        %v2994 = vpack.c.bf16 %v2975, %v2974
        %v2996 = vsel %vm1192, %v2992, 0
        %2998 = vmatprep.subr.bf16.mxu0 0
        %2999 = vmatpush1.bf16.msra.mxu0 %v2993
        %3000 = vmatprep.subr.bf16.mxu0 0
        %3001 = vmatpush1.bf16.msra.mxu0 %v2994
        %3002 = vmatprep.subr.bf16.mxu0 0
        %3003 = vmatpush1.bf16.msra.mxu0 0
        %3004 = vmatprep.subr.bf16.mxu0 0
        %3005 = vmatpush1.bf16.msra.mxu0 0
        %3006 = vmatprep.subr.bf16.mxu0 0
        %3007 = vmatpush1.bf16.msra.mxu0 0
        %3008 = vmatprep.subr.bf16.mxu0 0
        %3009 = vmatpush1.bf16.msra.mxu0 0
        %3010 = vmatprep.subr.bf16.mxu0 0
        %3011 = vmatpush1.bf16.msra.mxu0 0
        %3012 = vmatprep.subr.bf16.mxu0 0
        %3013 = vmatpush1.bf16.msra.mxu0 0
        %3014 = vmatprep.subr.bf16.mxu0 0
        %3015 = vmatpush1.bf16.msra.mxu0 0
        %3016 = vmatprep.subr.bf16.mxu0 0
        %3017 = vmatpush1.bf16.msra.mxu0 0
        %3018 = vmatprep.subr.bf16.mxu0 0
        %3019 = vmatpush1.bf16.msra.mxu0 0
        %3020 = vmatprep.subr.bf16.mxu0 0
        %3021 = vmatpush1.bf16.msra.mxu0 0
        %3022 = vmatprep.subr.bf16.mxu0 0
        %3023 = vmatpush1.bf16.msra.mxu0 0
        %3024 = vmatprep.subr.bf16.mxu0 0
        %3025 = vmatpush1.bf16.msra.mxu0 0
        %3026 = vmatprep.subr.bf16.mxu0 0
        %3027 = vmatpush1.bf16.msra.mxu0 0
        %3028 = vmatprep.subr.bf16.mxu0 0
        %3029 = vmatpush1.bf16.msra.mxu0 0
        %3030 = vmatprep.mubr.bf16.mxu0 0
        %3031 = vmatmul.mubr.bf16.gmra.mrb[0].mxu0 %v2996
        %v3032 = vpop.f32.mrb[0].mxu0
        %v3033 = vadd.f32 0.0, %v3032
        %v3034 = vpop.f32.mrb[0].mxu0
        %v3035 = vpop.f32.mrb[0].mxu0
        %v3036 = vpop.f32.mrb[0].mxu0
        %3037 = vdwg.mxu0
        %v3038 = vpack.c.bf16 %v3033, %v3033
        %v3039 = vld [vmem:[#allocation9] sm:$0xf]
        %v3040 = vld [vmem:[#allocation9 + $0x4] sm:$0xf]
        %v3041 = vld [vmem:[#allocation9 + $0x8] sm:$0xf]
        %v3042 = vld [vmem:[#allocation9 + $0xc] sm:$0xf]
        %v3043 = vld [vmem:[#allocation9 + $0x10] sm:$0xf]
        %v3044 = vld [vmem:[#allocation9 + $0x14] sm:$0xf]
        %v3045 = vld [vmem:[#allocation9 + $0x18] sm:$0xf]
        %v3046 = vld [vmem:[#allocation9 + $0x1c] sm:$0xf]
        %v3047 = vld [vmem:[#allocation9 + $0x20] sm:$0xf]
        %v3048 = vld [vmem:[#allocation9 + $0x24] sm:$0xf]
        %v3049 = vld [vmem:[#allocation9 + $0x28] sm:$0xf]
        %v3050 = vld [vmem:[#allocation9 + $0x2c] sm:$0xf]
        %v3051 = vld [vmem:[#allocation9 + $0x30] sm:$0xf]
        %v3052 = vld [vmem:[#allocation9 + $0x34] sm:$0xf]
        %v3053 = vld [vmem:[#allocation9 + $0x38] sm:$0xf]
        %v3054 = vld [vmem:[#allocation9 + $0x3c] sm:$0xf]
        %v3055 = vld [vmem:[%s17] sm:$0x1]
        %v3057 = vlaneseq
        %v3058 = vshrl.u32 %v3057, 7
        %v3059 = vsub.s32 0, %v3058
        %v3060 = vrot.slane %v3055, %v3059
        %v3078 = vunpack.c.l.b16 %v3039
        %v3079 = vunpack.c.l.b16 %v3040
        %v3080 = vunpack.c.l.b16 %v3041
        %v3081 = vunpack.c.l.b16 %v3042
        %v3082 = vunpack.c.l.b16 %v3043
        %v3083 = vunpack.c.l.b16 %v3044
        %v3084 = vunpack.c.l.b16 %v3045
        %v3085 = vunpack.c.l.b16 %v3046
        %v3086 = vunpack.c.l.b16 %v3047
        %v3087 = vunpack.c.l.b16 %v3048
        %v3088 = vunpack.c.l.b16 %v3049
        %v3089 = vunpack.c.l.b16 %v3050
        %v3090 = vunpack.c.l.b16 %v3051
        %v3091 = vunpack.c.l.b16 %v3052
        %v3092 = vunpack.c.l.b16 %v3053
        %v3093 = vunpack.c.l.b16 %v3054
        %v3094 = vpack.c.b16 %v3079, %v3078
        %v3095 = vpack.c.b16 %v3081, %v3080
        %v3096 = vpack.c.b16 %v3083, %v3082
        %v3097 = vpack.c.b16 %v3085, %v3084
        %v3098 = vpack.c.b16 %v3087, %v3086
        %v3099 = vpack.c.b16 %v3089, %v3088
        %v3100 = vpack.c.b16 %v3091, %v3090
        %v3101 = vpack.c.b16 %v3093, %v3092
        %3110 = vmatprep.subr.bf16.mxu0 0
        %3111 = vmatpush1.bf16.msra.mxu0 %v3094
        %3112 = vmatprep.subr.bf16.mxu0 0
        %3113 = vmatpush1.bf16.msra.mxu0 %v3095
        %3114 = vmatprep.subr.bf16.mxu0 0
        %3115 = vmatpush1.bf16.msra.mxu0 %v3096
        %3116 = vmatprep.subr.bf16.mxu0 0
        %3117 = vmatpush1.bf16.msra.mxu0 %v3097
        %3118 = vmatprep.subr.bf16.mxu0 0
        %3119 = vmatpush1.bf16.msra.mxu0 %v3098
        %3120 = vmatprep.subr.bf16.mxu0 0
        %3121 = vmatpush1.bf16.msra.mxu0 %v3099
        %3122 = vmatprep.subr.bf16.mxu0 0
        %3123 = vmatpush1.bf16.msra.mxu0 %v3100
        %3124 = vmatprep.subr.bf16.mxu0 0
        %3125 = vmatpush1.bf16.msra.mxu0 %v3101
        %3126 = vmatprep.subr.bf16.mxu0 0
        %3127 = vmatpush1.bf16.msra.mxu0 0
        %3128 = vmatprep.subr.bf16.mxu0 0
        %3129 = vmatpush1.bf16.msra.mxu0 0
        %3130 = vmatprep.subr.bf16.mxu0 0
        %3131 = vmatpush1.bf16.msra.mxu0 0
        %3132 = vmatprep.subr.bf16.mxu0 0
        %3133 = vmatpush1.bf16.msra.mxu0 0
        %3134 = vmatprep.subr.bf16.mxu0 0
        %3135 = vmatpush1.bf16.msra.mxu0 0
        %3136 = vmatprep.subr.bf16.mxu0 0
        %3137 = vmatpush1.bf16.msra.mxu0 0
        %3138 = vmatprep.subr.bf16.mxu0 0
        %3139 = vmatpush1.bf16.msra.mxu0 0
        %3140 = vmatprep.subr.bf16.mxu0 0
        %3141 = vmatpush1.bf16.msra.mxu0 0
        %3142 = vmatprep.mubr.bf16.mxu0 0
        %3143 = vmatmul.mubr.bf16.gmra.mrb[0].mxu0 %v3038
        %v3144 = vpop.f32.mrb[0].mxu0
        %v3145 = vadd.f32 %v3060, %v3144
        %v3146 = vpop.f32.mrb[0].mxu0
        %v3147 = vpop.f32.mrb[0].mxu0
        %v3148 = vpop.f32.mrb[0].mxu0
        %3149 = vdwg.mxu0
        %v3150 = vtanh.pop %v3145
        %3151 = vst [vmem:[#allocation11] sm:$0x3] %v3150
        // Predicated region
        $region109: #{bert_forward.1} parent=91 // pred_check
          %p3152 = pneg %p490
        $region110: #{bert_forward.1} parent=91 // pred_check_branch
          %3154 = sbr.rel (%p3152) target = $region112
        $region111: #{bert_forward.1} parent=91 // pred_region
          %s3156 = ssub.s32 512, 512
          %3157 = vsyncadd [#allocation6], %s3156
          %s3158 = sshll.u32 [#allocation10], 4
          %s3159 = int_to_ptr.vmem [resolvable:$true] %s3158
          %3164 = dma.vmem_to_hbm [thread:$0]  %s3159, 512, %s18, [#allocation6], 128, 128, 8
        $region112: #{bert_forward.1} parent=91 // pred_fallthru
          _
        // Predicated region
        $region113: #{bert_forward.1} parent=91 // pred_check
          %p3165 = pneg %p511
        $region114: #{bert_forward.1} parent=91 // pred_check_branch
          %3167 = sbr.rel (%p3165) target = $region116
        $region115: #{bert_forward.1} parent=91 // pred_region
          %s3169 = ssub.s32 32, 32
          %3170 = vsyncadd [#allocation12], %s3169
          %s3172 = sshll.u32 [#allocation11], 4
          %s3173 = int_to_ptr.vmem [resolvable:$true] %s3172
          %3175 = dma.vmem_to_hbm [thread:$0]  %s3173, 32, %s19, [#allocation12]
        $region116: #{bert_forward.1} parent=91 // pred_fallthru
          _
        // Predicated region
        $region117: #{bert_forward.1} parent=91 // pred_check
          %p3176 = pneg %p490
        $region118: #{bert_forward.1} parent=91 // pred_check_branch
          %3178 = sbr.rel (%p3176) target = $region120
        $region119: #{bert_forward.1} parent=91 // pred_region
          %3179 = dma.done [#allocation6], 512
        $region120: #{bert_forward.1} parent=91 // pred_fallthru
          _
        // Predicated region
        $region121: #{bert_forward.1} parent=91 // pred_check
          %p3180 = pneg %p511
        $region122: #{bert_forward.1} parent=91 // pred_check_branch
          %3182 = sbr.rel (%p3180) target = $region124
        $region123: #{bert_forward.1} parent=91 // pred_region
          %3183 = dma.done [#allocation12], 32
        $region124: #{bert_forward.1} parent=91 // pred_fallthru
          _
      $region92: #{bert_forward.1} parent=5 // pred_fallthru
        _
      %p3184 = scmp.le.s32.totalorder 2, %s34
      // Predicated region
      $region125: #{bert_forward.1} parent=5 // pred_check
        %p3185 = pneg %p3184
      $region126: #{bert_forward.1} parent=5 // pred_check_branch
        %3187 = sbr.rel (%p3185) target = $region128
      $region127: #{bert_forward.1} parent=5 // pred_region
        %s3188 = ssub.s32 %s34, 2
      $region128: #{bert_forward.1} parent=5 // pred_fallthru
        _
    $region6: #{bert_forward.1} parent=1 // loop_footer
      %s38 = sadd.s32 1, %s34
    $region7: #{bert_forward.1} parent=1 // loop_footer_branch
      %33 = sbr.rel target = $region3
    $region8: #{bert_forward.1} parent=1 // loop_exit
      _
    %3189 = vsyncpa [#allocation5], 1
    %s3190 = scalar_lea.sflag [#allocation5], 1
    %3191 = vsyncpa %s3190, 1
    %3192 = vsyncpa [#allocation8], 1
    %s3193 = scalar_lea.sflag [#allocation8], 1
    %3194 = vsyncpa %s3193, 1
    %3195 = vsyncpa [#allocation6], 1
    %s3196 = scalar_lea.sflag [#allocation6], 1
    %3197 = vsyncpa %s3196, 1
    %3198 = vsyncpa [#allocation12], 1

</llo_original>
